<compile_context>
chip_gen: v7x
topology: tpu7x:2x2x1
jax: 0.10.0
libtpu: 0.0.40
codegen_flags: <defaults>
</compile_context>

<pallas_src>
import functools

import jax
import jax.numpy as jnp
import numpy as np
from jax import lax
from jax.experimental import pallas as pl
from jax.experimental.pallas import tpu as pltpu

EPS = 1e-5           # nn.BatchNorm2d default
EXPANSION = 4
LANE = 128


def _rup(x, m):
    return (x + m - 1) // m * m


def _fold_bn(sum_ref, sq_ref, g_ref, b_ref, inv_n):
    """Fold biased batch stats + gamma/beta into per-channel scale/shift."""
    mean = sum_ref[...] * inv_n
    var = jnp.maximum(sq_ref[...] * inv_n - mean * mean, 0.0)
    scale = g_ref[...] * lax.rsqrt(var + EPS)
    shift = b_ref[...] - mean * scale
    return scale, shift


def _bottleneck_kernel(
    # inputs
    x_ref, w1_ref, g1_ref, b1_ref, w2_ref, g2_ref, b2_ref, w3_ref, g3_ref, b3_ref,
    # output
    o_ref,
    # scratch
    x_buf, c1_buf, c2_buf, c3_buf, canvas,
    s1_sum, s1_sq, s2_sum, s2_sq, s3_sum, s3_sq,
    sc1, sh1, sc2, sh2, sc3, sh3,
    *, H, W, Ho, Wo, stride, cinp, pp, coutp, inv_r1, inv_r2, has_proj):
    ph = pl.program_id(0)      # phase (outer, sequential)
    b = pl.program_id(1)       # image index (inner)
    bf16 = jnp.bfloat16

    @pl.when(jnp.logical_and(ph == 0, b == 0))
    def _init():
        for r in (s1_sum, s1_sq, s2_sum, s2_sq, s3_sum, s3_sq):
            r[...] = jnp.zeros_like(r)

    # ---------------- phase 0: conv1 (1x1) -> c1_buf, bn1 stats -------------
    @pl.when(ph == 0)
    def _phase0():
        xb = x_ref[0].reshape(H * W, cinp)
        x_buf[b] = xb                                   # stash: reused in ph 2/3
        c1 = jnp.dot(xb.astype(bf16), w1_ref[...],
                     preferred_element_type=jnp.float32)
        c1_buf[b] = c1
        s1_sum[...] += jnp.sum(c1, axis=0, keepdims=True)
        s1_sq[...] += jnp.sum(c1 * c1, axis=0, keepdims=True)

    # -------- phase 1: bn1+relu, in-VMEM im2col 3x3 conv2 -> c2_buf ---------
    @pl.when(jnp.logical_and(ph == 1, b == 0))
    def _fold1():
        scale, shift = _fold_bn(s1_sum, s1_sq, g1_ref, b1_ref, inv_r1)
        sc1[...] = scale
        sh1[...] = shift
        canvas[...] = jnp.zeros_like(canvas)            # zero padding ring once

    @pl.when(ph == 1)
    def _phase1():
        h1 = jnp.maximum(c1_buf[b] * sc1[...] + sh1[...], 0.0)   # (H*W, pp)
        # interior write only; border stays zero across images.
        canvas[1:H + 1, 1:W + 1, :] = h1.reshape(H, W, pp)
        span_h = (Ho - 1) * stride + 1
        span_w = (Wo - 1) * stride + 1
        cols = []
        for kh in range(3):
            for kw in range(3):
                patch = canvas[kh:kh + span_h, kw:kw + span_w, :]
                if stride != 1:
                    # TODO(synk): stride>1 path (strided value slice) is not
                    # exercised by the stride=1 demo below.
                    patch = patch[::stride, ::stride, :]
                cols.append(patch.reshape(Ho * Wo, pp).astype(bf16))
        patches = jnp.concatenate(cols, axis=-1)                 # (HoWo, 9*pp)
        c2 = jnp.dot(patches, w2_ref[...],
                     preferred_element_type=jnp.float32)
        c2_buf[b] = c2
        s2_sum[...] += jnp.sum(c2, axis=0, keepdims=True)
        s2_sq[...] += jnp.sum(c2 * c2, axis=0, keepdims=True)

    # ----- phase 2: bn2+relu, merged conv3 (+ projection shortcut) matmul ---
    @pl.when(jnp.logical_and(ph == 2, b == 0))
    def _fold2():
        scale, shift = _fold_bn(s2_sum, s2_sq, g2_ref, b2_ref, inv_r2)
        sc2[...] = scale
        sh2[...] = shift

    @pl.when(ph == 2)
    def _phase2():
        h2 = jnp.maximum(c2_buf[b] * sc2[...] + sh2[...], 0.0)   # (HoWo, pp)
        if has_proj:
            xs = x_buf[b]
            if stride != 1:
                xs = xs.reshape(H, W, cinp)[::stride, ::stride, :]
            xs = xs.reshape(Ho * Wo, cinp)
            zin = jnp.concatenate([h2, xs], axis=-1)             # (HoWo, pp+cinp)
        else:
            zin = h2
        c3 = jnp.dot(zin.astype(bf16), w3_ref[...],
                     preferred_element_type=jnp.float32)
        c3_buf[b] = c3
        s3_sum[...] += jnp.sum(c3, axis=0, keepdims=True)
        s3_sq[...] += jnp.sum(c3 * c3, axis=0, keepdims=True)

    # --------- phase 3: bn3 (+ bn_s), residual add, relu -> output ----------
    @pl.when(jnp.logical_and(ph == 3, b == 0))
    def _fold3():
        scale, shift = _fold_bn(s3_sum, s3_sq, g3_ref, b3_ref, inv_r2)
        sc3[...] = scale
        sh3[...] = shift

    @pl.when(ph == 3)
    def _phase3():
        y = c3_buf[b] * sc3[...] + sh3[...]
        if has_proj:
            res = y[:, :coutp] + y[:, coutp:]                    # bn3 + bn_s
        else:
            res = y + x_buf[b]                                   # identity
        o_ref[0] = jnp.maximum(res, 0.0).reshape(Ho, Wo, coutp).astype(o_ref.dtype)


@functools.partial(jax.jit, static_argnames="stride")
def bottleneck_forward(x_nchw, params, stride=1):
    n, cin, h, w = map(int, x_nchw.shape)
    p = int(params["w1"].shape[1])
    cout = EXPANSION * p
    ho = (h + 2 - 3) // stride + 1
    wo = (w + 2 - 3) // stride + 1
    has_proj = (stride != 1) or (cin != cout)

    cinp = _rup(cin, LANE)
    pp = _rup(p, LANE)
    coutp = _rup(cout, LANE)
    cw = 2 * coutp if has_proj else coutp          # width of merged conv3(+sc) out
    bf16, f32 = jnp.bfloat16, jnp.float32

    # ---- host-side layout: NCHW -> NHWC, pad channels to 128 lanes ---------
    x_nhwc = jnp.transpose(x_nchw, (0, 2, 3, 1))
    x_p = jnp.zeros((n, h, w, cinp), f32).at[..., :cin].set(x_nhwc)

    w1_p = jnp.zeros((cinp, pp), bf16).at[:cin, :p].set(params["w1"].astype(bf16))
    g1_p = jnp.zeros((1, pp), f32).at[0, :p].set(params["g1"][0])
    b1_p = jnp.zeros((1, pp), f32).at[0, :p].set(params["b1"][0])

    w2_p = (jnp.zeros((9, pp, pp), bf16)
            .at[:, :p, :p].set(params["w2"].reshape(9, p, p).astype(bf16))
            .reshape(9 * pp, pp))
    g2_p = jnp.zeros((1, pp), f32).at[0, :p].set(params["g2"][0])
    b2_p = jnp.zeros((1, pp), f32).at[0, :p].set(params["b2"][0])

    if has_proj:
        # block-diagonal [w3 ; ws] -> one MXU matmul for conv3 + shortcut conv
        w3_p = (jnp.zeros((pp + cinp, 2 * coutp), bf16)
                .at[:p, :cout].set(params["w3"].astype(bf16))
                .at[pp:pp + cin, coutp:coutp + cout].set(params["ws"].astype(bf16)))
        g3_p = (jnp.zeros((1, 2 * coutp), f32)
                .at[0, :cout].set(params["g3"][0])
                .at[0, coutp:coutp + cout].set(params["gs"][0]))
        b3_p = (jnp.zeros((1, 2 * coutp), f32)
                .at[0, :cout].set(params["b3"][0])
                .at[0, coutp:coutp + cout].set(params["bs"][0]))
    else:
        w3_p = jnp.zeros((pp, coutp), bf16).at[:p, :cout].set(params["w3"].astype(bf16))
        g3_p = jnp.zeros((1, coutp), f32).at[0, :cout].set(params["g3"][0])
        b3_p = jnp.zeros((1, coutp), f32).at[0, :cout].set(params["b3"][0])

    kernel = functools.partial(
        _bottleneck_kernel,
        H=h, W=w, Ho=ho, Wo=wo, stride=stride,
        cinp=cinp, pp=pp, coutp=coutp,
        inv_r1=1.0 / float(n * h * w), inv_r2=1.0 / float(n * ho * wo),
        has_proj=has_proj)

    def whole(shape):   # constant block index -> fetched once, stays in VMEM
        return pl.BlockSpec(shape, lambda ph, b: (0,) * len(shape))

    # x is only consumed from HBM in phase 0 (stashed to VMEM afterwards);
    # the output is only produced in phase 3.  Collapsing the index maps to
    # block 0 outside those phases removes the redundant HBM traffic.
    x_spec = pl.BlockSpec((1, h, w, cinp),
                          lambda ph, b: (jnp.where(ph == 0, b, 0), 0, 0, 0))
    o_spec = pl.BlockSpec((1, ho, wo, coutp),
                          lambda ph, b: (jnp.where(ph == 3, b, 0), 0, 0, 0))

    out_p = pl.pallas_call(
        kernel,
        out_shape=jax.ShapeDtypeStruct((n, ho, wo, coutp), f32),
        grid_spec=pltpu.PrefetchScalarGridSpec(
            num_scalar_prefetch=0,
            grid=(4, n),                                   # (phase, image)
            in_specs=[
                x_spec,
                whole(w1_p.shape), whole(g1_p.shape), whole(b1_p.shape),
                whole(w2_p.shape), whole(g2_p.shape), whole(b2_p.shape),
                whole(w3_p.shape), whole(g3_p.shape), whole(b3_p.shape),
            ],
            out_specs=o_spec,
            scratch_shapes=[
                pltpu.VMEM((n, h * w, cinp), f32),         # stashed input
                pltpu.VMEM((n, h * w, pp), f32),           # conv1 pre-BN
                pltpu.VMEM((n, ho * wo, pp), f32),         # conv2 pre-BN
                pltpu.VMEM((n, ho * wo, cw), f32),         # conv3 (+shortcut) pre-BN
                pltpu.VMEM((h + 2, w + 2, pp), f32),       # im2col canvas
                pltpu.VMEM((1, pp), f32), pltpu.VMEM((1, pp), f32),   # bn1 stats
                pltpu.VMEM((1, pp), f32), pltpu.VMEM((1, pp), f32),   # bn2 stats
                pltpu.VMEM((1, cw), f32), pltpu.VMEM((1, cw), f32),   # bn3/bn_s stats
                pltpu.VMEM((1, pp), f32), pltpu.VMEM((1, pp), f32),   # bn1 scale/shift
                pltpu.VMEM((1, pp), f32), pltpu.VMEM((1, pp), f32),   # bn2 scale/shift
                pltpu.VMEM((1, cw), f32), pltpu.VMEM((1, cw), f32),   # bn3 scale/shift
            ],
        ),
        compiler_params=pltpu.CompilerParams(
            # sequential: global BN accumulation + phase ordering require it.
            dimension_semantics=("arbitrary", "arbitrary"),
            vmem_limit_bytes=32 * 1024 * 1024,
        ),
    )(x_p, w1_p, g1_p, b1_p, w2_p, g2_p, b2_p, w3_p, g3_p, b3_p)

    out = out_p[..., :cout]                                # drop lane padding
    return jnp.transpose(out, (0, 3, 1, 2))                # NHWC -> NCHW


# --------------------------- pure-JAX reference -----------------------------
def _bn_ref(y, g, b):
    mean = y.mean(axis=(0, 1, 2), keepdims=True)
    var = ((y - mean) ** 2).mean(axis=(0, 1, 2), keepdims=True)
    return (y - mean) * lax.rsqrt(var + EPS) * g + b


def bottleneck_ref(x_nchw, params, stride=1):
    dn = ("NHWC", "HWIO", "NHWC")
    bf = jnp.bfloat16
    x = jnp.transpose(x_nchw, (0, 2, 3, 1))
    cin = x.shape[-1]
    p = params["w1"].shape[1]
    cout = EXPANSION * p

    def conv(a, wgt, s, pad):     # bf16 inputs / f32 accumulation, like the kernel
        return lax.conv_general_dilated(
            a.astype(bf), wgt.astype(bf), (s, s), pad,
            dimension_numbers=dn, preferred_element_type=jnp.float32)

    c1 = conv(x, params["w1"].reshape(1, 1, cin, p), 1, ((0, 0), (0, 0)))
    h1 = jax.nn.relu(_bn_ref(c1, params["g1"][0], params["b1"][0]))
    c2 = conv(h1, params["w2"], stride, ((1, 1), (1, 1)))
    h2 = jax.nn.relu(_bn_ref(c2, params["g2"][0], params["b2"][0]))
    c3 = conv(h2, params["w3"].reshape(1, 1, p, cout), 1, ((0, 0), (0, 0)))
    main = _bn_ref(c3, params["g3"][0], params["b3"][0])
    if stride != 1 or cin != cout:
        cs = conv(x, params["ws"].reshape(1, 1, cin, cout), stride, ((0, 0), (0, 0)))
        short = _bn_ref(cs, params["gs"][0], params["bs"][0])
    else:
        short = x
    return jnp.transpose(jax.nn.relu(main + short), (0, 3, 1, 2))


# ----------------------------------- main ------------------------------------
if __name__ == "__main__":
    N, H, W = 2, 8, 8

    def make_params(k, in_planes, planes):
        cout = EXPANSION * planes
        ks = jax.random.split(k, 12)
        rnd = lambda kk, shape, s: jax.random.normal(kk, shape, jnp.float32) * s
        prm = {
            "w1": rnd(ks[0], (in_planes, planes), 0.2),
            "g1": 1.0 + 0.1 * rnd(ks[1], (1, planes), 1.0),
            "b1": 0.1 * rnd(ks[2], (1, planes), 1.0),
            "w2": rnd(ks[3], (3, 3, planes, planes), 0.2),
            "g2": 1.0 + 0.1 * rnd(ks[4], (1, planes), 1.0),
            "b2": 0.1 * rnd(ks[5], (1, planes), 1.0),
            "w3": rnd(ks[6], (planes, cout), 0.2),
            "g3": 1.0 + 0.1 * rnd(ks[7], (1, cout), 1.0),
            "b3": 0.1 * rnd(ks[8], (1, cout), 1.0),
        }
        if in_planes != cout:                       # projection shortcut params
            prm["ws"] = rnd(ks[9], (in_planes, cout), 0.2)
            prm["gs"] = 1.0 + 0.1 * rnd(ks[10], (1, cout), 1.0)
            prm["bs"] = 0.1 * rnd(ks[11], (1, cout), 1.0)
        return prm

    key = jax.random.PRNGKey(0)
    k1, k2, k3, k4 = jax.random.split(key, 4)

    # Tolerance reflects bf16-input MXU matmuls (same on both sides), not a bug
    # margin; any structural error (BN stats, im2col shift, shortcut) would be
    # orders of magnitude larger.
    TOL = dict(rtol=1e-2, atol=1e-2)

    # Case 1: projection shortcut (in_planes=8 != 4*planes=16), stride=1.
    params_a = make_params(k1, 8, 4)
    x_a = jax.random.normal(k2, (N, 8, H, W), jnp.float32)       # NCHW like PyTorch
    out_a = jax.block_until_ready(bottleneck_forward(x_a, params_a, stride=1))
    ref_a = jax.block_until_ready(bottleneck_ref(x_a, params_a, stride=1))
    assert out_a.shape == (N, 16, H, W), out_a.shape
    np.testing.assert_allclose(np.asarray(out_a), np.asarray(ref_a), **TOL)

    # Case 2: identity shortcut (in_planes=16 == 4*planes), stride=1.
    params_b = make_params(k3, 16, 4)
    x_b = jax.random.normal(k4, (N, 16, H, W), jnp.float32)
    out_b = jax.block_until_ready(bottleneck_forward(x_b, params_b, stride=1))
    ref_b = jax.block_until_ready(bottleneck_ref(x_b, params_b, stride=1))
    assert out_b.shape == (N, 16, H, W), out_b.shape
    np.testing.assert_allclose(np.asarray(out_b), np.asarray(ref_b), **TOL)

    print("KERNEL_OK")
</pallas_src>

<mosaic_0001>
module attributes {stable_mosaic.version = 11 : i64} {
  func.func @_bottleneck_kernel(%arg0: i32, %arg1: i32, %arg2: memref<1x8x8x128xf32, #tpu.memory_space<vmem>>, %arg3: memref<128x128xbf16, #tpu.memory_space<vmem>>, %arg4: memref<1x128xf32, #tpu.memory_space<vmem>>, %arg5: memref<1x128xf32, #tpu.memory_space<vmem>>, %arg6: memref<1152x128xbf16, #tpu.memory_space<vmem>>, %arg7: memref<1x128xf32, #tpu.memory_space<vmem>>, %arg8: memref<1x128xf32, #tpu.memory_space<vmem>>, %arg9: memref<256x256xbf16, #tpu.memory_space<vmem>>, %arg10: memref<1x256xf32, #tpu.memory_space<vmem>>, %arg11: memref<1x256xf32, #tpu.memory_space<vmem>>, %arg12: memref<1x8x8x128xf32, #tpu.memory_space<vmem>>, %arg13: memref<2x64x128xf32, #tpu.memory_space<vmem>>, %arg14: memref<2x64x128xf32, #tpu.memory_space<vmem>>, %arg15: memref<2x64x128xf32, #tpu.memory_space<vmem>>, %arg16: memref<2x64x256xf32, #tpu.memory_space<vmem>>, %arg17: memref<10x10x128xf32, #tpu.memory_space<vmem>>, %arg18: memref<1x128xf32, #tpu.memory_space<vmem>>, %arg19: memref<1x128xf32, #tpu.memory_space<vmem>>, %arg20: memref<1x128xf32, #tpu.memory_space<vmem>>, %arg21: memref<1x128xf32, #tpu.memory_space<vmem>>, %arg22: memref<1x256xf32, #tpu.memory_space<vmem>>, %arg23: memref<1x256xf32, #tpu.memory_space<vmem>>, %arg24: memref<1x128xf32, #tpu.memory_space<vmem>>, %arg25: memref<1x128xf32, #tpu.memory_space<vmem>>, %arg26: memref<1x128xf32, #tpu.memory_space<vmem>>, %arg27: memref<1x128xf32, #tpu.memory_space<vmem>>, %arg28: memref<1x256xf32, #tpu.memory_space<vmem>>, %arg29: memref<1x256xf32, #tpu.memory_space<vmem>>) attributes {dimension_semantics = [#tpu.dimension_semantics<arbitrary>, #tpu.dimension_semantics<arbitrary>], iteration_bounds = array<i64: 4, 2>, scalar_prefetch = 0 : i64, scratch_operands = 17 : i64, tpu.core_type = #tpu.core_type<tc>, window_params = [{transform_indices = @transform_0, window_bounds = array<i64: 1, 8, 8, 128>}, {pipeline_mode = #tpu.pipeline_mode<synchronous>, transform_indices = @transform_1, window_bounds = array<i64: 128, 128>}, {pipeline_mode = #tpu.pipeline_mode<synchronous>, transform_indices = @transform_2, window_bounds = array<i64: 1, 128>}, {pipeline_mode = #tpu.pipeline_mode<synchronous>, transform_indices = @transform_3, window_bounds = array<i64: 1, 128>}, {pipeline_mode = #tpu.pipeline_mode<synchronous>, transform_indices = @transform_4, window_bounds = array<i64: 1152, 128>}, {pipeline_mode = #tpu.pipeline_mode<synchronous>, transform_indices = @transform_5, window_bounds = array<i64: 1, 128>}, {pipeline_mode = #tpu.pipeline_mode<synchronous>, transform_indices = @transform_6, window_bounds = array<i64: 1, 128>}, {pipeline_mode = #tpu.pipeline_mode<synchronous>, transform_indices = @transform_7, window_bounds = array<i64: 256, 256>}, {pipeline_mode = #tpu.pipeline_mode<synchronous>, transform_indices = @transform_8, window_bounds = array<i64: 1, 256>}, {pipeline_mode = #tpu.pipeline_mode<synchronous>, transform_indices = @transform_9, window_bounds = array<i64: 1, 256>}, {transform_indices = @transform_10, window_bounds = array<i64: 1, 8, 8, 128>}]} {
    %c0_i32 = arith.constant 0 : i32
    %0 = arith.cmpi eq, %arg0, %c0_i32 : i32
    %c0_i32_0 = arith.constant 0 : i32
    %1 = arith.cmpi eq, %arg1, %c0_i32_0 : i32
    %2 = arith.andi %0, %1 : i1
    %3 = arith.extui %2 : i1 to i32
    %c0_i32_1 = arith.constant 0 : i32
    %4 = arith.cmpi ne, %3, %c0_i32_1 : i32
    scf.if %4 {
      %cst = arith.constant 0.000000e+00 : f32
      %32 = vector.broadcast %cst : f32 to vector<1x128xf32>
      %c0 = arith.constant 0 : index
      %c0_16 = arith.constant 0 : index
      %33 = vector.load %arg18[%c0, %c0_16] : memref<1x128xf32, #tpu.memory_space<vmem>>, vector<1x128xf32>
      tpu.vector_store %arg18[%c0, %c0_16], %32 {strides = array<i32>} : memref<1x128xf32, #tpu.memory_space<vmem>>, vector<1x128xf32>,
      %cst_17 = arith.constant 0.000000e+00 : f32
      %34 = vector.broadcast %cst_17 : f32 to vector<1x128xf32>
      %c0_18 = arith.constant 0 : index
      %c0_19 = arith.constant 0 : index
      %35 = vector.load %arg19[%c0_18, %c0_19] : memref<1x128xf32, #tpu.memory_space<vmem>>, vector<1x128xf32>
      tpu.vector_store %arg19[%c0_18, %c0_19], %34 {strides = array<i32>} : memref<1x128xf32, #tpu.memory_space<vmem>>, vector<1x128xf32>,
      %cst_20 = arith.constant 0.000000e+00 : f32
      %36 = vector.broadcast %cst_20 : f32 to vector<1x128xf32>
      %c0_21 = arith.constant 0 : index
      %c0_22 = arith.constant 0 : index
      %37 = vector.load %arg20[%c0_21, %c0_22] : memref<1x128xf32, #tpu.memory_space<vmem>>, vector<1x128xf32>
      tpu.vector_store %arg20[%c0_21, %c0_22], %36 {strides = array<i32>} : memref<1x128xf32, #tpu.memory_space<vmem>>, vector<1x128xf32>,
      %cst_23 = arith.constant 0.000000e+00 : f32
      %38 = vector.broadcast %cst_23 : f32 to vector<1x128xf32>
      %c0_24 = arith.constant 0 : index
      %c0_25 = arith.constant 0 : index
      %39 = vector.load %arg21[%c0_24, %c0_25] : memref<1x128xf32, #tpu.memory_space<vmem>>, vector<1x128xf32>
      tpu.vector_store %arg21[%c0_24, %c0_25], %38 {strides = array<i32>} : memref<1x128xf32, #tpu.memory_space<vmem>>, vector<1x128xf32>,
      %cst_26 = arith.constant 0.000000e+00 : f32
      %40 = vector.broadcast %cst_26 : f32 to vector<1x256xf32>
      %c0_27 = arith.constant 0 : index
      %c0_28 = arith.constant 0 : index
      %41 = vector.load %arg22[%c0_27, %c0_28] : memref<1x256xf32, #tpu.memory_space<vmem>>, vector<1x256xf32>
      tpu.vector_store %arg22[%c0_27, %c0_28], %40 {strides = array<i32>} : memref<1x256xf32, #tpu.memory_space<vmem>>, vector<1x256xf32>,
      %cst_29 = arith.constant 0.000000e+00 : f32
      %42 = vector.broadcast %cst_29 : f32 to vector<1x256xf32>
      %c0_30 = arith.constant 0 : index
      %c0_31 = arith.constant 0 : index
      %43 = vector.load %arg23[%c0_30, %c0_31] : memref<1x256xf32, #tpu.memory_space<vmem>>, vector<1x256xf32>
      tpu.vector_store %arg23[%c0_30, %c0_31], %42 {strides = array<i32>} : memref<1x256xf32, #tpu.memory_space<vmem>>, vector<1x256xf32>,
    } else {
    }
    %c0_i32_2 = arith.constant 0 : i32
    %5 = arith.cmpi eq, %arg0, %c0_i32_2 : i32
    %6 = arith.extui %5 : i1 to i32
    %c0_i32_3 = arith.constant 0 : i32
    %7 = arith.cmpi ne, %6, %c0_i32_3 : i32
    scf.if %7 {
      %c0 = arith.constant 0 : index
      %c0_16 = arith.constant 0 : index
      %c0_17 = arith.constant 0 : index
      %c0_18 = arith.constant 0 : index
      %32 = vector.load %arg2[%c0, %c0_16, %c0_17, %c0_18] : memref<1x8x8x128xf32, #tpu.memory_space<vmem>>, vector<1x8x8x128xf32>
      %33 = vector.shape_cast %32 : vector<1x8x8x128xf32> to vector<8x8x128xf32>
      %34 = vector.shape_cast %33 : vector<8x8x128xf32> to vector<64x128xf32>
      %35 = arith.index_cast %arg1 : i32 to index
      %c0_19 = arith.constant 0 : index
      %c0_20 = arith.constant 0 : index
      %36 = vector.load %arg13[%35, %c0_19, %c0_20] : memref<2x64x128xf32, #tpu.memory_space<vmem>>, vector<1x64x128xf32>
      %37 = vector.shape_cast %36 : vector<1x64x128xf32> to vector<64x128xf32>
      %38 = vector.shape_cast %34 : vector<64x128xf32> to vector<1x64x128xf32>
      tpu.vector_store %arg13[%35, %c0_19, %c0_20], %38 {strides = array<i32>} : memref<2x64x128xf32, #tpu.memory_space<vmem>>, vector<1x64x128xf32>,
      %39 = arith.truncf %34 : vector<64x128xf32> to vector<64x128xbf16>
      %c0_21 = arith.constant 0 : index
      %c0_22 = arith.constant 0 : index
      %40 = vector.load %arg3[%c0_21, %c0_22] : memref<128x128xbf16, #tpu.memory_space<vmem>>, vector<128x128xbf16>
      %cst = arith.constant dense<0.000000e+00> : vector<64x128xf32>
      %41 = tpu.matmul %39, %40, %cst {dimension_numbers = #tpu.dot_dimension_numbers<[1], [0], [0], [1], [0, 0, 1, 1], [], []>} : vector<64x128xbf16>, vector<128x128xbf16>, vector<64x128xf32> -> vector<64x128xf32>
      %42 = arith.index_cast %arg1 : i32 to index
      %c0_23 = arith.constant 0 : index
      %c0_24 = arith.constant 0 : index
      %43 = vector.load %arg14[%42, %c0_23, %c0_24] : memref<2x64x128xf32, #tpu.memory_space<vmem>>, vector<1x64x128xf32>
      %44 = vector.shape_cast %43 : vector<1x64x128xf32> to vector<64x128xf32>
      %45 = vector.shape_cast %41 : vector<64x128xf32> to vector<1x64x128xf32>
      tpu.vector_store %arg14[%42, %c0_23, %c0_24], %45 {strides = array<i32>} : memref<2x64x128xf32, #tpu.memory_space<vmem>>, vector<1x64x128xf32>,
      %c0_25 = arith.constant 0 : index
      %c0_26 = arith.constant 0 : index
      %46 = vector.load %arg18[%c0_25, %c0_26] : memref<1x128xf32, #tpu.memory_space<vmem>>, vector<1x128xf32>
      %cst_27 = arith.constant dense<0.000000e+00> : vector<128xf32>
      %47 = vector.multi_reduction <add>, %41, %cst_27 [0] : vector<64x128xf32> to vector<128xf32>
      %48 = vector.shape_cast %47 : vector<128xf32> to vector<1x128xf32>
      %49 = arith.addf %46, %48 : vector<1x128xf32>
      %c0_28 = arith.constant 0 : index
      %c0_29 = arith.constant 0 : index
      %50 = vector.load %arg18[%c0_28, %c0_29] : memref<1x128xf32, #tpu.memory_space<vmem>>, vector<1x128xf32>
      tpu.vector_store %arg18[%c0_28, %c0_29], %49 {strides = array<i32>} : memref<1x128xf32, #tpu.memory_space<vmem>>, vector<1x128xf32>,
      %c0_30 = arith.constant 0 : index
      %c0_31 = arith.constant 0 : index
      %51 = vector.load %arg19[%c0_30, %c0_31] : memref<1x128xf32, #tpu.memory_space<vmem>>, vector<1x128xf32>
      %52 = arith.mulf %41, %41 : vector<64x128xf32>
      %cst_32 = arith.constant dense<0.000000e+00> : vector<128xf32>
      %53 = vector.multi_reduction <add>, %52, %cst_32 [0] : vector<64x128xf32> to vector<128xf32>
      %54 = vector.shape_cast %53 : vector<128xf32> to vector<1x128xf32>
      %55 = arith.addf %51, %54 : vector<1x128xf32>
      %c0_33 = arith.constant 0 : index
      %c0_34 = arith.constant 0 : index
      %56 = vector.load %arg19[%c0_33, %c0_34] : memref<1x128xf32, #tpu.memory_space<vmem>>, vector<1x128xf32>
      tpu.vector_store %arg19[%c0_33, %c0_34], %55 {strides = array<i32>} : memref<1x128xf32, #tpu.memory_space<vmem>>, vector<1x128xf32>,
    } else {
    }
    %c1_i32 = arith.constant 1 : i32
    %8 = arith.cmpi eq, %arg0, %c1_i32 : i32
    %c0_i32_4 = arith.constant 0 : i32
    %9 = arith.cmpi eq, %arg1, %c0_i32_4 : i32
    %10 = arith.andi %8, %9 : i1
    %11 = arith.extui %10 : i1 to i32
    %c0_i32_5 = arith.constant 0 : i32
    %12 = arith.cmpi ne, %11, %c0_i32_5 : i32
    scf.if %12 {
      %c0 = arith.constant 0 : index
      %c0_16 = arith.constant 0 : index
      %32 = vector.load %arg18[%c0, %c0_16] : memref<1x128xf32, #tpu.memory_space<vmem>>, vector<1x128xf32>
      %cst = arith.constant 7.812500e-03 : f32
      %33 = vector.broadcast %cst : f32 to vector<1x128xf32>
      %34 = arith.mulf %32, %33 : vector<1x128xf32>
      %c0_17 = arith.constant 0 : index
      %c0_18 = arith.constant 0 : index
      %35 = vector.load %arg19[%c0_17, %c0_18] : memref<1x128xf32, #tpu.memory_space<vmem>>, vector<1x128xf32>
      %cst_19 = arith.constant 7.812500e-03 : f32
      %36 = vector.broadcast %cst_19 : f32 to vector<1x128xf32>
      %37 = arith.mulf %35, %36 : vector<1x128xf32>
      %38 = arith.mulf %34, %34 : vector<1x128xf32>
      %39 = arith.subf %37, %38 : vector<1x128xf32>
      %cst_20 = arith.constant 0.000000e+00 : f32
      %40 = vector.broadcast %cst_20 : f32 to vector<1x128xf32>
      %41 = arith.maximumf %39, %40 : vector<1x128xf32>
      %c0_21 = arith.constant 0 : index
      %c0_22 = arith.constant 0 : index
      %42 = vector.load %arg4[%c0_21, %c0_22] : memref<1x128xf32, #tpu.memory_space<vmem>>, vector<1x128xf32>
      %cst_23 = arith.constant 9.99999974E-6 : f32
      %43 = vector.broadcast %cst_23 : f32 to vector<1x128xf32>
      %44 = arith.addf %41, %43 : vector<1x128xf32>
      %45 = math.rsqrt %44 : vector<1x128xf32>
      %46 = arith.mulf %42, %45 : vector<1x128xf32>
      %c0_24 = arith.constant 0 : index
      %c0_25 = arith.constant 0 : index
      %47 = vector.load %arg5[%c0_24, %c0_25] : memref<1x128xf32, #tpu.memory_space<vmem>>, vector<1x128xf32>
      %48 = arith.mulf %34, %46 : vector<1x128xf32>
      %49 = arith.subf %47, %48 : vector<1x128xf32>
      %c0_26 = arith.constant 0 : index
      %c0_27 = arith.constant 0 : index
      %50 = vector.load %arg24[%c0_26, %c0_27] : memref<1x128xf32, #tpu.memory_space<vmem>>, vector<1x128xf32>
      tpu.vector_store %arg24[%c0_26, %c0_27], %46 {strides = array<i32>} : memref<1x128xf32, #tpu.memory_space<vmem>>, vector<1x128xf32>,
      %c0_28 = arith.constant 0 : index
      %c0_29 = arith.constant 0 : index
      %51 = vector.load %arg25[%c0_28, %c0_29] : memref<1x128xf32, #tpu.memory_space<vmem>>, vector<1x128xf32>
      tpu.vector_store %arg25[%c0_28, %c0_29], %49 {strides = array<i32>} : memref<1x128xf32, #tpu.memory_space<vmem>>, vector<1x128xf32>,
      %cst_30 = arith.constant 0.000000e+00 : f32
      %52 = vector.broadcast %cst_30 : f32 to vector<10x10x128xf32>
      %c0_31 = arith.constant 0 : index
      %c0_32 = arith.constant 0 : index
      %c0_33 = arith.constant 0 : index
      %53 = vector.load %arg17[%c0_31, %c0_32, %c0_33] : memref<10x10x128xf32, #tpu.memory_space<vmem>>, vector<10x10x128xf32>
      tpu.vector_store %arg17[%c0_31, %c0_32, %c0_33], %52 {strides = array<i32>} : memref<10x10x128xf32, #tpu.memory_space<vmem>>, vector<10x10x128xf32>,
    } else {
    }
    %c1_i32_6 = arith.constant 1 : i32
    %13 = arith.cmpi eq, %arg0, %c1_i32_6 : i32
    %14 = arith.extui %13 : i1 to i32
    %c0_i32_7 = arith.constant 0 : i32
    %15 = arith.cmpi ne, %14, %c0_i32_7 : i32
    scf.if %15 {
      %32 = arith.index_cast %arg1 : i32 to index
      %c0 = arith.constant 0 : index
      %c0_16 = arith.constant 0 : index
      %33 = vector.load %arg14[%32, %c0, %c0_16] : memref<2x64x128xf32, #tpu.memory_space<vmem>>, vector<1x64x128xf32>
      %34 = vector.shape_cast %33 : vector<1x64x128xf32> to vector<64x128xf32>
      %c0_17 = arith.constant 0 : index
      %c0_18 = arith.constant 0 : index
      %35 = vector.load %arg24[%c0_17, %c0_18] : memref<1x128xf32, #tpu.memory_space<vmem>>, vector<1x128xf32>
      %36 = vector.broadcast %35 : vector<1x128xf32> to vector<64x128xf32>
      %37 = arith.mulf %34, %36 : vector<64x128xf32>
      %c0_19 = arith.constant 0 : index
      %c0_20 = arith.constant 0 : index
      %38 = vector.load %arg25[%c0_19, %c0_20] : memref<1x128xf32, #tpu.memory_space<vmem>>, vector<1x128xf32>
      %39 = vector.broadcast %38 : vector<1x128xf32> to vector<64x128xf32>
      %40 = arith.addf %37, %39 : vector<64x128xf32>
      %cst = arith.constant 0.000000e+00 : f32
      %41 = vector.broadcast %cst : f32 to vector<64x128xf32>
      %42 = arith.maximumf %40, %41 : vector<64x128xf32>
      %43 = vector.shape_cast %42 : vector<64x128xf32> to vector<8x8x128xf32>
      %c1 = arith.constant 1 : index
      %c1_21 = arith.constant 1 : index
      %c0_22 = arith.constant 0 : index
      %44 = vector.load %arg17[%c1, %c1_21, %c0_22] : memref<10x10x128xf32, #tpu.memory_space<vmem>>, vector<8x8x128xf32>
      tpu.vector_store %arg17[%c1, %c1_21, %c0_22], %43 {strides = array<i32>} : memref<10x10x128xf32, #tpu.memory_space<vmem>>, vector<8x8x128xf32>,
      %c0_23 = arith.constant 0 : index
      %c0_24 = arith.constant 0 : index
      %c0_25 = arith.constant 0 : index
      %45 = vector.load %arg17[%c0_23, %c0_24, %c0_25] : memref<10x10x128xf32, #tpu.memory_space<vmem>>, vector<8x8x128xf32>
      %46 = vector.shape_cast %45 : vector<8x8x128xf32> to vector<64x128xf32>
      %47 = arith.truncf %46 : vector<64x128xf32> to vector<64x128xbf16>
      %c0_26 = arith.constant 0 : index
      %c1_27 = arith.constant 1 : index
      %c0_28 = arith.constant 0 : index
      %48 = vector.load %arg17[%c0_26, %c1_27, %c0_28] : memref<10x10x128xf32, #tpu.memory_space<vmem>>, vector<8x8x128xf32>
      %49 = vector.shape_cast %48 : vector<8x8x128xf32> to vector<64x128xf32>
      %50 = arith.truncf %49 : vector<64x128xf32> to vector<64x128xbf16>
      %c0_29 = arith.constant 0 : index
      %c2 = arith.constant 2 : index
      %c0_30 = arith.constant 0 : index
      %51 = vector.load %arg17[%c0_29, %c2, %c0_30] : memref<10x10x128xf32, #tpu.memory_space<vmem>>, vector<8x8x128xf32>
      %52 = vector.shape_cast %51 : vector<8x8x128xf32> to vector<64x128xf32>
      %53 = arith.truncf %52 : vector<64x128xf32> to vector<64x128xbf16>
      %c1_31 = arith.constant 1 : index
      %c0_32 = arith.constant 0 : index
      %c0_33 = arith.constant 0 : index
      %54 = vector.load %arg17[%c1_31, %c0_32, %c0_33] : memref<10x10x128xf32, #tpu.memory_space<vmem>>, vector<8x8x128xf32>
      %55 = vector.shape_cast %54 : vector<8x8x128xf32> to vector<64x128xf32>
      %56 = arith.truncf %55 : vector<64x128xf32> to vector<64x128xbf16>
      %c1_34 = arith.constant 1 : index
      %c1_35 = arith.constant 1 : index
      %c0_36 = arith.constant 0 : index
      %57 = vector.load %arg17[%c1_34, %c1_35, %c0_36] : memref<10x10x128xf32, #tpu.memory_space<vmem>>, vector<8x8x128xf32>
      %58 = vector.shape_cast %57 : vector<8x8x128xf32> to vector<64x128xf32>
      %59 = arith.truncf %58 : vector<64x128xf32> to vector<64x128xbf16>
      %c1_37 = arith.constant 1 : index
      %c2_38 = arith.constant 2 : index
      %c0_39 = arith.constant 0 : index
      %60 = vector.load %arg17[%c1_37, %c2_38, %c0_39] : memref<10x10x128xf32, #tpu.memory_space<vmem>>, vector<8x8x128xf32>
      %61 = vector.shape_cast %60 : vector<8x8x128xf32> to vector<64x128xf32>
      %62 = arith.truncf %61 : vector<64x128xf32> to vector<64x128xbf16>
      %c2_40 = arith.constant 2 : index
      %c0_41 = arith.constant 0 : index
      %c0_42 = arith.constant 0 : index
      %63 = vector.load %arg17[%c2_40, %c0_41, %c0_42] : memref<10x10x128xf32, #tpu.memory_space<vmem>>, vector<8x8x128xf32>
      %64 = vector.shape_cast %63 : vector<8x8x128xf32> to vector<64x128xf32>
      %65 = arith.truncf %64 : vector<64x128xf32> to vector<64x128xbf16>
      %c2_43 = arith.constant 2 : index
      %c1_44 = arith.constant 1 : index
      %c0_45 = arith.constant 0 : index
      %66 = vector.load %arg17[%c2_43, %c1_44, %c0_45] : memref<10x10x128xf32, #tpu.memory_space<vmem>>, vector<8x8x128xf32>
      %67 = vector.shape_cast %66 : vector<8x8x128xf32> to vector<64x128xf32>
      %68 = arith.truncf %67 : vector<64x128xf32> to vector<64x128xbf16>
      %c2_46 = arith.constant 2 : index
      %c2_47 = arith.constant 2 : index
      %c0_48 = arith.constant 0 : index
      %69 = vector.load %arg17[%c2_46, %c2_47, %c0_48] : memref<10x10x128xf32, #tpu.memory_space<vmem>>, vector<8x8x128xf32>
      %70 = vector.shape_cast %69 : vector<8x8x128xf32> to vector<64x128xf32>
      %71 = arith.truncf %70 : vector<64x128xf32> to vector<64x128xbf16>
      %72 = tpu.concatenate %47, %50, %53, %56, %59, %62, %65, %68, %71 in 1 : vector<64x128xbf16>, vector<64x128xbf16>, vector<64x128xbf16>, vector<64x128xbf16>, vector<64x128xbf16>, vector<64x128xbf16>, vector<64x128xbf16>, vector<64x128xbf16>, vector<64x128xbf16> -> vector<64x1152xbf16>
      %c0_49 = arith.constant 0 : index
      %c0_50 = arith.constant 0 : index
      %73 = vector.load %arg6[%c0_49, %c0_50] : memref<1152x128xbf16, #tpu.memory_space<vmem>>, vector<1152x128xbf16>
      %cst_51 = arith.constant dense<0.000000e+00> : vector<64x128xf32>
      %74 = tpu.matmul %72, %73, %cst_51 {dimension_numbers = #tpu.dot_dimension_numbers<[1], [0], [0], [1], [0, 0, 1, 1], [], []>} : vector<64x1152xbf16>, vector<1152x128xbf16>, vector<64x128xf32> -> vector<64x128xf32>
      %75 = arith.index_cast %arg1 : i32 to index
      %c0_52 = arith.constant 0 : index
      %c0_53 = arith.constant 0 : index
      %76 = vector.load %arg15[%75, %c0_52, %c0_53] : memref<2x64x128xf32, #tpu.memory_space<vmem>>, vector<1x64x128xf32>
      %77 = vector.shape_cast %76 : vector<1x64x128xf32> to vector<64x128xf32>
      %78 = vector.shape_cast %74 : vector<64x128xf32> to vector<1x64x128xf32>
      tpu.vector_store %arg15[%75, %c0_52, %c0_53], %78 {strides = array<i32>} : memref<2x64x128xf32, #tpu.memory_space<vmem>>, vector<1x64x128xf32>,
      %c0_54 = arith.constant 0 : index
      %c0_55 = arith.constant 0 : index
      %79 = vector.load %arg20[%c0_54, %c0_55] : memref<1x128xf32, #tpu.memory_space<vmem>>, vector<1x128xf32>
      %cst_56 = arith.constant dense<0.000000e+00> : vector<128xf32>
      %80 = vector.multi_reduction <add>, %74, %cst_56 [0] : vector<64x128xf32> to vector<128xf32>
      %81 = vector.shape_cast %80 : vector<128xf32> to vector<1x128xf32>
      %82 = arith.addf %79, %81 : vector<1x128xf32>
      %c0_57 = arith.constant 0 : index
      %c0_58 = arith.constant 0 : index
      %83 = vector.load %arg20[%c0_57, %c0_58] : memref<1x128xf32, #tpu.memory_space<vmem>>, vector<1x128xf32>
      tpu.vector_store %arg20[%c0_57, %c0_58], %82 {strides = array<i32>} : memref<1x128xf32, #tpu.memory_space<vmem>>, vector<1x128xf32>,
      %c0_59 = arith.constant 0 : index
      %c0_60 = arith.constant 0 : index
      %84 = vector.load %arg21[%c0_59, %c0_60] : memref<1x128xf32, #tpu.memory_space<vmem>>, vector<1x128xf32>
      %85 = arith.mulf %74, %74 : vector<64x128xf32>
      %cst_61 = arith.constant dense<0.000000e+00> : vector<128xf32>
      %86 = vector.multi_reduction <add>, %85, %cst_61 [0] : vector<64x128xf32> to vector<128xf32>
      %87 = vector.shape_cast %86 : vector<128xf32> to vector<1x128xf32>
      %88 = arith.addf %84, %87 : vector<1x128xf32>
      %c0_62 = arith.constant 0 : index
      %c0_63 = arith.constant 0 : index
      %89 = vector.load %arg21[%c0_62, %c0_63] : memref<1x128xf32, #tpu.memory_space<vmem>>, vector<1x128xf32>
      tpu.vector_store %arg21[%c0_62, %c0_63], %88 {strides = array<i32>} : memref<1x128xf32, #tpu.memory_space<vmem>>, vector<1x128xf32>,
    } else {
    }
    %c2_i32 = arith.constant 2 : i32
    %16 = arith.cmpi eq, %arg0, %c2_i32 : i32
    %c0_i32_8 = arith.constant 0 : i32
    %17 = arith.cmpi eq, %arg1, %c0_i32_8 : i32
    %18 = arith.andi %16, %17 : i1
    %19 = arith.extui %18 : i1 to i32
    %c0_i32_9 = arith.constant 0 : i32
    %20 = arith.cmpi ne, %19, %c0_i32_9 : i32
    scf.if %20 {
      %c0 = arith.constant 0 : index
      %c0_16 = arith.constant 0 : index
      %32 = vector.load %arg20[%c0, %c0_16] : memref<1x128xf32, #tpu.memory_space<vmem>>, vector<1x128xf32>
      %cst = arith.constant 7.812500e-03 : f32
      %33 = vector.broadcast %cst : f32 to vector<1x128xf32>
      %34 = arith.mulf %32, %33 : vector<1x128xf32>
      %c0_17 = arith.constant 0 : index
      %c0_18 = arith.constant 0 : index
      %35 = vector.load %arg21[%c0_17, %c0_18] : memref<1x128xf32, #tpu.memory_space<vmem>>, vector<1x128xf32>
      %cst_19 = arith.constant 7.812500e-03 : f32
      %36 = vector.broadcast %cst_19 : f32 to vector<1x128xf32>
      %37 = arith.mulf %35, %36 : vector<1x128xf32>
      %38 = arith.mulf %34, %34 : vector<1x128xf32>
      %39 = arith.subf %37, %38 : vector<1x128xf32>
      %cst_20 = arith.constant 0.000000e+00 : f32
      %40 = vector.broadcast %cst_20 : f32 to vector<1x128xf32>
      %41 = arith.maximumf %39, %40 : vector<1x128xf32>
      %c0_21 = arith.constant 0 : index
      %c0_22 = arith.constant 0 : index
      %42 = vector.load %arg7[%c0_21, %c0_22] : memref<1x128xf32, #tpu.memory_space<vmem>>, vector<1x128xf32>
      %cst_23 = arith.constant 9.99999974E-6 : f32
      %43 = vector.broadcast %cst_23 : f32 to vector<1x128xf32>
      %44 = arith.addf %41, %43 : vector<1x128xf32>
      %45 = math.rsqrt %44 : vector<1x128xf32>
      %46 = arith.mulf %42, %45 : vector<1x128xf32>
      %c0_24 = arith.constant 0 : index
      %c0_25 = arith.constant 0 : index
      %47 = vector.load %arg8[%c0_24, %c0_25] : memref<1x128xf32, #tpu.memory_space<vmem>>, vector<1x128xf32>
      %48 = arith.mulf %34, %46 : vector<1x128xf32>
      %49 = arith.subf %47, %48 : vector<1x128xf32>
      %c0_26 = arith.constant 0 : index
      %c0_27 = arith.constant 0 : index
      %50 = vector.load %arg26[%c0_26, %c0_27] : memref<1x128xf32, #tpu.memory_space<vmem>>, vector<1x128xf32>
      tpu.vector_store %arg26[%c0_26, %c0_27], %46 {strides = array<i32>} : memref<1x128xf32, #tpu.memory_space<vmem>>, vector<1x128xf32>,
      %c0_28 = arith.constant 0 : index
      %c0_29 = arith.constant 0 : index
      %51 = vector.load %arg27[%c0_28, %c0_29] : memref<1x128xf32, #tpu.memory_space<vmem>>, vector<1x128xf32>
      tpu.vector_store %arg27[%c0_28, %c0_29], %49 {strides = array<i32>} : memref<1x128xf32, #tpu.memory_space<vmem>>, vector<1x128xf32>,
    } else {
    }
    %c2_i32_10 = arith.constant 2 : i32
    %21 = arith.cmpi eq, %arg0, %c2_i32_10 : i32
    %22 = arith.extui %21 : i1 to i32
    %c0_i32_11 = arith.constant 0 : i32
    %23 = arith.cmpi ne, %22, %c0_i32_11 : i32
    scf.if %23 {
      %32 = arith.index_cast %arg1 : i32 to index
      %c0 = arith.constant 0 : index
      %c0_16 = arith.constant 0 : index
      %33 = vector.load %arg15[%32, %c0, %c0_16] : memref<2x64x128xf32, #tpu.memory_space<vmem>>, vector<1x64x128xf32>
      %34 = vector.shape_cast %33 : vector<1x64x128xf32> to vector<64x128xf32>
      %c0_17 = arith.constant 0 : index
      %c0_18 = arith.constant 0 : index
      %35 = vector.load %arg26[%c0_17, %c0_18] : memref<1x128xf32, #tpu.memory_space<vmem>>, vector<1x128xf32>
      %36 = vector.broadcast %35 : vector<1x128xf32> to vector<64x128xf32>
      %37 = arith.mulf %34, %36 : vector<64x128xf32>
      %c0_19 = arith.constant 0 : index
      %c0_20 = arith.constant 0 : index
      %38 = vector.load %arg27[%c0_19, %c0_20] : memref<1x128xf32, #tpu.memory_space<vmem>>, vector<1x128xf32>
      %39 = vector.broadcast %38 : vector<1x128xf32> to vector<64x128xf32>
      %40 = arith.addf %37, %39 : vector<64x128xf32>
      %cst = arith.constant 0.000000e+00 : f32
      %41 = vector.broadcast %cst : f32 to vector<64x128xf32>
      %42 = arith.maximumf %40, %41 : vector<64x128xf32>
      %43 = arith.index_cast %arg1 : i32 to index
      %c0_21 = arith.constant 0 : index
      %c0_22 = arith.constant 0 : index
      %44 = vector.load %arg13[%43, %c0_21, %c0_22] : memref<2x64x128xf32, #tpu.memory_space<vmem>>, vector<1x64x128xf32>
      %45 = vector.shape_cast %44 : vector<1x64x128xf32> to vector<64x128xf32>
      %46 = tpu.concatenate %42, %45 in 1 : vector<64x128xf32>, vector<64x128xf32> -> vector<64x256xf32>
      %47 = arith.truncf %46 : vector<64x256xf32> to vector<64x256xbf16>
      %c0_23 = arith.constant 0 : index
      %c0_24 = arith.constant 0 : index
      %48 = vector.load %arg9[%c0_23, %c0_24] : memref<256x256xbf16, #tpu.memory_space<vmem>>, vector<256x256xbf16>
      %cst_25 = arith.constant dense<0.000000e+00> : vector<64x256xf32>
      %49 = tpu.matmul %47, %48, %cst_25 {dimension_numbers = #tpu.dot_dimension_numbers<[1], [0], [0], [1], [0, 0, 1, 1], [], []>} : vector<64x256xbf16>, vector<256x256xbf16>, vector<64x256xf32> -> vector<64x256xf32>
      %50 = arith.index_cast %arg1 : i32 to index
      %c0_26 = arith.constant 0 : index
      %c0_27 = arith.constant 0 : index
      %51 = vector.load %arg16[%50, %c0_26, %c0_27] : memref<2x64x256xf32, #tpu.memory_space<vmem>>, vector<1x64x256xf32>
      %52 = vector.shape_cast %51 : vector<1x64x256xf32> to vector<64x256xf32>
      %53 = vector.shape_cast %49 : vector<64x256xf32> to vector<1x64x256xf32>
      tpu.vector_store %arg16[%50, %c0_26, %c0_27], %53 {strides = array<i32>} : memref<2x64x256xf32, #tpu.memory_space<vmem>>, vector<1x64x256xf32>,
      %c0_28 = arith.constant 0 : index
      %c0_29 = arith.constant 0 : index
      %54 = vector.load %arg22[%c0_28, %c0_29] : memref<1x256xf32, #tpu.memory_space<vmem>>, vector<1x256xf32>
      %cst_30 = arith.constant dense<0.000000e+00> : vector<256xf32>
      %55 = vector.multi_reduction <add>, %49, %cst_30 [0] : vector<64x256xf32> to vector<256xf32>
      %56 = vector.shape_cast %55 : vector<256xf32> to vector<1x256xf32>
      %57 = arith.addf %54, %56 : vector<1x256xf32>
      %c0_31 = arith.constant 0 : index
      %c0_32 = arith.constant 0 : index
      %58 = vector.load %arg22[%c0_31, %c0_32] : memref<1x256xf32, #tpu.memory_space<vmem>>, vector<1x256xf32>
      tpu.vector_store %arg22[%c0_31, %c0_32], %57 {strides = array<i32>} : memref<1x256xf32, #tpu.memory_space<vmem>>, vector<1x256xf32>,
      %c0_33 = arith.constant 0 : index
      %c0_34 = arith.constant 0 : index
      %59 = vector.load %arg23[%c0_33, %c0_34] : memref<1x256xf32, #tpu.memory_space<vmem>>, vector<1x256xf32>
      %60 = arith.mulf %49, %49 : vector<64x256xf32>
      %cst_35 = arith.constant dense<0.000000e+00> : vector<256xf32>
      %61 = vector.multi_reduction <add>, %60, %cst_35 [0] : vector<64x256xf32> to vector<256xf32>
      %62 = vector.shape_cast %61 : vector<256xf32> to vector<1x256xf32>
      %63 = arith.addf %59, %62 : vector<1x256xf32>
      %c0_36 = arith.constant 0 : index
      %c0_37 = arith.constant 0 : index
      %64 = vector.load %arg23[%c0_36, %c0_37] : memref<1x256xf32, #tpu.memory_space<vmem>>, vector<1x256xf32>
      tpu.vector_store %arg23[%c0_36, %c0_37], %63 {strides = array<i32>} : memref<1x256xf32, #tpu.memory_space<vmem>>, vector<1x256xf32>,
    } else {
    }
    %c3_i32 = arith.constant 3 : i32
    %24 = arith.cmpi eq, %arg0, %c3_i32 : i32
    %c0_i32_12 = arith.constant 0 : i32
    %25 = arith.cmpi eq, %arg1, %c0_i32_12 : i32
    %26 = arith.andi %24, %25 : i1
    %27 = arith.extui %26 : i1 to i32
    %c0_i32_13 = arith.constant 0 : i32
    %28 = arith.cmpi ne, %27, %c0_i32_13 : i32
    scf.if %28 {
      %c0 = arith.constant 0 : index
      %c0_16 = arith.constant 0 : index
      %32 = vector.load %arg22[%c0, %c0_16] : memref<1x256xf32, #tpu.memory_space<vmem>>, vector<1x256xf32>
      %cst = arith.constant 7.812500e-03 : f32
      %33 = vector.broadcast %cst : f32 to vector<1x256xf32>
      %34 = arith.mulf %32, %33 : vector<1x256xf32>
      %c0_17 = arith.constant 0 : index
      %c0_18 = arith.constant 0 : index
      %35 = vector.load %arg23[%c0_17, %c0_18] : memref<1x256xf32, #tpu.memory_space<vmem>>, vector<1x256xf32>
      %cst_19 = arith.constant 7.812500e-03 : f32
      %36 = vector.broadcast %cst_19 : f32 to vector<1x256xf32>
      %37 = arith.mulf %35, %36 : vector<1x256xf32>
      %38 = arith.mulf %34, %34 : vector<1x256xf32>
      %39 = arith.subf %37, %38 : vector<1x256xf32>
      %cst_20 = arith.constant 0.000000e+00 : f32
      %40 = vector.broadcast %cst_20 : f32 to vector<1x256xf32>
      %41 = arith.maximumf %39, %40 : vector<1x256xf32>
      %c0_21 = arith.constant 0 : index
      %c0_22 = arith.constant 0 : index
      %42 = vector.load %arg10[%c0_21, %c0_22] : memref<1x256xf32, #tpu.memory_space<vmem>>, vector<1x256xf32>
      %cst_23 = arith.constant 9.99999974E-6 : f32
      %43 = vector.broadcast %cst_23 : f32 to vector<1x256xf32>
      %44 = arith.addf %41, %43 : vector<1x256xf32>
      %45 = math.rsqrt %44 : vector<1x256xf32>
      %46 = arith.mulf %42, %45 : vector<1x256xf32>
      %c0_24 = arith.constant 0 : index
      %c0_25 = arith.constant 0 : index
      %47 = vector.load %arg11[%c0_24, %c0_25] : memref<1x256xf32, #tpu.memory_space<vmem>>, vector<1x256xf32>
      %48 = arith.mulf %34, %46 : vector<1x256xf32>
      %49 = arith.subf %47, %48 : vector<1x256xf32>
      %c0_26 = arith.constant 0 : index
      %c0_27 = arith.constant 0 : index
      %50 = vector.load %arg28[%c0_26, %c0_27] : memref<1x256xf32, #tpu.memory_space<vmem>>, vector<1x256xf32>
      tpu.vector_store %arg28[%c0_26, %c0_27], %46 {strides = array<i32>} : memref<1x256xf32, #tpu.memory_space<vmem>>, vector<1x256xf32>,
      %c0_28 = arith.constant 0 : index
      %c0_29 = arith.constant 0 : index
      %51 = vector.load %arg29[%c0_28, %c0_29] : memref<1x256xf32, #tpu.memory_space<vmem>>, vector<1x256xf32>
      tpu.vector_store %arg29[%c0_28, %c0_29], %49 {strides = array<i32>} : memref<1x256xf32, #tpu.memory_space<vmem>>, vector<1x256xf32>,
    } else {
    }
    %c3_i32_14 = arith.constant 3 : i32
    %29 = arith.cmpi eq, %arg0, %c3_i32_14 : i32
    %30 = arith.extui %29 : i1 to i32
    %c0_i32_15 = arith.constant 0 : i32
    %31 = arith.cmpi ne, %30, %c0_i32_15 : i32
    scf.if %31 {
      %32 = arith.index_cast %arg1 : i32 to index
      %c0 = arith.constant 0 : index
      %c0_16 = arith.constant 0 : index
      %33 = vector.load %arg16[%32, %c0, %c0_16] : memref<2x64x256xf32, #tpu.memory_space<vmem>>, vector<1x64x256xf32>
      %34 = vector.shape_cast %33 : vector<1x64x256xf32> to vector<64x256xf32>
      %c0_17 = arith.constant 0 : index
      %c0_18 = arith.constant 0 : index
      %35 = vector.load %arg28[%c0_17, %c0_18] : memref<1x256xf32, #tpu.memory_space<vmem>>, vector<1x256xf32>
      %36 = vector.broadcast %35 : vector<1x256xf32> to vector<64x256xf32>
      %37 = arith.mulf %34, %36 : vector<64x256xf32>
      %c0_19 = arith.constant 0 : index
      %c0_20 = arith.constant 0 : index
      %38 = vector.load %arg29[%c0_19, %c0_20] : memref<1x256xf32, #tpu.memory_space<vmem>>, vector<1x256xf32>
      %39 = vector.broadcast %38 : vector<1x256xf32> to vector<64x256xf32>
      %40 = arith.addf %37, %39 : vector<64x256xf32>
      %41 = vector.extract_strided_slice %40 {offsets = [0, 0], sizes = [64, 128], strides = [1, 1]} : vector<64x256xf32> to vector<64x128xf32>
      %42 = vector.extract_strided_slice %40 {offsets = [0, 128], sizes = [64, 128], strides = [1, 1]} : vector<64x256xf32> to vector<64x128xf32>
      %43 = arith.addf %41, %42 : vector<64x128xf32>
      %cst = arith.constant 0.000000e+00 : f32
      %44 = vector.broadcast %cst : f32 to vector<64x128xf32>
      %45 = arith.maximumf %43, %44 : vector<64x128xf32>
      %46 = vector.shape_cast %45 : vector<64x128xf32> to vector<8x8x128xf32>
      %c0_21 = arith.constant 0 : index
      %c0_22 = arith.constant 0 : index
      %c0_23 = arith.constant 0 : index
      %c0_24 = arith.constant 0 : index
      %47 = vector.load %arg12[%c0_21, %c0_22, %c0_23, %c0_24] : memref<1x8x8x128xf32, #tpu.memory_space<vmem>>, vector<1x8x8x128xf32>
      %48 = vector.shape_cast %47 : vector<1x8x8x128xf32> to vector<8x8x128xf32>
      %49 = vector.shape_cast %46 : vector<8x8x128xf32> to vector<1x8x8x128xf32>
      tpu.vector_store %arg12[%c0_21, %c0_22, %c0_23, %c0_24], %49 {strides = array<i32>} : memref<1x8x8x128xf32, #tpu.memory_space<vmem>>, vector<1x8x8x128xf32>,
    } else {
    }
    return
  }
  func.func @transform_0(%arg0: i32, %arg1: i32) -> (i32, i32, i32, i32) {
    %c0_i32 = arith.constant 0 : i32
    %0 = arith.cmpi eq, %arg0, %c0_i32 : i32
    %c0_i32_0 = arith.constant 0 : i32
    %1 = arith.select %0, %arg1, %c0_i32_0 : i32
    %c0_i32_1 = arith.constant 0 : i32
    %c0_i32_2 = arith.constant 0 : i32
    %c0_i32_3 = arith.constant 0 : i32
    %c0_i32_4 = arith.constant 0 : i32
    return %1, %c0_i32_1, %c0_i32_2, %c0_i32_3 : i32, i32, i32, i32
  }
  func.func @transform_1(%arg0: i32, %arg1: i32) -> (i32, i32) {
    %c0_i32 = arith.constant 0 : i32
    %c0_i32_0 = arith.constant 0 : i32
    %c0_i32_1 = arith.constant 0 : i32
    return %c0_i32, %c0_i32_0 : i32, i32
  }
  func.func @transform_2(%arg0: i32, %arg1: i32) -> (i32, i32) {
    %c0_i32 = arith.constant 0 : i32
    %c0_i32_0 = arith.constant 0 : i32
    %c0_i32_1 = arith.constant 0 : i32
    return %c0_i32, %c0_i32_0 : i32, i32
  }
  func.func @transform_3(%arg0: i32, %arg1: i32) -> (i32, i32) {
    %c0_i32 = arith.constant 0 : i32
    %c0_i32_0 = arith.constant 0 : i32
    %c0_i32_1 = arith.constant 0 : i32
    return %c0_i32, %c0_i32_0 : i32, i32
  }
  func.func @transform_4(%arg0: i32, %arg1: i32) -> (i32, i32) {
    %c0_i32 = arith.constant 0 : i32
    %c0_i32_0 = arith.constant 0 : i32
    %c0_i32_1 = arith.constant 0 : i32
    return %c0_i32, %c0_i32_0 : i32, i32
  }
  func.func @transform_5(%arg0: i32, %arg1: i32) -> (i32, i32) {
    %c0_i32 = arith.constant 0 : i32
    %c0_i32_0 = arith.constant 0 : i32
    %c0_i32_1 = arith.constant 0 : i32
    return %c0_i32, %c0_i32_0 : i32, i32
  }
  func.func @transform_6(%arg0: i32, %arg1: i32) -> (i32, i32) {
    %c0_i32 = arith.constant 0 : i32
    %c0_i32_0 = arith.constant 0 : i32
    %c0_i32_1 = arith.constant 0 : i32
    return %c0_i32, %c0_i32_0 : i32, i32
  }
  func.func @transform_7(%arg0: i32, %arg1: i32) -> (i32, i32) {
    %c0_i32 = arith.constant 0 : i32
    %c0_i32_0 = arith.constant 0 : i32
    %c0_i32_1 = arith.constant 0 : i32
    return %c0_i32, %c0_i32_0 : i32, i32
  }
  func.func @transform_8(%arg0: i32, %arg1: i32) -> (i32, i32) {
    %c0_i32 = arith.constant 0 : i32
    %c0_i32_0 = arith.constant 0 : i32
    %c0_i32_1 = arith.constant 0 : i32
    return %c0_i32, %c0_i32_0 : i32, i32
  }
  func.func @transform_9(%arg0: i32, %arg1: i32) -> (i32, i32) {
    %c0_i32 = arith.constant 0 : i32
    %c0_i32_0 = arith.constant 0 : i32
    %c0_i32_1 = arith.constant 0 : i32
    return %c0_i32, %c0_i32_0 : i32, i32
  }
  func.func @transform_10(%arg0: i32, %arg1: i32) -> (i32, i32, i32, i32) {
    %c3_i32 = arith.constant 3 : i32
    %0 = arith.cmpi eq, %arg0, %c3_i32 : i32
    %c0_i32 = arith.constant 0 : i32
    %1 = arith.select %0, %arg1, %c0_i32 : i32
    %c0_i32_0 = arith.constant 0 : i32
    %c0_i32_1 = arith.constant 0 : i32
    %c0_i32_2 = arith.constant 0 : i32
    %c0_i32_3 = arith.constant 0 : i32
    return %1, %c0_i32_0, %c0_i32_1, %c0_i32_2 : i32, i32, i32, i32
  }
}

</mosaic_0001>

<llo_original>
// kernel: bottleneck_forward.1
$region0: #{bottleneck_forward.1}
  #allocation0 [shape = 'u32[]', space=smem, size = 0x4, offset = 0x4, fixed_abs, tag = 'smem constant byte address 0x4 - core index']
  #allocation1 [shape = 'u32[144,128]{1,0:T(1,128)}', space=vmem, size = 0x12000, scoped, tag = 'internal scratch']
  #allocation2 [shape = 'f32[2,64,128]{2,1,0:T(8,128)}', space=vmem, size = 0x10000, scoped, tag = 'scratch operand']
  #allocation3 [shape = 'f32[2,64,128]{2,1,0:T(8,128)}', space=vmem, size = 0x10000, scoped, tag = 'scratch operand']
  #allocation4 [shape = 'f32[2,64,128]{2,1,0:T(8,128)}', space=vmem, size = 0x10000, scoped, tag = 'scratch operand']
  #allocation5 [shape = 'f32[2,64,256]{2,1,0:T(8,128)}', space=vmem, size = 0x20000, scoped, tag = 'scratch operand']
  #allocation6 [shape = 'f32[10,10,128]{2,1,0:T(8,128)}', space=vmem, size = 0x14000, scoped, tag = 'scratch operand']
  #allocation7 [shape = 'f32[1,128]{1,0:T(1,128)}', space=vmem, size = 0x200, scoped, tag = 'scratch operand']
  #allocation8 [shape = 'f32[1,128]{1,0:T(1,128)}', space=vmem, size = 0x200, scoped, tag = 'scratch operand']
  #allocation9 [shape = 'f32[1,128]{1,0:T(1,128)}', space=vmem, size = 0x200, scoped, tag = 'scratch operand']
  #allocation10 [shape = 'f32[1,128]{1,0:T(1,128)}', space=vmem, size = 0x200, scoped, tag = 'scratch operand']
  #allocation11 [shape = 'f32[1,256]{1,0:T(1,128)}', space=vmem, size = 0x400, scoped, tag = 'scratch operand']
  #allocation12 [shape = 'f32[1,256]{1,0:T(1,128)}', space=vmem, size = 0x400, scoped, tag = 'scratch operand']
  #allocation13 [shape = 'f32[1,128]{1,0:T(1,128)}', space=vmem, size = 0x200, scoped, tag = 'scratch operand']
  #allocation14 [shape = 'f32[1,128]{1,0:T(1,128)}', space=vmem, size = 0x200, scoped, tag = 'scratch operand']
  #allocation15 [shape = 'f32[1,128]{1,0:T(1,128)}', space=vmem, size = 0x200, scoped, tag = 'scratch operand']
  #allocation16 [shape = 'f32[1,128]{1,0:T(1,128)}', space=vmem, size = 0x200, scoped, tag = 'scratch operand']
  #allocation17 [shape = 'f32[1,256]{1,0:T(1,128)}', space=vmem, size = 0x400, scoped, tag = 'scratch operand']
  #allocation18 [shape = 'f32[1,256]{1,0:T(1,128)}', space=vmem, size = 0x400, scoped, tag = 'scratch operand']
  %s0 = inlined_call_operand.vmem [shape: f32[2,8,8,128], index: 0, kind: input, shape index: {}]
  %s1 = inlined_call_operand.vmem [shape: bf16[128,128], index: 1, kind: input, shape index: {}]
  %s2 = inlined_call_operand.vmem [shape: f32[1,128], index: 2, kind: input, shape index: {}]
  %s3 = inlined_call_operand.vmem [shape: f32[1,128], index: 3, kind: input, shape index: {}]
  %s4 = inlined_call_operand.vmem [shape: bf16[1152,128], index: 4, kind: input, shape index: {}]
  %s5 = inlined_call_operand.vmem [shape: f32[1,128], index: 5, kind: input, shape index: {}]
  %s6 = inlined_call_operand.vmem [shape: f32[1,128], index: 6, kind: input, shape index: {}]
  %s7 = inlined_call_operand.vmem [shape: bf16[256,256], index: 7, kind: input, shape index: {}]
  %s8 = inlined_call_operand.vmem [shape: f32[1,256], index: 8, kind: input, shape index: {}]
  %s9 = inlined_call_operand.vmem [shape: f32[1,256], index: 9, kind: input, shape index: {}]
  %s10 = inlined_call_operand.vmem [shape: f32[2,8,8,128], index: 10, kind: output, shape index: {}]
  %s11 = sld [smem:[#allocation0]]
  $region105: #{bottleneck_forward.1} parent=0
    _
  %s13 = ssub.s32 1, %s11
  %s14 = scalar_select 0, %s13, %s11
  loop: start=0, step=1, limit=10
  $region2: #{bottleneck_forward.1} parent=0 // loop_pre_header
    _
  $region3: #{bottleneck_forward.1} parent=0 // loop_header
    %s16 = sphi 0, %s20
    %p17 = scmp.ge.s32.totalorder %s16, 10
    %s23 = sphi 0, %s35
    %s24 = sphi 0, %s31
    %s25 = sphi 0, %s23
    %s26 = sphi 0, %s24
    %s27 = sphi 0, %s25
    %s28 = sphi 0, %s26
    %s42 = sphi 0, %s44
    %s45 = sphi 0, %s42
    %s46 = sphi 0, %s45
    %s62 = sphi 0, %s46
    %s66 = sphi 0, %s66
    %s68 = sphi 0, %s66
    %s69 = sphi 0, %s68
    %s83 = sphi 0, %s69
    %s87 = sphi 0, %s87
    %s89 = sphi 0, %s87
    %s90 = sphi 0, %s89
    %s104 = sphi 0, %s90
    %s108 = sphi 0, %s108
    %s110 = sphi 0, %s108
    %s111 = sphi 0, %s110
    %s125 = sphi 0, %s111
    %s129 = sphi 0, %s129
    %s131 = sphi 0, %s129
    %s132 = sphi 0, %s131
    %s146 = sphi 0, %s132
    %s150 = sphi 0, %s150
    %s152 = sphi 0, %s150
    %s153 = sphi 0, %s152
    %s167 = sphi 0, %s153
    %s171 = sphi 0, %s171
    %s173 = sphi 0, %s171
    %s174 = sphi 0, %s173
    %s188 = sphi 0, %s174
    %s192 = sphi 0, %s192
    %s194 = sphi 0, %s192
    %s195 = sphi 0, %s194
    %s209 = sphi 0, %s195
    %s213 = sphi 0, %s213
    %s215 = sphi 0, %s213
    %s216 = sphi 0, %s215
    %s230 = sphi 0, %s216
    %s234 = sphi 0, %s234
    %s236 = sphi 0, %s234
    %s237 = sphi 0, %s236
    %s251 = sphi 0, %s237
    %s261 = sphi 0, %s263
    %s264 = sphi 0, %s261
    %s265 = sphi 0, %s264
    %s281 = sphi 0, %s265
  $region4: #{bottleneck_forward.1} parent=0 // loop_header_branch
    %19 = sbr.rel (%p17) target = $region8
  $region5: #{bottleneck_forward.1} parent=0 // loop_body
    %s21 = ssub.s32 %s16, 1
    %s22 = ssub.s32 %s16, 2
    %s29 = sadd.s32 1, %s24
    %p30 = scmp.ge.s32.totalorder %s29, 2
    %s31 = scalar_select %p30, 0, %s29
    %s32 = sadd.s32 1, %s23
    %s33 = scalar_select %p30, %s32, %s23
    %p34 = scmp.ge.s32.totalorder %s33, 4
    %s35 = scalar_select %p34, 0, %s33
    %p36 = scmp.eq.s32.totalorder %s23, 0
    %s37 = scalar_select %p36, %s24, 0
    %p38 = scmp.eq.s32.totalorder %s35, 0
    %s39 = scalar_select %p38, %s31, 0
    %s40 = ssub.s32 %s37, %s39
    %p41 = scmp.eq.s32.totalorder %s40, 0
    %s43 = sadd.s32 %s42, 1
    %s44 = scalar_select %p41, %s42, %s43
    %p47 = pneg %p41
    %p48 = scmp.eq.s32.totalorder %s16, 7
    %p49 = por %p47, %p48
    %p50 = scmp.ne.s32.totalorder %s42, %s45
    %p51 = scmp.eq.s32.totalorder %s16, 0
    %p52 = por %p50, %p51
    %p53 = scmp.ne.s32.totalorder %s42, %s45
    %p54 = scmp.eq.s32.totalorder %s21, 7
    %p55 = por %p53, %p54
    %p56 = scmp.ne.s32.totalorder %s45, %s46
    %p57 = scmp.eq.s32.totalorder %s21, 0
    %p58 = por %p56, %p57
    %p59 = scmp.ne.s32.totalorder %s45, %s46
    %p60 = scmp.eq.s32.totalorder %s22, 7
    %p61 = por %p59, %p60
    %p63 = scmp.ne.s32.totalorder %s46, %s62
    %p64 = scmp.eq.s32.totalorder %s22, 0
    %p65 = por %p63, %p64
    %s67 = sadd.s32 %s66, 1
    %p70 = scmp.eq.s32.totalorder %s16, 7
    %p71 = scmp.ne.s32.totalorder %s66, %s68
    %p72 = scmp.eq.s32.totalorder %s16, 0
    %p73 = por %p71, %p72
    %p74 = scmp.ne.s32.totalorder %s66, %s68
    %p75 = scmp.eq.s32.totalorder %s21, 7
    %p76 = por %p74, %p75
    %p77 = scmp.ne.s32.totalorder %s68, %s69
    %p78 = scmp.eq.s32.totalorder %s21, 0
    %p79 = por %p77, %p78
    %p80 = scmp.ne.s32.totalorder %s68, %s69
    %p81 = scmp.eq.s32.totalorder %s22, 7
    %p82 = por %p80, %p81
    %p84 = scmp.ne.s32.totalorder %s69, %s83
    %p85 = scmp.eq.s32.totalorder %s22, 0
    %p86 = por %p84, %p85
    %s88 = sadd.s32 %s87, 1
    %p91 = scmp.eq.s32.totalorder %s16, 7
    %p92 = scmp.ne.s32.totalorder %s87, %s89
    %p93 = scmp.eq.s32.totalorder %s16, 0
    %p94 = por %p92, %p93
    %p95 = scmp.ne.s32.totalorder %s87, %s89
    %p96 = scmp.eq.s32.totalorder %s21, 7
    %p97 = por %p95, %p96
    %p98 = scmp.ne.s32.totalorder %s89, %s90
    %p99 = scmp.eq.s32.totalorder %s21, 0
    %p100 = por %p98, %p99
    %p101 = scmp.ne.s32.totalorder %s89, %s90
    %p102 = scmp.eq.s32.totalorder %s22, 7
    %p103 = por %p101, %p102
    %p105 = scmp.ne.s32.totalorder %s90, %s104
    %p106 = scmp.eq.s32.totalorder %s22, 0
    %p107 = por %p105, %p106
    %s109 = sadd.s32 %s108, 1
    %p112 = scmp.eq.s32.totalorder %s16, 7
    %p113 = scmp.ne.s32.totalorder %s108, %s110
    %p114 = scmp.eq.s32.totalorder %s16, 0
    %p115 = por %p113, %p114
    %p116 = scmp.ne.s32.totalorder %s108, %s110
    %p117 = scmp.eq.s32.totalorder %s21, 7
    %p118 = por %p116, %p117
    %p119 = scmp.ne.s32.totalorder %s110, %s111
    %p120 = scmp.eq.s32.totalorder %s21, 0
    %p121 = por %p119, %p120
    %p122 = scmp.ne.s32.totalorder %s110, %s111
    %p123 = scmp.eq.s32.totalorder %s22, 7
    %p124 = por %p122, %p123
    %p126 = scmp.ne.s32.totalorder %s111, %s125
    %p127 = scmp.eq.s32.totalorder %s22, 0
    %p128 = por %p126, %p127
    %s130 = sadd.s32 %s129, 1
    %p133 = scmp.eq.s32.totalorder %s16, 7
    %p134 = scmp.ne.s32.totalorder %s129, %s131
    %p135 = scmp.eq.s32.totalorder %s16, 0
    %p136 = por %p134, %p135
    %p137 = scmp.ne.s32.totalorder %s129, %s131
    %p138 = scmp.eq.s32.totalorder %s21, 7
    %p139 = por %p137, %p138
    %p140 = scmp.ne.s32.totalorder %s131, %s132
    %p141 = scmp.eq.s32.totalorder %s21, 0
    %p142 = por %p140, %p141
    %p143 = scmp.ne.s32.totalorder %s131, %s132
    %p144 = scmp.eq.s32.totalorder %s22, 7
    %p145 = por %p143, %p144
    %p147 = scmp.ne.s32.totalorder %s132, %s146
    %p148 = scmp.eq.s32.totalorder %s22, 0
    %p149 = por %p147, %p148
    %s151 = sadd.s32 %s150, 1
    %p154 = scmp.eq.s32.totalorder %s16, 7
    %p155 = scmp.ne.s32.totalorder %s150, %s152
    %p156 = scmp.eq.s32.totalorder %s16, 0
    %p157 = por %p155, %p156
    %p158 = scmp.ne.s32.totalorder %s150, %s152
    %p159 = scmp.eq.s32.totalorder %s21, 7
    %p160 = por %p158, %p159
    %p161 = scmp.ne.s32.totalorder %s152, %s153
    %p162 = scmp.eq.s32.totalorder %s21, 0
    %p163 = por %p161, %p162
    %p164 = scmp.ne.s32.totalorder %s152, %s153
    %p165 = scmp.eq.s32.totalorder %s22, 7
    %p166 = por %p164, %p165
    %p168 = scmp.ne.s32.totalorder %s153, %s167
    %p169 = scmp.eq.s32.totalorder %s22, 0
    %p170 = por %p168, %p169
    %s172 = sadd.s32 %s171, 1
    %p175 = scmp.eq.s32.totalorder %s16, 7
    %p176 = scmp.ne.s32.totalorder %s171, %s173
    %p177 = scmp.eq.s32.totalorder %s16, 0
    %p178 = por %p176, %p177
    %p179 = scmp.ne.s32.totalorder %s171, %s173
    %p180 = scmp.eq.s32.totalorder %s21, 7
    %p181 = por %p179, %p180
    %p182 = scmp.ne.s32.totalorder %s173, %s174
    %p183 = scmp.eq.s32.totalorder %s21, 0
    %p184 = por %p182, %p183
    %p185 = scmp.ne.s32.totalorder %s173, %s174
    %p186 = scmp.eq.s32.totalorder %s22, 7
    %p187 = por %p185, %p186
    %p189 = scmp.ne.s32.totalorder %s174, %s188
    %p190 = scmp.eq.s32.totalorder %s22, 0
    %p191 = por %p189, %p190
    %s193 = sadd.s32 %s192, 1
    %p196 = scmp.eq.s32.totalorder %s16, 7
    %p197 = scmp.ne.s32.totalorder %s192, %s194
    %p198 = scmp.eq.s32.totalorder %s16, 0
    %p199 = por %p197, %p198
    %p200 = scmp.ne.s32.totalorder %s192, %s194
    %p201 = scmp.eq.s32.totalorder %s21, 7
    %p202 = por %p200, %p201
    %p203 = scmp.ne.s32.totalorder %s194, %s195
    %p204 = scmp.eq.s32.totalorder %s21, 0
    %p205 = por %p203, %p204
    %p206 = scmp.ne.s32.totalorder %s194, %s195
    %p207 = scmp.eq.s32.totalorder %s22, 7
    %p208 = por %p206, %p207
    %p210 = scmp.ne.s32.totalorder %s195, %s209
    %p211 = scmp.eq.s32.totalorder %s22, 0
    %p212 = por %p210, %p211
    %s214 = sadd.s32 %s213, 1
    %p217 = scmp.eq.s32.totalorder %s16, 7
    %p218 = scmp.ne.s32.totalorder %s213, %s215
    %p219 = scmp.eq.s32.totalorder %s16, 0
    %p220 = por %p218, %p219
    %p221 = scmp.ne.s32.totalorder %s213, %s215
    %p222 = scmp.eq.s32.totalorder %s21, 7
    %p223 = por %p221, %p222
    %p224 = scmp.ne.s32.totalorder %s215, %s216
    %p225 = scmp.eq.s32.totalorder %s21, 0
    %p226 = por %p224, %p225
    %p227 = scmp.ne.s32.totalorder %s215, %s216
    %p228 = scmp.eq.s32.totalorder %s22, 7
    %p229 = por %p227, %p228
    %p231 = scmp.ne.s32.totalorder %s216, %s230
    %p232 = scmp.eq.s32.totalorder %s22, 0
    %p233 = por %p231, %p232
    %s235 = sadd.s32 %s234, 1
    %p238 = scmp.eq.s32.totalorder %s16, 7
    %p239 = scmp.ne.s32.totalorder %s234, %s236
    %p240 = scmp.eq.s32.totalorder %s16, 0
    %p241 = por %p239, %p240
    %p242 = scmp.ne.s32.totalorder %s234, %s236
    %p243 = scmp.eq.s32.totalorder %s21, 7
    %p244 = por %p242, %p243
    %p245 = scmp.ne.s32.totalorder %s236, %s237
    %p246 = scmp.eq.s32.totalorder %s21, 0
    %p247 = por %p245, %p246
    %p248 = scmp.ne.s32.totalorder %s236, %s237
    %p249 = scmp.eq.s32.totalorder %s22, 7
    %p250 = por %p248, %p249
    %p252 = scmp.ne.s32.totalorder %s237, %s251
    %p253 = scmp.eq.s32.totalorder %s22, 0
    %p254 = por %p252, %p253
    %p255 = scmp.eq.s32.totalorder %s23, 3
    %s256 = scalar_select %p255, %s24, 0
    %p257 = scmp.eq.s32.totalorder %s35, 3
    %s258 = scalar_select %p257, %s31, 0
    %s259 = ssub.s32 %s256, %s258
    %p260 = scmp.eq.s32.totalorder %s259, 0
    %s262 = sadd.s32 %s261, 1
    %s263 = scalar_select %p260, %s261, %s262
    %p266 = pneg %p260
    %p267 = scmp.eq.s32.totalorder %s16, 7
    %p268 = por %p266, %p267
    %p269 = scmp.ne.s32.totalorder %s261, %s264
    %p270 = scmp.eq.s32.totalorder %s16, 0
    %p271 = por %p269, %p270
    %p272 = scmp.ne.s32.totalorder %s261, %s264
    %p273 = scmp.eq.s32.totalorder %s21, 7
    %p274 = por %p272, %p273
    %p275 = scmp.ne.s32.totalorder %s264, %s265
    %p276 = scmp.eq.s32.totalorder %s21, 0
    %p277 = por %p275, %p276
    %p278 = scmp.ne.s32.totalorder %s264, %s265
    %p279 = scmp.eq.s32.totalorder %s22, 7
    %p280 = por %p278, %p279
    %p282 = scmp.ne.s32.totalorder %s265, %s281
    %p283 = scmp.eq.s32.totalorder %s22, 0
    %p284 = por %p282, %p283
    %p285 = scmp.le.s32.totalorder 1, %s16
    %p286 = scmp.lt.s32.totalorder %s16, 9
    %p287 = pnand %p285, %p286
    %p288 = pneg %p287
    // Predicated region
    $region9: #{bottleneck_forward.1} parent=5 // pred_check
      _
    $region10: #{bottleneck_forward.1} parent=5 // pred_check_branch
      %290 = sbr.rel (%p287) target = $region12
    $region11: #{bottleneck_forward.1} parent=5 // pred_region
      %s291 = ssub.s32 %s16, 1
      // Predicated region
      $region13: #{bottleneck_forward.1} parent=11 // pred_check
        %p292 = pneg %p79
      $region14: #{bottleneck_forward.1} parent=11 // pred_check_branch
        %294 = sbr.rel (%p292) target = $region16
      $region15: #{bottleneck_forward.1} parent=11 // pred_region
        _
      $region16: #{bottleneck_forward.1} parent=11 // pred_fallthru
        _
      // Predicated region
      $region17: #{bottleneck_forward.1} parent=11 // pred_check
        %p295 = pneg %p100
      $region18: #{bottleneck_forward.1} parent=11 // pred_check_branch
        %297 = sbr.rel (%p295) target = $region20
      $region19: #{bottleneck_forward.1} parent=11 // pred_region
        _
      $region20: #{bottleneck_forward.1} parent=11 // pred_fallthru
        _
      // Predicated region
      $region21: #{bottleneck_forward.1} parent=11 // pred_check
        %p298 = pneg %p121
      $region22: #{bottleneck_forward.1} parent=11 // pred_check_branch
        %300 = sbr.rel (%p298) target = $region24
      $region23: #{bottleneck_forward.1} parent=11 // pred_region
        _
      $region24: #{bottleneck_forward.1} parent=11 // pred_fallthru
        _
      // Predicated region
      $region25: #{bottleneck_forward.1} parent=11 // pred_check
        %p301 = pneg %p142
      $region26: #{bottleneck_forward.1} parent=11 // pred_check_branch
        %303 = sbr.rel (%p301) target = $region28
      $region27: #{bottleneck_forward.1} parent=11 // pred_region
        _
      $region28: #{bottleneck_forward.1} parent=11 // pred_fallthru
        _
      // Predicated region
      $region29: #{bottleneck_forward.1} parent=11 // pred_check
        %p304 = pneg %p163
      $region30: #{bottleneck_forward.1} parent=11 // pred_check_branch
        %306 = sbr.rel (%p304) target = $region32
      $region31: #{bottleneck_forward.1} parent=11 // pred_region
        _
      $region32: #{bottleneck_forward.1} parent=11 // pred_fallthru
        _
      // Predicated region
      $region33: #{bottleneck_forward.1} parent=11 // pred_check
        %p307 = pneg %p184
      $region34: #{bottleneck_forward.1} parent=11 // pred_check_branch
        %309 = sbr.rel (%p307) target = $region36
      $region35: #{bottleneck_forward.1} parent=11 // pred_region
        _
      $region36: #{bottleneck_forward.1} parent=11 // pred_fallthru
        _
      // Predicated region
      $region37: #{bottleneck_forward.1} parent=11 // pred_check
        %p310 = pneg %p205
      $region38: #{bottleneck_forward.1} parent=11 // pred_check_branch
        %312 = sbr.rel (%p310) target = $region40
      $region39: #{bottleneck_forward.1} parent=11 // pred_region
        _
      $region40: #{bottleneck_forward.1} parent=11 // pred_fallthru
        _
      // Predicated region
      $region41: #{bottleneck_forward.1} parent=11 // pred_check
        %p313 = pneg %p226
      $region42: #{bottleneck_forward.1} parent=11 // pred_check_branch
        %315 = sbr.rel (%p313) target = $region44
      $region43: #{bottleneck_forward.1} parent=11 // pred_region
        _
      $region44: #{bottleneck_forward.1} parent=11 // pred_fallthru
        _
      // Predicated region
      $region45: #{bottleneck_forward.1} parent=11 // pred_check
        %p316 = pneg %p247
      $region46: #{bottleneck_forward.1} parent=11 // pred_check_branch
        %318 = sbr.rel (%p316) target = $region48
      $region47: #{bottleneck_forward.1} parent=11 // pred_region
        _
      $region48: #{bottleneck_forward.1} parent=11 // pred_fallthru
        _
    $region12: #{bottleneck_forward.1} parent=5 // pred_fallthru
      _
    %p319 = scmp.lt.s32.totalorder %s16, 8
    // Predicated region
    $region49: #{bottleneck_forward.1} parent=5 // pred_check
      %p320 = pneg %p319
    $region50: #{bottleneck_forward.1} parent=5 // pred_check_branch
      %322 = sbr.rel (%p320) target = $region52
    $region51: #{bottleneck_forward.1} parent=5 // pred_region
      // Predicated region
      $region53: #{bottleneck_forward.1} parent=51 // pred_check
        %p323 = pneg %p52
      $region54: #{bottleneck_forward.1} parent=51 // pred_check_branch
        %325 = sbr.rel (%p323) target = $region56
      $region55: #{bottleneck_forward.1} parent=51 // pred_region
        %p326 = scmp.eq.s32.totalorder %s23, 0
        %s327 = scalar_select %p326, %s24, 0
        %p328 = scmp.lt.s32.totalorder %s327, 1
        %s329 = scalar_select %p328, %s327, 1
        %s330 = smul.addr %s329, 8
        %s331 = smul.addr %s330, 8
        %s332 = scalar_lea.vmem %s0, %s331
        %p333 = scmp.eq.s32.totalorder %s23, 0
        %s334 = scalar_select %p333, %s24, 0
      $region56: #{bottleneck_forward.1} parent=51 // pred_fallthru
        _
    $region52: #{bottleneck_forward.1} parent=5 // pred_fallthru
      _
    %p335 = scmp.le.s32.totalorder 1, %s16
    %p336 = scmp.lt.s32.totalorder %s16, 9
    %p337 = pnand %p335, %p336
    %p338 = pneg %p337
    // Predicated region
    $region57: #{bottleneck_forward.1} parent=5 // pred_check
      _
    $region58: #{bottleneck_forward.1} parent=5 // pred_check_branch
      %340 = sbr.rel (%p337) target = $region60
    $region59: #{bottleneck_forward.1} parent=5 // pred_region
      %s341 = ssub.s32 %s16, 1
      %p342 = scmp.eq.s32.totalorder %s25, 0
      %s343 = scalar_select %p342, %s26, 0
      %p344 = scmp.lt.s32.totalorder %s343, 1
      %s345 = scalar_select %p344, %s343, 1
      %s346 = smul.addr %s345, 8
      %s347 = smul.addr %s346, 8
      %s348 = scalar_lea.vmem %s0, %s347
      %p349 = pneg %p58
      %p350 = pneg %p55
      %p351 = pneg %p79
      %p352 = pneg %p76
      %p353 = pneg %p100
      %p354 = pneg %p97
      %p355 = pneg %p121
      %p356 = pneg %p118
      %p357 = pneg %p142
      %p358 = pneg %p139
      %p359 = pneg %p163
      %p360 = pneg %p160
      %p361 = pneg %p184
      %p362 = pneg %p181
      %p363 = pneg %p205
      %p364 = pneg %p202
      %p365 = pneg %p226
      %p366 = pneg %p223
      %p367 = pneg %p247
      %p368 = pneg %p244
      %p369 = pneg %p277
      %p370 = pneg %p274
      %p371 = scmp.eq.s32.totalorder %s25, 3
      %s372 = scalar_select %p371, %s26, 0
      %p373 = scmp.lt.s32.totalorder %s372, 1
      %s374 = scalar_select %p373, %s372, 1
      %s375 = smul.addr %s374, 8
      %s376 = smul.addr %s375, 8
      %s377 = scalar_lea.vmem %s10, %s376
      %p378 = scmp.eq.s32.totalorder %s25, 0
      %s379 = scalar_select %p378, %s26, 0
      %p380 = scmp.lt.s32.totalorder %s379, 1
      %s381 = scalar_select %p380, %s379, 1
      %s382 = smul.addr %s381, 8
      %s383 = smul.addr %s382, 8
      %s384 = scalar_lea.vmem %s0, %s383
      %p385 = scmp.eq.s32.totalorder %s25, 0
      %s386 = scalar_select %p385, %s26, 0
      %p387 = scmp.eq.s32.totalorder %s25, 3
      %s388 = scalar_select %p387, %s26, 0
      %p389 = scmp.lt.s32.totalorder %s388, 1
      %s390 = scalar_select %p389, %s388, 1
      %s391 = smul.addr %s390, 8
      %s392 = smul.addr %s391, 8
      %s393 = scalar_lea.vmem %s10, %s392
      %p394 = scmp.eq.s32.totalorder %s25, 3
      %s395 = scalar_select %p394, %s26, 0
      %p397 = scmp.eq.s32.totalorder %s25, 0
      %p398 = scmp.eq.s32.totalorder %s26, 0
      %p399 = pnand %p397, %p398
      %p400 = pneg %p399
      // Predicated region
      $region61: #{bottleneck_forward.1} parent=59 // pred_check
        _
      $region62: #{bottleneck_forward.1} parent=59 // pred_check_branch
        %402 = sbr.rel (%p399) target = $region64
      $region63: #{bottleneck_forward.1} parent=59 // pred_region
        %403 = vst [vmem:[#allocation7] sm:$0x1] 0.0
        %404 = vst [vmem:[#allocation8] sm:$0x1] 0.0
        %405 = vst [vmem:[#allocation9] sm:$0x1] 0.0
        %406 = vst [vmem:[#allocation10] sm:$0x1] 0.0
        %v407 = vlaneseq
        %vm408 = vcmp.ge.s32.totalorder %v407, 0
        %vm409 = vcmp.lt.s32.totalorder %v407, 256
        %vm410 = vmand %vm408, %vm409
        %411 = vst.msk [vmem:[#allocation11] sm:$0x3] %vm410, 0.0
        %412 = vst.msk [vmem:[#allocation12] sm:$0x3] %vm410, 0.0
      $region64: #{bottleneck_forward.1} parent=59 // pred_fallthru
        _
      // Predicated region
      $region65: #{bottleneck_forward.1} parent=59 // pred_check
        %p413 = pneg %p397
      $region66: #{bottleneck_forward.1} parent=59 // pred_check_branch
        %415 = sbr.rel (%p413) target = $region68
      $region67: #{bottleneck_forward.1} parent=59 // pred_region
        %v416 = vld [vmem:[%s384] sm:$0xff]
        %v417 = vld [vmem:[%s384 + $0x8] sm:$0xff]
        %v418 = vld [vmem:[%s384 + $0x10] sm:$0xff]
        %v419 = vld [vmem:[%s384 + $0x18] sm:$0xff]
        %v420 = vld [vmem:[%s384 + $0x20] sm:$0xff]
        %v421 = vld [vmem:[%s384 + $0x28] sm:$0xff]
        %v422 = vld [vmem:[%s384 + $0x30] sm:$0xff]
        %v423 = vld [vmem:[%s384 + $0x38] sm:$0xff]
        %s424 = smul.u32 %s26, 64
        %s425 = scalar_lea.vmem [#allocation2], %s424
        %426 = vst [vmem:[%s425] sm:$0xff] %v416
        %427 = vst [vmem:[%s425 + $0x8] sm:$0xff] %v417
        %428 = vst [vmem:[%s425 + $0x10] sm:$0xff] %v418
        %429 = vst [vmem:[%s425 + $0x18] sm:$0xff] %v419
        %430 = vst [vmem:[%s425 + $0x20] sm:$0xff] %v420
        %431 = vst [vmem:[%s425 + $0x28] sm:$0xff] %v421
        %432 = vst [vmem:[%s425 + $0x30] sm:$0xff] %v422
        %433 = vst [vmem:[%s425 + $0x38] sm:$0xff] %v423
        %v434 = vpack.c.bf16 %v417, %v416
        %v435 = vpack.c.bf16 %v419, %v418
        %v436 = vpack.c.bf16 %v421, %v420
        %v437 = vpack.c.bf16 %v423, %v422
        %v438 = vld [vmem:[%s1] sm:$0xf]
        %v439 = vld [vmem:[%s1 + $0x4] sm:$0xf]
        %v440 = vld [vmem:[%s1 + $0x8] sm:$0xf]
        %v441 = vld [vmem:[%s1 + $0xc] sm:$0xf]
        %v442 = vld [vmem:[%s1 + $0x10] sm:$0xf]
        %v443 = vld [vmem:[%s1 + $0x14] sm:$0xf]
        %v444 = vld [vmem:[%s1 + $0x18] sm:$0xf]
        %v445 = vld [vmem:[%s1 + $0x1c] sm:$0xf]
        %v446 = vld [vmem:[%s1 + $0x20] sm:$0xf]
        %v447 = vld [vmem:[%s1 + $0x24] sm:$0xf]
        %v448 = vld [vmem:[%s1 + $0x28] sm:$0xf]
        %v449 = vld [vmem:[%s1 + $0x2c] sm:$0xf]
        %v450 = vld [vmem:[%s1 + $0x30] sm:$0xf]
        %v451 = vld [vmem:[%s1 + $0x34] sm:$0xf]
        %v452 = vld [vmem:[%s1 + $0x38] sm:$0xf]
        %v453 = vld [vmem:[%s1 + $0x3c] sm:$0xf]
        %v470 = vunpack.c.l.b16 %v438
        %v471 = vunpack.c.l.b16 %v439
        %v472 = vunpack.c.l.b16 %v440
        %v473 = vunpack.c.l.b16 %v441
        %v474 = vunpack.c.l.b16 %v442
        %v475 = vunpack.c.l.b16 %v443
        %v476 = vunpack.c.l.b16 %v444
        %v477 = vunpack.c.l.b16 %v445
        %v478 = vunpack.c.l.b16 %v446
        %v479 = vunpack.c.l.b16 %v447
        %v480 = vunpack.c.l.b16 %v448
        %v481 = vunpack.c.l.b16 %v449
        %v482 = vunpack.c.l.b16 %v450
        %v483 = vunpack.c.l.b16 %v451
        %v484 = vunpack.c.l.b16 %v452
        %v485 = vunpack.c.l.b16 %v453
        %v486 = vpack.c.b16 %v471, %v470
        %v487 = vpack.c.b16 %v473, %v472
        %v488 = vpack.c.b16 %v475, %v474
        %v489 = vpack.c.b16 %v477, %v476
        %v490 = vpack.c.b16 %v479, %v478
        %v491 = vpack.c.b16 %v481, %v480
        %v492 = vpack.c.b16 %v483, %v482
        %v493 = vpack.c.b16 %v485, %v484
        %502 = vmatprep.subr.bf16.mxu0 0
        %503 = vmatpush1.bf16.msra.mxu0 %v486
        %504 = vmatprep.subr.bf16.mxu0 0
        %505 = vmatpush1.bf16.msra.mxu0 %v487
        %506 = vmatprep.subr.bf16.mxu0 0
        %507 = vmatpush1.bf16.msra.mxu0 %v488
        %508 = vmatprep.subr.bf16.mxu0 0
        %509 = vmatpush1.bf16.msra.mxu0 %v489
        %510 = vmatprep.subr.bf16.mxu0 0
        %511 = vmatpush1.bf16.msra.mxu0 %v490
        %512 = vmatprep.subr.bf16.mxu0 0
        %513 = vmatpush1.bf16.msra.mxu0 %v491
        %514 = vmatprep.subr.bf16.mxu0 0
        %515 = vmatpush1.bf16.msra.mxu0 %v492
        %516 = vmatprep.subr.bf16.mxu0 0
        %517 = vmatpush1.bf16.msra.mxu0 %v493
        %518 = vmatprep.subr.bf16.mxu0 0
        %519 = vmatpush1.bf16.msra.mxu0 0
        %520 = vmatprep.subr.bf16.mxu0 0
        %521 = vmatpush1.bf16.msra.mxu0 0
        %522 = vmatprep.subr.bf16.mxu0 0
        %523 = vmatpush1.bf16.msra.mxu0 0
        %524 = vmatprep.subr.bf16.mxu0 0
        %525 = vmatpush1.bf16.msra.mxu0 0
        %526 = vmatprep.subr.bf16.mxu0 0
        %527 = vmatpush1.bf16.msra.mxu0 0
        %528 = vmatprep.subr.bf16.mxu0 0
        %529 = vmatpush1.bf16.msra.mxu0 0
        %530 = vmatprep.subr.bf16.mxu0 0
        %531 = vmatpush1.bf16.msra.mxu0 0
        %532 = vmatprep.subr.bf16.mxu0 0
        %533 = vmatpush1.bf16.msra.mxu0 0
        %534 = vmatprep.mubr.bf16.mxu0 0
        %535 = vmatmul.mubr.bf16.gmra.mrb[0].mxu0 %v434
        %v536 = vpop.f32.mrb[0].mxu0
        %v537 = vadd.f32 0.0, %v536
        %v538 = vpop.f32.mrb[0].mxu0
        %v539 = vpop.f32.mrb[0].mxu0
        %v540 = vadd.f32 0.0, %v539
        %v541 = vpop.f32.mrb[0].mxu0
        %542 = vmatprep.mubr.bf16.mxu0 0
        %543 = vmatmul.mubr.bf16.gmra.mrb[0].mxu0 %v435
        %v544 = vpop.f32.mrb[0].mxu0
        %v545 = vadd.f32 0.0, %v544
        %v546 = vpop.f32.mrb[0].mxu0
        %v547 = vpop.f32.mrb[0].mxu0
        %v548 = vadd.f32 0.0, %v547
        %v549 = vpop.f32.mrb[0].mxu0
        %550 = vmatprep.mubr.bf16.mxu0 0
        %551 = vmatmul.mubr.bf16.gmra.mrb[0].mxu0 %v436
        %v552 = vpop.f32.mrb[0].mxu0
        %v553 = vadd.f32 0.0, %v552
        %v554 = vpop.f32.mrb[0].mxu0
        %v555 = vpop.f32.mrb[0].mxu0
        %v556 = vadd.f32 0.0, %v555
        %v557 = vpop.f32.mrb[0].mxu0
        %558 = vmatprep.mubr.bf16.mxu0 0
        %559 = vmatmul.mubr.bf16.gmra.mrb[0].mxu0 %v437
        %v560 = vpop.f32.mrb[0].mxu0
        %v561 = vadd.f32 0.0, %v560
        %v562 = vpop.f32.mrb[0].mxu0
        %v563 = vpop.f32.mrb[0].mxu0
        %v564 = vadd.f32 0.0, %v563
        %v565 = vpop.f32.mrb[0].mxu0
        %566 = vdwg.mxu0
        %s567 = scalar_lea.vmem [#allocation3], %s424
        %568 = vst [vmem:[%s567] sm:$0xff] %v537
        %569 = vst [vmem:[%s567 + $0x8] sm:$0xff] %v540
        %570 = vst [vmem:[%s567 + $0x10] sm:$0xff] %v545
        %571 = vst [vmem:[%s567 + $0x18] sm:$0xff] %v548
        %572 = vst [vmem:[%s567 + $0x20] sm:$0xff] %v553
        %573 = vst [vmem:[%s567 + $0x28] sm:$0xff] %v556
        %574 = vst [vmem:[%s567 + $0x30] sm:$0xff] %v561
        %575 = vst [vmem:[%s567 + $0x38] sm:$0xff] %v564
        %v576 = vld [vmem:[#allocation7] sm:$0x1]
        %v577 = vadd.f32 %v537, %v540
        %v578 = vadd.f32 %v577, %v545
        %v579 = vadd.f32 %v578, %v548
        %v580 = vadd.f32 %v579, %v553
        %v581 = vadd.f32 %v580, %v556
        %v582 = vadd.f32 %v581, %v561
        %v583 = vadd.f32 %v582, %v564
        %v584 = vrot.slane %v583, 4
        %v585 = vadd.f32 %v583, %v584
        %v586 = vrot.slane %v585, 2
        %v587 = vadd.f32 %v585, %v586
        %v588 = vrot.slane %v587, 1
        %v589 = vadd.f32 %v587, %v588
        %v590 = vadd.f32 %v576, %v589
        %591 = vst [vmem:[#allocation7] sm:$0x1] %v590
        %v592 = vld [vmem:[#allocation8] sm:$0x1]
        %v593 = vmul.f32 %v537, %v537
        %v594 = vmul.f32 %v540, %v540
        %v595 = vmul.f32 %v545, %v545
        %v596 = vmul.f32 %v548, %v548
        %v597 = vmul.f32 %v553, %v553
        %v598 = vmul.f32 %v556, %v556
        %v599 = vmul.f32 %v561, %v561
        %v600 = vmul.f32 %v564, %v564
        %v601 = vadd.f32 %v593, %v594
        %v602 = vadd.f32 %v601, %v595
        %v603 = vadd.f32 %v602, %v596
        %v604 = vadd.f32 %v603, %v597
        %v605 = vadd.f32 %v604, %v598
        %v606 = vadd.f32 %v605, %v599
        %v607 = vadd.f32 %v606, %v600
        %v608 = vrot.slane %v607, 4
        %v609 = vadd.f32 %v607, %v608
        %v610 = vrot.slane %v609, 2
        %v611 = vadd.f32 %v609, %v610
        %v612 = vrot.slane %v611, 1
        %v613 = vadd.f32 %v611, %v612
        %v614 = vadd.f32 %v592, %v613
        %615 = vst [vmem:[#allocation8] sm:$0x1] %v614
      $region68: #{bottleneck_forward.1} parent=59 // pred_fallthru
        _
      %p616 = scmp.eq.s32.totalorder %s25, 1
      %p617 = pnand %p616, %p398
      %p618 = pneg %p617
      // Predicated region
      $region69: #{bottleneck_forward.1} parent=59 // pred_check
        _
      $region70: #{bottleneck_forward.1} parent=59 // pred_check_branch
        %620 = sbr.rel (%p617) target = $region72
      $region71: #{bottleneck_forward.1} parent=59 // pred_region
        %v621 = vld [vmem:[#allocation7] sm:$0x1]
        %v622 = vmul.f32 %v621, 0.0078125
        %v623 = vld [vmem:[#allocation8] sm:$0x1]
        %v624 = vmul.f32 %v623, 0.0078125
        %v625 = vmul.f32 %v622, %v622
        %v626 = vsub.f32 %v624, %v625
        %v627 = vmax.f32 %v626, 0.0
        %v628 = vld [vmem:[%s2] sm:$0x1]
        %v629 = vadd.f32 %v627, 1e-05
        %v630 = vrsqrt.pop %v629
        %v631 = vmul.f32 %v628, %v630
        %v632 = vld [vmem:[%s3] sm:$0x1]
        %v633 = vmul.f32 %v622, %v631
        %v634 = vsub.f32 %v632, %v633
        %635 = vst [vmem:[#allocation13] sm:$0x1] %v631
        %636 = vst [vmem:[#allocation14] sm:$0x1] %v634
        %637 = vst [vmem:[#allocation6] sm:$0xff] 0.0
        %638 = vst [vmem:[#allocation6 + $0x8] sm:$0x3] 0.0
        %639 = vst [vmem:[#allocation6 + $0x10] sm:$0xff] 0.0
        %640 = vst [vmem:[#allocation6 + $0x18] sm:$0x3] 0.0
        %641 = vst [vmem:[#allocation6 + $0x20] sm:$0xff] 0.0
        %642 = vst [vmem:[#allocation6 + $0x28] sm:$0x3] 0.0
        %643 = vst [vmem:[#allocation6 + $0x30] sm:$0xff] 0.0
        %644 = vst [vmem:[#allocation6 + $0x38] sm:$0x3] 0.0
        %645 = vst [vmem:[#allocation6 + $0x40] sm:$0xff] 0.0
        %646 = vst [vmem:[#allocation6 + $0x48] sm:$0x3] 0.0
        %647 = vst [vmem:[#allocation6 + $0x50] sm:$0xff] 0.0
        %648 = vst [vmem:[#allocation6 + $0x58] sm:$0x3] 0.0
        %649 = vst [vmem:[#allocation6 + $0x60] sm:$0xff] 0.0
        %650 = vst [vmem:[#allocation6 + $0x68] sm:$0x3] 0.0
        %651 = vst [vmem:[#allocation6 + $0x70] sm:$0xff] 0.0
        %652 = vst [vmem:[#allocation6 + $0x78] sm:$0x3] 0.0
        %653 = vst [vmem:[#allocation6 + $0x80] sm:$0xff] 0.0
        %654 = vst [vmem:[#allocation6 + $0x88] sm:$0x3] 0.0
        %655 = vst [vmem:[#allocation6 + $0x90] sm:$0xff] 0.0
        %656 = vst [vmem:[#allocation6 + $0x98] sm:$0x3] 0.0
      $region72: #{bottleneck_forward.1} parent=59 // pred_fallthru
        _
      // Predicated region
      $region73: #{bottleneck_forward.1} parent=59 // pred_check
        %p657 = pneg %p616
      $region74: #{bottleneck_forward.1} parent=59 // pred_check_branch
        %659 = sbr.rel (%p657) target = $region76
      $region75: #{bottleneck_forward.1} parent=59 // pred_region
        %s660 = smul.u32 %s26, 64
        %s661 = scalar_lea.vmem [#allocation3], %s660
        %v662 = vld [vmem:[%s661] sm:$0xff]
        %v663 = vld [vmem:[%s661 + $0x8] sm:$0xff]
        %v664 = vld [vmem:[%s661 + $0x10] sm:$0xff]
        %v665 = vld [vmem:[%s661 + $0x18] sm:$0xff]
        %v666 = vld [vmem:[%s661 + $0x20] sm:$0xff]
        %v667 = vld [vmem:[%s661 + $0x28] sm:$0xff]
        %v668 = vld [vmem:[%s661 + $0x30] sm:$0xff]
        %v669 = vld [vmem:[%s661 + $0x38] sm:$0xff]
        %v670 = vld [vmem:[#allocation13] sm:$0x1]
        %v672 = vlaneseq
        %v673 = vshrl.u32 %v672, 7
        %v674 = vsub.s32 0, %v673
        %v675 = vrot.slane %v670, %v674
        %v677 = vmul.f32 %v662, %v675
        %v678 = vmul.f32 %v663, %v675
        %v679 = vmul.f32 %v664, %v675
        %v680 = vmul.f32 %v665, %v675
        %v681 = vmul.f32 %v666, %v675
        %v682 = vmul.f32 %v667, %v675
        %v683 = vmul.f32 %v668, %v675
        %v684 = vmul.f32 %v669, %v675
        %v685 = vld [vmem:[#allocation14] sm:$0x1]
        %v687 = vlaneseq
        %v688 = vshrl.u32 %v687, 7
        %v689 = vsub.s32 0, %v688
        %v690 = vrot.slane %v685, %v689
        %v692 = vadd.f32 %v677, %v690
        %v693 = vadd.f32 %v678, %v690
        %v694 = vadd.f32 %v679, %v690
        %v695 = vadd.f32 %v680, %v690
        %v696 = vadd.f32 %v681, %v690
        %v697 = vadd.f32 %v682, %v690
        %v698 = vadd.f32 %v683, %v690
        %v699 = vadd.f32 %v684, %v690
        %v700 = vmax.f32 %v692, 0.0
        %v701 = vmax.f32 %v693, 0.0
        %v702 = vmax.f32 %v694, 0.0
        %v703 = vmax.f32 %v695, 0.0
        %v704 = vmax.f32 %v696, 0.0
        %v705 = vmax.f32 %v697, 0.0
        %v706 = vmax.f32 %v698, 0.0
        %v707 = vmax.f32 %v699, 0.0
        %s708 = scalar_lea.vmem [#allocation6], 16
        %709 = vst [vmem:[%s708 + $0x1] sm:$0xff] %v700
        %710 = vst [vmem:[%s708 + $0x11] sm:$0xff] %v701
        %711 = vst [vmem:[%s708 + $0x21] sm:$0xff] %v702
        %712 = vst [vmem:[%s708 + $0x31] sm:$0xff] %v703
        %713 = vst [vmem:[%s708 + $0x41] sm:$0xff] %v704
        %714 = vst [vmem:[%s708 + $0x51] sm:$0xff] %v705
        %715 = vst [vmem:[%s708 + $0x61] sm:$0xff] %v706
        %716 = vst [vmem:[%s708 + $0x71] sm:$0xff] %v707
        %v717 = vld [vmem:[#allocation6] sm:$0xff]
        %v718 = vld [vmem:[#allocation6 + $0x10] sm:$0xff]
        %v719 = vld [vmem:[#allocation6 + $0x20] sm:$0xff]
        %v720 = vld [vmem:[#allocation6 + $0x30] sm:$0xff]
        %v721 = vld [vmem:[#allocation6 + $0x40] sm:$0xff]
        %v722 = vld [vmem:[#allocation6 + $0x50] sm:$0xff]
        %v723 = vld [vmem:[#allocation6 + $0x60] sm:$0xff]
        %v724 = vld [vmem:[#allocation6 + $0x70] sm:$0xff]
        %v725 = vpack.c.bf16 %v718, %v717
        %v726 = vpack.c.bf16 %v720, %v719
        %v727 = vpack.c.bf16 %v722, %v721
        %v728 = vpack.c.bf16 %v724, %v723
        %v729 = vld [vmem:[#allocation6 + $0x1] sm:$0xff]
        %v730 = vld [vmem:[#allocation6 + $0x11] sm:$0xff]
        %v731 = vld [vmem:[#allocation6 + $0x21] sm:$0xff]
        %v732 = vld [vmem:[#allocation6 + $0x31] sm:$0xff]
        %v733 = vld [vmem:[#allocation6 + $0x41] sm:$0xff]
        %v734 = vld [vmem:[#allocation6 + $0x51] sm:$0xff]
        %v735 = vld [vmem:[#allocation6 + $0x61] sm:$0xff]
        %v736 = vld [vmem:[#allocation6 + $0x71] sm:$0xff]
        %v737 = vpack.c.bf16 %v730, %v729
        %v738 = vpack.c.bf16 %v732, %v731
        %v739 = vpack.c.bf16 %v734, %v733
        %v740 = vpack.c.bf16 %v736, %v735
        %v741 = vld [vmem:[#allocation6 + $0x2] sm:$0xff]
        %v742 = vld [vmem:[#allocation6 + $0x12] sm:$0xff]
        %v743 = vld [vmem:[#allocation6 + $0x22] sm:$0xff]
        %v744 = vld [vmem:[#allocation6 + $0x32] sm:$0xff]
        %v745 = vld [vmem:[#allocation6 + $0x42] sm:$0xff]
        %v746 = vld [vmem:[#allocation6 + $0x52] sm:$0xff]
        %v747 = vld [vmem:[#allocation6 + $0x62] sm:$0xff]
        %v748 = vld [vmem:[#allocation6 + $0x72] sm:$0xff]
        %v749 = vpack.c.bf16 %v742, %v741
        %v750 = vpack.c.bf16 %v744, %v743
        %v751 = vpack.c.bf16 %v746, %v745
        %v752 = vpack.c.bf16 %v748, %v747
        %v753 = vld [vmem:[%s708] sm:$0xff]
        %v754 = vld [vmem:[%s708 + $0x10] sm:$0xff]
        %v755 = vld [vmem:[%s708 + $0x20] sm:$0xff]
        %v756 = vld [vmem:[%s708 + $0x30] sm:$0xff]
        %v757 = vld [vmem:[%s708 + $0x40] sm:$0xff]
        %v758 = vld [vmem:[%s708 + $0x50] sm:$0xff]
        %v759 = vld [vmem:[%s708 + $0x60] sm:$0xff]
        %v760 = vld [vmem:[%s708 + $0x70] sm:$0xff]
        %v761 = vpack.c.bf16 %v754, %v753
        %v762 = vpack.c.bf16 %v756, %v755
        %v763 = vpack.c.bf16 %v758, %v757
        %v764 = vpack.c.bf16 %v760, %v759
        %v765 = vld [vmem:[%s708 + $0x1] sm:$0xff]
        %v766 = vld [vmem:[%s708 + $0x11] sm:$0xff]
        %v767 = vld [vmem:[%s708 + $0x21] sm:$0xff]
        %v768 = vld [vmem:[%s708 + $0x31] sm:$0xff]
        %v769 = vld [vmem:[%s708 + $0x41] sm:$0xff]
        %v770 = vld [vmem:[%s708 + $0x51] sm:$0xff]
        %v771 = vld [vmem:[%s708 + $0x61] sm:$0xff]
        %v772 = vld [vmem:[%s708 + $0x71] sm:$0xff]
        %v773 = vpack.c.bf16 %v766, %v765
        %v774 = vpack.c.bf16 %v768, %v767
        %v775 = vpack.c.bf16 %v770, %v769
        %v776 = vpack.c.bf16 %v772, %v771
        %v777 = vld [vmem:[%s708 + $0x2] sm:$0xff]
        %v778 = vld [vmem:[%s708 + $0x12] sm:$0xff]
        %v779 = vld [vmem:[%s708 + $0x22] sm:$0xff]
        %v780 = vld [vmem:[%s708 + $0x32] sm:$0xff]
        %v781 = vld [vmem:[%s708 + $0x42] sm:$0xff]
        %v782 = vld [vmem:[%s708 + $0x52] sm:$0xff]
        %v783 = vld [vmem:[%s708 + $0x62] sm:$0xff]
        %v784 = vld [vmem:[%s708 + $0x72] sm:$0xff]
        %v785 = vpack.c.bf16 %v778, %v777
        %v786 = vpack.c.bf16 %v780, %v779
        %v787 = vpack.c.bf16 %v782, %v781
        %v788 = vpack.c.bf16 %v784, %v783
        %s789 = scalar_lea.vmem [#allocation6], 32
        %v790 = vld [vmem:[%s789] sm:$0xff]
        %v791 = vld [vmem:[%s789 + $0x10] sm:$0xff]
        %v792 = vld [vmem:[%s789 + $0x20] sm:$0xff]
        %v793 = vld [vmem:[%s789 + $0x30] sm:$0xff]
        %v794 = vld [vmem:[%s789 + $0x40] sm:$0xff]
        %v795 = vld [vmem:[%s789 + $0x50] sm:$0xff]
        %v796 = vld [vmem:[%s789 + $0x60] sm:$0xff]
        %v797 = vld [vmem:[%s789 + $0x70] sm:$0xff]
        %v798 = vpack.c.bf16 %v791, %v790
        %v799 = vpack.c.bf16 %v793, %v792
        %v800 = vpack.c.bf16 %v795, %v794
        %v801 = vpack.c.bf16 %v797, %v796
        %v802 = vld [vmem:[%s789 + $0x1] sm:$0xff]
        %v803 = vld [vmem:[%s789 + $0x11] sm:$0xff]
        %v804 = vld [vmem:[%s789 + $0x21] sm:$0xff]
        %v805 = vld [vmem:[%s789 + $0x31] sm:$0xff]
        %v806 = vld [vmem:[%s789 + $0x41] sm:$0xff]
        %v807 = vld [vmem:[%s789 + $0x51] sm:$0xff]
        %v808 = vld [vmem:[%s789 + $0x61] sm:$0xff]
        %v809 = vld [vmem:[%s789 + $0x71] sm:$0xff]
        %v810 = vpack.c.bf16 %v803, %v802
        %v811 = vpack.c.bf16 %v805, %v804
        %v812 = vpack.c.bf16 %v807, %v806
        %v813 = vpack.c.bf16 %v809, %v808
        %v814 = vld [vmem:[%s789 + $0x2] sm:$0xff]
        %v815 = vld [vmem:[%s789 + $0x12] sm:$0xff]
        %v816 = vld [vmem:[%s789 + $0x22] sm:$0xff]
        %v817 = vld [vmem:[%s789 + $0x32] sm:$0xff]
        %v818 = vld [vmem:[%s789 + $0x42] sm:$0xff]
        %v819 = vld [vmem:[%s789 + $0x52] sm:$0xff]
        %v820 = vld [vmem:[%s789 + $0x62] sm:$0xff]
        %v821 = vld [vmem:[%s789 + $0x72] sm:$0xff]
        %v822 = vpack.c.bf16 %v815, %v814
        %v823 = vpack.c.bf16 %v817, %v816
        %v824 = vpack.c.bf16 %v819, %v818
        %v825 = vpack.c.bf16 %v821, %v820
        %v826 = vld [vmem:[%s4] sm:$0xf]
        %v827 = vld [vmem:[%s4 + $0x4] sm:$0xf]
        %v828 = vld [vmem:[%s4 + $0x8] sm:$0xf]
        %v829 = vld [vmem:[%s4 + $0xc] sm:$0xf]
        %v830 = vld [vmem:[%s4 + $0x10] sm:$0xf]
        %v831 = vld [vmem:[%s4 + $0x14] sm:$0xf]
        %v832 = vld [vmem:[%s4 + $0x18] sm:$0xf]
        %v833 = vld [vmem:[%s4 + $0x1c] sm:$0xf]
        %v834 = vld [vmem:[%s4 + $0x20] sm:$0xf]
        %v835 = vld [vmem:[%s4 + $0x24] sm:$0xf]
        %v836 = vld [vmem:[%s4 + $0x28] sm:$0xf]
        %v837 = vld [vmem:[%s4 + $0x2c] sm:$0xf]
        %v838 = vld [vmem:[%s4 + $0x30] sm:$0xf]
        %v839 = vld [vmem:[%s4 + $0x34] sm:$0xf]
        %v840 = vld [vmem:[%s4 + $0x38] sm:$0xf]
        %v841 = vld [vmem:[%s4 + $0x3c] sm:$0xf]
        %v842 = vld [vmem:[%s4 + $0x40] sm:$0xf]
        %v843 = vld [vmem:[%s4 + $0x44] sm:$0xf]
        %v844 = vld [vmem:[%s4 + $0x48] sm:$0xf]
        %v845 = vld [vmem:[%s4 + $0x4c] sm:$0xf]
        %v846 = vld [vmem:[%s4 + $0x50] sm:$0xf]
        %v847 = vld [vmem:[%s4 + $0x54] sm:$0xf]
        %v848 = vld [vmem:[%s4 + $0x58] sm:$0xf]
        %v849 = vld [vmem:[%s4 + $0x5c] sm:$0xf]
        %v850 = vld [vmem:[%s4 + $0x60] sm:$0xf]
        %v851 = vld [vmem:[%s4 + $0x64] sm:$0xf]
        %v852 = vld [vmem:[%s4 + $0x68] sm:$0xf]
        %v853 = vld [vmem:[%s4 + $0x6c] sm:$0xf]
        %v854 = vld [vmem:[%s4 + $0x70] sm:$0xf]
        %v855 = vld [vmem:[%s4 + $0x74] sm:$0xf]
        %v856 = vld [vmem:[%s4 + $0x78] sm:$0xf]
        %v857 = vld [vmem:[%s4 + $0x7c] sm:$0xf]
        %v858 = vld [vmem:[%s4 + $0x80] sm:$0xf]
        %v859 = vld [vmem:[%s4 + $0x84] sm:$0xf]
        %v860 = vld [vmem:[%s4 + $0x88] sm:$0xf]
        %v861 = vld [vmem:[%s4 + $0x8c] sm:$0xf]
        %v862 = vld [vmem:[%s4 + $0x90] sm:$0xf]
        %v863 = vld [vmem:[%s4 + $0x94] sm:$0xf]
        %v864 = vld [vmem:[%s4 + $0x98] sm:$0xf]
        %v865 = vld [vmem:[%s4 + $0x9c] sm:$0xf]
        %v866 = vld [vmem:[%s4 + $0xa0] sm:$0xf]
        %v867 = vld [vmem:[%s4 + $0xa4] sm:$0xf]
        %v868 = vld [vmem:[%s4 + $0xa8] sm:$0xf]
        %v869 = vld [vmem:[%s4 + $0xac] sm:$0xf]
        %v870 = vld [vmem:[%s4 + $0xb0] sm:$0xf]
        %v871 = vld [vmem:[%s4 + $0xb4] sm:$0xf]
        %v872 = vld [vmem:[%s4 + $0xb8] sm:$0xf]
        %v873 = vld [vmem:[%s4 + $0xbc] sm:$0xf]
        %v874 = vld [vmem:[%s4 + $0xc0] sm:$0xf]
        %v875 = vld [vmem:[%s4 + $0xc4] sm:$0xf]
        %v876 = vld [vmem:[%s4 + $0xc8] sm:$0xf]
        %v877 = vld [vmem:[%s4 + $0xcc] sm:$0xf]
        %v878 = vld [vmem:[%s4 + $0xd0] sm:$0xf]
        %v879 = vld [vmem:[%s4 + $0xd4] sm:$0xf]
        %v880 = vld [vmem:[%s4 + $0xd8] sm:$0xf]
        %v881 = vld [vmem:[%s4 + $0xdc] sm:$0xf]
        %v882 = vld [vmem:[%s4 + $0xe0] sm:$0xf]
        %v883 = vld [vmem:[%s4 + $0xe4] sm:$0xf]
        %v884 = vld [vmem:[%s4 + $0xe8] sm:$0xf]
        %v885 = vld [vmem:[%s4 + $0xec] sm:$0xf]
        %v886 = vld [vmem:[%s4 + $0xf0] sm:$0xf]
        %v887 = vld [vmem:[%s4 + $0xf4] sm:$0xf]
        %v888 = vld [vmem:[%s4 + $0xf8] sm:$0xf]
        %v889 = vld [vmem:[%s4 + $0xfc] sm:$0xf]
        %v890 = vld [vmem:[%s4 + $0x100] sm:$0xf]
        %v891 = vld [vmem:[%s4 + $0x104] sm:$0xf]
        %v892 = vld [vmem:[%s4 + $0x108] sm:$0xf]
        %v893 = vld [vmem:[%s4 + $0x10c] sm:$0xf]
        %v894 = vld [vmem:[%s4 + $0x110] sm:$0xf]
        %v895 = vld [vmem:[%s4 + $0x114] sm:$0xf]
        %v896 = vld [vmem:[%s4 + $0x118] sm:$0xf]
        %v897 = vld [vmem:[%s4 + $0x11c] sm:$0xf]
        %v898 = vld [vmem:[%s4 + $0x120] sm:$0xf]
        %v899 = vld [vmem:[%s4 + $0x124] sm:$0xf]
        %v900 = vld [vmem:[%s4 + $0x128] sm:$0xf]
        %v901 = vld [vmem:[%s4 + $0x12c] sm:$0xf]
        %v902 = vld [vmem:[%s4 + $0x130] sm:$0xf]
        %v903 = vld [vmem:[%s4 + $0x134] sm:$0xf]
        %v904 = vld [vmem:[%s4 + $0x138] sm:$0xf]
        %v905 = vld [vmem:[%s4 + $0x13c] sm:$0xf]
        %v906 = vld [vmem:[%s4 + $0x140] sm:$0xf]
        %v907 = vld [vmem:[%s4 + $0x144] sm:$0xf]
        %v908 = vld [vmem:[%s4 + $0x148] sm:$0xf]
        %v909 = vld [vmem:[%s4 + $0x14c] sm:$0xf]
        %v910 = vld [vmem:[%s4 + $0x150] sm:$0xf]
        %v911 = vld [vmem:[%s4 + $0x154] sm:$0xf]
        %v912 = vld [vmem:[%s4 + $0x158] sm:$0xf]
        %v913 = vld [vmem:[%s4 + $0x15c] sm:$0xf]
        %v914 = vld [vmem:[%s4 + $0x160] sm:$0xf]
        %v915 = vld [vmem:[%s4 + $0x164] sm:$0xf]
        %v916 = vld [vmem:[%s4 + $0x168] sm:$0xf]
        %v917 = vld [vmem:[%s4 + $0x16c] sm:$0xf]
        %v918 = vld [vmem:[%s4 + $0x170] sm:$0xf]
        %v919 = vld [vmem:[%s4 + $0x174] sm:$0xf]
        %v920 = vld [vmem:[%s4 + $0x178] sm:$0xf]
        %v921 = vld [vmem:[%s4 + $0x17c] sm:$0xf]
        %v922 = vld [vmem:[%s4 + $0x180] sm:$0xf]
        %v923 = vld [vmem:[%s4 + $0x184] sm:$0xf]
        %v924 = vld [vmem:[%s4 + $0x188] sm:$0xf]
        %v925 = vld [vmem:[%s4 + $0x18c] sm:$0xf]
        %v926 = vld [vmem:[%s4 + $0x190] sm:$0xf]
        %v927 = vld [vmem:[%s4 + $0x194] sm:$0xf]
        %v928 = vld [vmem:[%s4 + $0x198] sm:$0xf]
        %v929 = vld [vmem:[%s4 + $0x19c] sm:$0xf]
        %v930 = vld [vmem:[%s4 + $0x1a0] sm:$0xf]
        %v931 = vld [vmem:[%s4 + $0x1a4] sm:$0xf]
        %v932 = vld [vmem:[%s4 + $0x1a8] sm:$0xf]
        %v933 = vld [vmem:[%s4 + $0x1ac] sm:$0xf]
        %v934 = vld [vmem:[%s4 + $0x1b0] sm:$0xf]
        %v935 = vld [vmem:[%s4 + $0x1b4] sm:$0xf]
        %v936 = vld [vmem:[%s4 + $0x1b8] sm:$0xf]
        %v937 = vld [vmem:[%s4 + $0x1bc] sm:$0xf]
        %v938 = vld [vmem:[%s4 + $0x1c0] sm:$0xf]
        %v939 = vld [vmem:[%s4 + $0x1c4] sm:$0xf]
        %v940 = vld [vmem:[%s4 + $0x1c8] sm:$0xf]
        %v941 = vld [vmem:[%s4 + $0x1cc] sm:$0xf]
        %v942 = vld [vmem:[%s4 + $0x1d0] sm:$0xf]
        %v943 = vld [vmem:[%s4 + $0x1d4] sm:$0xf]
        %v944 = vld [vmem:[%s4 + $0x1d8] sm:$0xf]
        %v945 = vld [vmem:[%s4 + $0x1dc] sm:$0xf]
        %v946 = vld [vmem:[%s4 + $0x1e0] sm:$0xf]
        %v947 = vld [vmem:[%s4 + $0x1e4] sm:$0xf]
        %v948 = vld [vmem:[%s4 + $0x1e8] sm:$0xf]
        %v949 = vld [vmem:[%s4 + $0x1ec] sm:$0xf]
        %v950 = vld [vmem:[%s4 + $0x1f0] sm:$0xf]
        %v951 = vld [vmem:[%s4 + $0x1f4] sm:$0xf]
        %v952 = vld [vmem:[%s4 + $0x1f8] sm:$0xf]
        %v953 = vld [vmem:[%s4 + $0x1fc] sm:$0xf]
        %v954 = vld [vmem:[%s4 + $0x200] sm:$0xf]
        %v955 = vld [vmem:[%s4 + $0x204] sm:$0xf]
        %v956 = vld [vmem:[%s4 + $0x208] sm:$0xf]
        %v957 = vld [vmem:[%s4 + $0x20c] sm:$0xf]
        %v958 = vld [vmem:[%s4 + $0x210] sm:$0xf]
        %v959 = vld [vmem:[%s4 + $0x214] sm:$0xf]
        %v960 = vld [vmem:[%s4 + $0x218] sm:$0xf]
        %v961 = vld [vmem:[%s4 + $0x21c] sm:$0xf]
        %v962 = vld [vmem:[%s4 + $0x220] sm:$0xf]
        %v963 = vld [vmem:[%s4 + $0x224] sm:$0xf]
        %v964 = vld [vmem:[%s4 + $0x228] sm:$0xf]
        %v965 = vld [vmem:[%s4 + $0x22c] sm:$0xf]
        %v966 = vld [vmem:[%s4 + $0x230] sm:$0xf]
        %v967 = vld [vmem:[%s4 + $0x234] sm:$0xf]
        %v968 = vld [vmem:[%s4 + $0x238] sm:$0xf]
        %v969 = vld [vmem:[%s4 + $0x23c] sm:$0xf]
        %v1114 = vunpack.c.l.b16 %v826
        %v1115 = vunpack.c.l.b16 %v827
        %v1116 = vunpack.c.l.b16 %v828
        %v1117 = vunpack.c.l.b16 %v829
        %v1118 = vunpack.c.l.b16 %v830
        %v1119 = vunpack.c.l.b16 %v831
        %v1120 = vunpack.c.l.b16 %v832
        %v1121 = vunpack.c.l.b16 %v833
        %v1122 = vunpack.c.l.b16 %v834
        %v1123 = vunpack.c.l.b16 %v835
        %v1124 = vunpack.c.l.b16 %v836
        %v1125 = vunpack.c.l.b16 %v837
        %v1126 = vunpack.c.l.b16 %v838
        %v1127 = vunpack.c.l.b16 %v839
        %v1128 = vunpack.c.l.b16 %v840
        %v1129 = vunpack.c.l.b16 %v841
        %v1130 = vunpack.c.l.b16 %v842
        %v1131 = vunpack.c.l.b16 %v843
        %v1132 = vunpack.c.l.b16 %v844
        %v1133 = vunpack.c.l.b16 %v845
        %v1134 = vunpack.c.l.b16 %v846
        %v1135 = vunpack.c.l.b16 %v847
        %v1136 = vunpack.c.l.b16 %v848
        %v1137 = vunpack.c.l.b16 %v849
        %v1138 = vunpack.c.l.b16 %v850
        %v1139 = vunpack.c.l.b16 %v851
        %v1140 = vunpack.c.l.b16 %v852
        %v1141 = vunpack.c.l.b16 %v853
        %v1142 = vunpack.c.l.b16 %v854
        %v1143 = vunpack.c.l.b16 %v855
        %v1144 = vunpack.c.l.b16 %v856
        %v1145 = vunpack.c.l.b16 %v857
        %v1146 = vunpack.c.l.b16 %v858
        %v1147 = vunpack.c.l.b16 %v859
        %v1148 = vunpack.c.l.b16 %v860
        %v1149 = vunpack.c.l.b16 %v861
        %v1150 = vunpack.c.l.b16 %v862
        %v1151 = vunpack.c.l.b16 %v863
        %v1152 = vunpack.c.l.b16 %v864
        %v1153 = vunpack.c.l.b16 %v865
        %v1154 = vunpack.c.l.b16 %v866
        %v1155 = vunpack.c.l.b16 %v867
        %v1156 = vunpack.c.l.b16 %v868
        %v1157 = vunpack.c.l.b16 %v869
        %v1158 = vunpack.c.l.b16 %v870
        %v1159 = vunpack.c.l.b16 %v871
        %v1160 = vunpack.c.l.b16 %v872
        %v1161 = vunpack.c.l.b16 %v873
        %v1162 = vunpack.c.l.b16 %v874
        %v1163 = vunpack.c.l.b16 %v875
        %v1164 = vunpack.c.l.b16 %v876
        %v1165 = vunpack.c.l.b16 %v877
        %v1166 = vunpack.c.l.b16 %v878
        %v1167 = vunpack.c.l.b16 %v879
        %v1168 = vunpack.c.l.b16 %v880
        %v1169 = vunpack.c.l.b16 %v881
        %v1170 = vunpack.c.l.b16 %v882
        %v1171 = vunpack.c.l.b16 %v883
        %v1172 = vunpack.c.l.b16 %v884
        %v1173 = vunpack.c.l.b16 %v885
        %v1174 = vunpack.c.l.b16 %v886
        %v1175 = vunpack.c.l.b16 %v887
        %v1176 = vunpack.c.l.b16 %v888
        %v1177 = vunpack.c.l.b16 %v889
        %v1178 = vunpack.c.l.b16 %v890
        %v1179 = vunpack.c.l.b16 %v891
        %v1180 = vunpack.c.l.b16 %v892
        %v1181 = vunpack.c.l.b16 %v893
        %v1182 = vunpack.c.l.b16 %v894
        %v1183 = vunpack.c.l.b16 %v895
        %v1184 = vunpack.c.l.b16 %v896
        %v1185 = vunpack.c.l.b16 %v897
        %v1186 = vunpack.c.l.b16 %v898
        %v1187 = vunpack.c.l.b16 %v899
        %v1188 = vunpack.c.l.b16 %v900
        %v1189 = vunpack.c.l.b16 %v901
        %v1190 = vunpack.c.l.b16 %v902
        %v1191 = vunpack.c.l.b16 %v903
        %v1192 = vunpack.c.l.b16 %v904
        %v1193 = vunpack.c.l.b16 %v905
        %v1194 = vunpack.c.l.b16 %v906
        %v1195 = vunpack.c.l.b16 %v907
        %v1196 = vunpack.c.l.b16 %v908
        %v1197 = vunpack.c.l.b16 %v909
        %v1198 = vunpack.c.l.b16 %v910
        %v1199 = vunpack.c.l.b16 %v911
        %v1200 = vunpack.c.l.b16 %v912
        %v1201 = vunpack.c.l.b16 %v913
        %v1202 = vunpack.c.l.b16 %v914
        %v1203 = vunpack.c.l.b16 %v915
        %v1204 = vunpack.c.l.b16 %v916
        %v1205 = vunpack.c.l.b16 %v917
        %v1206 = vunpack.c.l.b16 %v918
        %v1207 = vunpack.c.l.b16 %v919
        %v1208 = vunpack.c.l.b16 %v920
        %v1209 = vunpack.c.l.b16 %v921
        %v1210 = vunpack.c.l.b16 %v922
        %v1211 = vunpack.c.l.b16 %v923
        %v1212 = vunpack.c.l.b16 %v924
        %v1213 = vunpack.c.l.b16 %v925
        %v1214 = vunpack.c.l.b16 %v926
        %v1215 = vunpack.c.l.b16 %v927
        %v1216 = vunpack.c.l.b16 %v928
        %v1217 = vunpack.c.l.b16 %v929
        %v1218 = vunpack.c.l.b16 %v930
        %v1219 = vunpack.c.l.b16 %v931
        %v1220 = vunpack.c.l.b16 %v932
        %v1221 = vunpack.c.l.b16 %v933
        %v1222 = vunpack.c.l.b16 %v934
        %v1223 = vunpack.c.l.b16 %v935
        %v1224 = vunpack.c.l.b16 %v936
        %v1225 = vunpack.c.l.b16 %v937
        %v1226 = vunpack.c.l.b16 %v938
        %v1227 = vunpack.c.l.b16 %v939
        %v1228 = vunpack.c.l.b16 %v940
        %v1229 = vunpack.c.l.b16 %v941
        %v1230 = vunpack.c.l.b16 %v942
        %v1231 = vunpack.c.l.b16 %v943
        %v1232 = vunpack.c.l.b16 %v944
        %v1233 = vunpack.c.l.b16 %v945
        %v1234 = vunpack.c.l.b16 %v946
        %v1235 = vunpack.c.l.b16 %v947
        %v1236 = vunpack.c.l.b16 %v948
        %v1237 = vunpack.c.l.b16 %v949
        %v1238 = vunpack.c.l.b16 %v950
        %v1239 = vunpack.c.l.b16 %v951
        %v1240 = vunpack.c.l.b16 %v952
        %v1241 = vunpack.c.l.b16 %v953
        %v1242 = vunpack.c.l.b16 %v954
        %v1243 = vunpack.c.l.b16 %v955
        %v1244 = vunpack.c.l.b16 %v956
        %v1245 = vunpack.c.l.b16 %v957
        %v1246 = vunpack.c.l.b16 %v958
        %v1247 = vunpack.c.l.b16 %v959
        %v1248 = vunpack.c.l.b16 %v960
        %v1249 = vunpack.c.l.b16 %v961
        %v1250 = vunpack.c.l.b16 %v962
        %v1251 = vunpack.c.l.b16 %v963
        %v1252 = vunpack.c.l.b16 %v964
        %v1253 = vunpack.c.l.b16 %v965
        %v1254 = vunpack.c.l.b16 %v966
        %v1255 = vunpack.c.l.b16 %v967
        %v1256 = vunpack.c.l.b16 %v968
        %v1257 = vunpack.c.l.b16 %v969
        %v1258 = vpack.c.b16 %v1115, %v1114
        %v1259 = vpack.c.b16 %v1117, %v1116
        %v1260 = vpack.c.b16 %v1119, %v1118
        %v1261 = vpack.c.b16 %v1121, %v1120
        %v1262 = vpack.c.b16 %v1123, %v1122
        %v1263 = vpack.c.b16 %v1125, %v1124
        %v1264 = vpack.c.b16 %v1127, %v1126
        %v1265 = vpack.c.b16 %v1129, %v1128
        %v1266 = vpack.c.b16 %v1131, %v1130
        %v1267 = vpack.c.b16 %v1133, %v1132
        %v1268 = vpack.c.b16 %v1135, %v1134
        %v1269 = vpack.c.b16 %v1137, %v1136
        %v1270 = vpack.c.b16 %v1139, %v1138
        %v1271 = vpack.c.b16 %v1141, %v1140
        %v1272 = vpack.c.b16 %v1143, %v1142
        %v1273 = vpack.c.b16 %v1145, %v1144
        %v1274 = vpack.c.b16 %v1147, %v1146
        %v1275 = vpack.c.b16 %v1149, %v1148
        %v1276 = vpack.c.b16 %v1151, %v1150
        %v1277 = vpack.c.b16 %v1153, %v1152
        %v1278 = vpack.c.b16 %v1155, %v1154
        %v1279 = vpack.c.b16 %v1157, %v1156
        %v1280 = vpack.c.b16 %v1159, %v1158
        %v1281 = vpack.c.b16 %v1161, %v1160
        %v1282 = vpack.c.b16 %v1163, %v1162
        %v1283 = vpack.c.b16 %v1165, %v1164
        %v1284 = vpack.c.b16 %v1167, %v1166
        %v1285 = vpack.c.b16 %v1169, %v1168
        %v1286 = vpack.c.b16 %v1171, %v1170
        %v1287 = vpack.c.b16 %v1173, %v1172
        %v1288 = vpack.c.b16 %v1175, %v1174
        %v1289 = vpack.c.b16 %v1177, %v1176
        %v1290 = vpack.c.b16 %v1179, %v1178
        %v1291 = vpack.c.b16 %v1181, %v1180
        %v1292 = vpack.c.b16 %v1183, %v1182
        %v1293 = vpack.c.b16 %v1185, %v1184
        %v1294 = vpack.c.b16 %v1187, %v1186
        %v1295 = vpack.c.b16 %v1189, %v1188
        %v1296 = vpack.c.b16 %v1191, %v1190
        %v1297 = vpack.c.b16 %v1193, %v1192
        %v1298 = vpack.c.b16 %v1195, %v1194
        %v1299 = vpack.c.b16 %v1197, %v1196
        %v1300 = vpack.c.b16 %v1199, %v1198
        %v1301 = vpack.c.b16 %v1201, %v1200
        %v1302 = vpack.c.b16 %v1203, %v1202
        %v1303 = vpack.c.b16 %v1205, %v1204
        %v1304 = vpack.c.b16 %v1207, %v1206
        %v1305 = vpack.c.b16 %v1209, %v1208
        %v1306 = vpack.c.b16 %v1211, %v1210
        %v1307 = vpack.c.b16 %v1213, %v1212
        %v1308 = vpack.c.b16 %v1215, %v1214
        %v1309 = vpack.c.b16 %v1217, %v1216
        %v1310 = vpack.c.b16 %v1219, %v1218
        %v1311 = vpack.c.b16 %v1221, %v1220
        %v1312 = vpack.c.b16 %v1223, %v1222
        %v1313 = vpack.c.b16 %v1225, %v1224
        %v1314 = vpack.c.b16 %v1227, %v1226
        %v1315 = vpack.c.b16 %v1229, %v1228
        %v1316 = vpack.c.b16 %v1231, %v1230
        %v1317 = vpack.c.b16 %v1233, %v1232
        %v1318 = vpack.c.b16 %v1235, %v1234
        %v1319 = vpack.c.b16 %v1237, %v1236
        %v1320 = vpack.c.b16 %v1239, %v1238
        %v1321 = vpack.c.b16 %v1241, %v1240
        %v1322 = vpack.c.b16 %v1243, %v1242
        %v1323 = vpack.c.b16 %v1245, %v1244
        %v1324 = vpack.c.b16 %v1247, %v1246
        %v1325 = vpack.c.b16 %v1249, %v1248
        %v1326 = vpack.c.b16 %v1251, %v1250
        %v1327 = vpack.c.b16 %v1253, %v1252
        %v1328 = vpack.c.b16 %v1255, %v1254
        %v1329 = vpack.c.b16 %v1257, %v1256
        %1402 = vmatprep.subr.bf16.mxu0 0
        %1403 = vmatpush1.bf16.msra.mxu0 %v1258
        %1404 = vmatprep.subr.bf16.mxu0 0
        %1405 = vmatpush1.bf16.msra.mxu0 %v1259
        %1406 = vmatprep.subr.bf16.mxu0 0
        %1407 = vmatpush1.bf16.msra.mxu0 %v1260
        %1408 = vmatprep.subr.bf16.mxu0 0
        %1409 = vmatpush1.bf16.msra.mxu0 %v1261
        %1410 = vmatprep.subr.bf16.mxu0 0
        %1411 = vmatpush1.bf16.msra.mxu0 %v1262
        %1412 = vmatprep.subr.bf16.mxu0 0
        %1413 = vmatpush1.bf16.msra.mxu0 %v1263
        %1414 = vmatprep.subr.bf16.mxu0 0
        %1415 = vmatpush1.bf16.msra.mxu0 %v1264
        %1416 = vmatprep.subr.bf16.mxu0 0
        %1417 = vmatpush1.bf16.msra.mxu0 %v1265
        %1418 = vmatprep.subr.bf16.mxu0 0
        %1419 = vmatpush1.bf16.msra.mxu0 %v1266
        %1420 = vmatprep.subr.bf16.mxu0 0
        %1421 = vmatpush1.bf16.msra.mxu0 %v1267
        %1422 = vmatprep.subr.bf16.mxu0 0
        %1423 = vmatpush1.bf16.msra.mxu0 %v1268
        %1424 = vmatprep.subr.bf16.mxu0 0
        %1425 = vmatpush1.bf16.msra.mxu0 %v1269
        %1426 = vmatprep.subr.bf16.mxu0 0
        %1427 = vmatpush1.bf16.msra.mxu0 %v1270
        %1428 = vmatprep.subr.bf16.mxu0 0
        %1429 = vmatpush1.bf16.msra.mxu0 %v1271
        %1430 = vmatprep.subr.bf16.mxu0 0
        %1431 = vmatpush1.bf16.msra.mxu0 %v1272
        %1432 = vmatprep.subr.bf16.mxu0 0
        %1433 = vmatpush1.bf16.msra.mxu0 %v1273
        %1434 = vmatprep.mubr.bf16.mxu0 %v737
        %1435 = vmatmul.mubr.bf16.gmra.mrb[0].mxu0 %v725
        %v1436 = vpop.f32.mrb[0].mxu0
        %v1437 = vadd.f32 0.0, %v1436
        %v1438 = vpop.f32.mrb[0].mxu0
        %v1439 = vpop.f32.mrb[0].mxu0
        %v1440 = vadd.f32 0.0, %v1439
        %v1441 = vpop.f32.mrb[0].mxu0
        %1442 = vmatprep.mubr.bf16.mxu0 %v738
        %1443 = vmatmul.mubr.bf16.gmra.mrb[0].mxu0 %v726
        %v1444 = vpop.f32.mrb[0].mxu0
        %v1445 = vadd.f32 0.0, %v1444
        %v1446 = vpop.f32.mrb[0].mxu0
        %v1447 = vpop.f32.mrb[0].mxu0
        %v1448 = vadd.f32 0.0, %v1447
        %v1449 = vpop.f32.mrb[0].mxu0
        %1450 = vmatprep.mubr.bf16.mxu0 %v739
        %1451 = vmatmul.mubr.bf16.gmra.mrb[0].mxu0 %v727
        %v1452 = vpop.f32.mrb[0].mxu0
        %v1453 = vadd.f32 0.0, %v1452
        %v1454 = vpop.f32.mrb[0].mxu0
        %v1455 = vpop.f32.mrb[0].mxu0
        %v1456 = vadd.f32 0.0, %v1455
        %v1457 = vpop.f32.mrb[0].mxu0
        %1458 = vmatprep.mubr.bf16.mxu0 %v740
        %1459 = vmatmul.mubr.bf16.gmra.mrb[0].mxu0 %v728
        %v1460 = vpop.f32.mrb[0].mxu0
        %v1461 = vadd.f32 0.0, %v1460
        %v1462 = vpop.f32.mrb[0].mxu0
        %v1463 = vpop.f32.mrb[0].mxu0
        %v1464 = vadd.f32 0.0, %v1463
        %v1465 = vpop.f32.mrb[0].mxu0
        %1466 = vdwg.mxu0
        %1467 = vmatprep.subr.bf16.mxu0 0
        %1468 = vmatpush1.bf16.msra.mxu0 %v1274
        %1469 = vmatprep.subr.bf16.mxu0 0
        %1470 = vmatpush1.bf16.msra.mxu0 %v1275
        %1471 = vmatprep.subr.bf16.mxu0 0
        %1472 = vmatpush1.bf16.msra.mxu0 %v1276
        %1473 = vmatprep.subr.bf16.mxu0 0
        %1474 = vmatpush1.bf16.msra.mxu0 %v1277
        %1475 = vmatprep.subr.bf16.mxu0 0
        %1476 = vmatpush1.bf16.msra.mxu0 %v1278
        %1477 = vmatprep.subr.bf16.mxu0 0
        %1478 = vmatpush1.bf16.msra.mxu0 %v1279
        %1479 = vmatprep.subr.bf16.mxu0 0
        %1480 = vmatpush1.bf16.msra.mxu0 %v1280
        %1481 = vmatprep.subr.bf16.mxu0 0
        %1482 = vmatpush1.bf16.msra.mxu0 %v1281
        %1483 = vmatprep.subr.bf16.mxu0 0
        %1484 = vmatpush1.bf16.msra.mxu0 %v1282
        %1485 = vmatprep.subr.bf16.mxu0 0
        %1486 = vmatpush1.bf16.msra.mxu0 %v1283
        %1487 = vmatprep.subr.bf16.mxu0 0
        %1488 = vmatpush1.bf16.msra.mxu0 %v1284
        %1489 = vmatprep.subr.bf16.mxu0 0
        %1490 = vmatpush1.bf16.msra.mxu0 %v1285
        %1491 = vmatprep.subr.bf16.mxu0 0
        %1492 = vmatpush1.bf16.msra.mxu0 %v1286
        %1493 = vmatprep.subr.bf16.mxu0 0
        %1494 = vmatpush1.bf16.msra.mxu0 %v1287
        %1495 = vmatprep.subr.bf16.mxu0 0
        %1496 = vmatpush1.bf16.msra.mxu0 %v1288
        %1497 = vmatprep.subr.bf16.mxu0 0
        %1498 = vmatpush1.bf16.msra.mxu0 %v1289
        %1499 = vmatprep.mubr.bf16.mxu0 %v761
        %1500 = vmatmul.mubr.bf16.gmra.mrb[0].mxu0 %v749
        %v1501 = vpop.f32.mrb[0].mxu0
        %v1502 = vadd.f32 %v1437, %v1501
        %v1503 = vpop.f32.mrb[0].mxu0
        %v1504 = vpop.f32.mrb[0].mxu0
        %v1505 = vadd.f32 %v1440, %v1504
        %v1506 = vpop.f32.mrb[0].mxu0
        %1507 = vmatprep.mubr.bf16.mxu0 %v762
        %1508 = vmatmul.mubr.bf16.gmra.mrb[0].mxu0 %v750
        %v1509 = vpop.f32.mrb[0].mxu0
        %v1510 = vadd.f32 %v1445, %v1509
        %v1511 = vpop.f32.mrb[0].mxu0
        %v1512 = vpop.f32.mrb[0].mxu0
        %v1513 = vadd.f32 %v1448, %v1512
        %v1514 = vpop.f32.mrb[0].mxu0
        %1515 = vmatprep.mubr.bf16.mxu0 %v763
        %1516 = vmatmul.mubr.bf16.gmra.mrb[0].mxu0 %v751
        %v1517 = vpop.f32.mrb[0].mxu0
        %v1518 = vadd.f32 %v1453, %v1517
        %v1519 = vpop.f32.mrb[0].mxu0
        %v1520 = vpop.f32.mrb[0].mxu0
        %v1521 = vadd.f32 %v1456, %v1520
        %v1522 = vpop.f32.mrb[0].mxu0
        %1523 = vmatprep.mubr.bf16.mxu0 %v764
        %1524 = vmatmul.mubr.bf16.gmra.mrb[0].mxu0 %v752
        %v1525 = vpop.f32.mrb[0].mxu0
        %v1526 = vadd.f32 %v1461, %v1525
        %v1527 = vpop.f32.mrb[0].mxu0
        %v1528 = vpop.f32.mrb[0].mxu0
        %v1529 = vadd.f32 %v1464, %v1528
        %v1530 = vpop.f32.mrb[0].mxu0
        %1531 = vdwg.mxu0
        %1532 = vmatprep.subr.bf16.mxu0 0
        %1533 = vmatpush1.bf16.msra.mxu0 %v1290
        %1534 = vmatprep.subr.bf16.mxu0 0
        %1535 = vmatpush1.bf16.msra.mxu0 %v1291
        %1536 = vmatprep.subr.bf16.mxu0 0
        %1537 = vmatpush1.bf16.msra.mxu0 %v1292
        %1538 = vmatprep.subr.bf16.mxu0 0
        %1539 = vmatpush1.bf16.msra.mxu0 %v1293
        %1540 = vmatprep.subr.bf16.mxu0 0
        %1541 = vmatpush1.bf16.msra.mxu0 %v1294
        %1542 = vmatprep.subr.bf16.mxu0 0
        %1543 = vmatpush1.bf16.msra.mxu0 %v1295
        %1544 = vmatprep.subr.bf16.mxu0 0
        %1545 = vmatpush1.bf16.msra.mxu0 %v1296
        %1546 = vmatprep.subr.bf16.mxu0 0
        %1547 = vmatpush1.bf16.msra.mxu0 %v1297
        %1548 = vmatprep.subr.bf16.mxu0 0
        %1549 = vmatpush1.bf16.msra.mxu0 %v1298
        %1550 = vmatprep.subr.bf16.mxu0 0
        %1551 = vmatpush1.bf16.msra.mxu0 %v1299
        %1552 = vmatprep.subr.bf16.mxu0 0
        %1553 = vmatpush1.bf16.msra.mxu0 %v1300
        %1554 = vmatprep.subr.bf16.mxu0 0
        %1555 = vmatpush1.bf16.msra.mxu0 %v1301
        %1556 = vmatprep.subr.bf16.mxu0 0
        %1557 = vmatpush1.bf16.msra.mxu0 %v1302
        %1558 = vmatprep.subr.bf16.mxu0 0
        %1559 = vmatpush1.bf16.msra.mxu0 %v1303
        %1560 = vmatprep.subr.bf16.mxu0 0
        %1561 = vmatpush1.bf16.msra.mxu0 %v1304
        %1562 = vmatprep.subr.bf16.mxu0 0
        %1563 = vmatpush1.bf16.msra.mxu0 %v1305
        %1564 = vmatprep.mubr.bf16.mxu0 %v785
        %1565 = vmatmul.mubr.bf16.gmra.mrb[0].mxu0 %v773
        %v1566 = vpop.f32.mrb[0].mxu0
        %v1567 = vadd.f32 %v1502, %v1566
        %v1568 = vpop.f32.mrb[0].mxu0
        %v1569 = vpop.f32.mrb[0].mxu0
        %v1570 = vadd.f32 %v1505, %v1569
        %v1571 = vpop.f32.mrb[0].mxu0
        %1572 = vmatprep.mubr.bf16.mxu0 %v786
        %1573 = vmatmul.mubr.bf16.gmra.mrb[0].mxu0 %v774
        %v1574 = vpop.f32.mrb[0].mxu0
        %v1575 = vadd.f32 %v1510, %v1574
        %v1576 = vpop.f32.mrb[0].mxu0
        %v1577 = vpop.f32.mrb[0].mxu0
        %v1578 = vadd.f32 %v1513, %v1577
        %v1579 = vpop.f32.mrb[0].mxu0
        %1580 = vmatprep.mubr.bf16.mxu0 %v787
        %1581 = vmatmul.mubr.bf16.gmra.mrb[0].mxu0 %v775
        %v1582 = vpop.f32.mrb[0].mxu0
        %v1583 = vadd.f32 %v1518, %v1582
        %v1584 = vpop.f32.mrb[0].mxu0
        %v1585 = vpop.f32.mrb[0].mxu0
        %v1586 = vadd.f32 %v1521, %v1585
        %v1587 = vpop.f32.mrb[0].mxu0
        %1588 = vmatprep.mubr.bf16.mxu0 %v788
        %1589 = vmatmul.mubr.bf16.gmra.mrb[0].mxu0 %v776
        %v1590 = vpop.f32.mrb[0].mxu0
        %v1591 = vadd.f32 %v1526, %v1590
        %v1592 = vpop.f32.mrb[0].mxu0
        %v1593 = vpop.f32.mrb[0].mxu0
        %v1594 = vadd.f32 %v1529, %v1593
        %v1595 = vpop.f32.mrb[0].mxu0
        %1596 = vdwg.mxu0
        %1597 = vmatprep.subr.bf16.mxu0 0
        %1598 = vmatpush1.bf16.msra.mxu0 %v1306
        %1599 = vmatprep.subr.bf16.mxu0 0
        %1600 = vmatpush1.bf16.msra.mxu0 %v1307
        %1601 = vmatprep.subr.bf16.mxu0 0
        %1602 = vmatpush1.bf16.msra.mxu0 %v1308
        %1603 = vmatprep.subr.bf16.mxu0 0
        %1604 = vmatpush1.bf16.msra.mxu0 %v1309
        %1605 = vmatprep.subr.bf16.mxu0 0
        %1606 = vmatpush1.bf16.msra.mxu0 %v1310
        %1607 = vmatprep.subr.bf16.mxu0 0
        %1608 = vmatpush1.bf16.msra.mxu0 %v1311
        %1609 = vmatprep.subr.bf16.mxu0 0
        %1610 = vmatpush1.bf16.msra.mxu0 %v1312
        %1611 = vmatprep.subr.bf16.mxu0 0
        %1612 = vmatpush1.bf16.msra.mxu0 %v1313
        %1613 = vmatprep.subr.bf16.mxu0 0
        %1614 = vmatpush1.bf16.msra.mxu0 %v1314
        %1615 = vmatprep.subr.bf16.mxu0 0
        %1616 = vmatpush1.bf16.msra.mxu0 %v1315
        %1617 = vmatprep.subr.bf16.mxu0 0
        %1618 = vmatpush1.bf16.msra.mxu0 %v1316
        %1619 = vmatprep.subr.bf16.mxu0 0
        %1620 = vmatpush1.bf16.msra.mxu0 %v1317
        %1621 = vmatprep.subr.bf16.mxu0 0
        %1622 = vmatpush1.bf16.msra.mxu0 %v1318
        %1623 = vmatprep.subr.bf16.mxu0 0
        %1624 = vmatpush1.bf16.msra.mxu0 %v1319
        %1625 = vmatprep.subr.bf16.mxu0 0
        %1626 = vmatpush1.bf16.msra.mxu0 %v1320
        %1627 = vmatprep.subr.bf16.mxu0 0
        %1628 = vmatpush1.bf16.msra.mxu0 %v1321
        %1629 = vmatprep.mubr.bf16.mxu0 %v810
        %1630 = vmatmul.mubr.bf16.gmra.mrb[0].mxu0 %v798
        %v1631 = vpop.f32.mrb[0].mxu0
        %v1632 = vadd.f32 %v1567, %v1631
        %v1633 = vpop.f32.mrb[0].mxu0
        %v1634 = vpop.f32.mrb[0].mxu0
        %v1635 = vadd.f32 %v1570, %v1634
        %v1636 = vpop.f32.mrb[0].mxu0
        %1637 = vmatprep.mubr.bf16.mxu0 %v811
        %1638 = vmatmul.mubr.bf16.gmra.mrb[0].mxu0 %v799
        %v1639 = vpop.f32.mrb[0].mxu0
        %v1640 = vadd.f32 %v1575, %v1639
        %v1641 = vpop.f32.mrb[0].mxu0
        %v1642 = vpop.f32.mrb[0].mxu0
        %v1643 = vadd.f32 %v1578, %v1642
        %v1644 = vpop.f32.mrb[0].mxu0
        %1645 = vmatprep.mubr.bf16.mxu0 %v812
        %1646 = vmatmul.mubr.bf16.gmra.mrb[0].mxu0 %v800
        %v1647 = vpop.f32.mrb[0].mxu0
        %v1648 = vadd.f32 %v1583, %v1647
        %v1649 = vpop.f32.mrb[0].mxu0
        %v1650 = vpop.f32.mrb[0].mxu0
        %v1651 = vadd.f32 %v1586, %v1650
        %v1652 = vpop.f32.mrb[0].mxu0
        %1653 = vmatprep.mubr.bf16.mxu0 %v813
        %1654 = vmatmul.mubr.bf16.gmra.mrb[0].mxu0 %v801
        %v1655 = vpop.f32.mrb[0].mxu0
        %v1656 = vadd.f32 %v1591, %v1655
        %v1657 = vpop.f32.mrb[0].mxu0
        %v1658 = vpop.f32.mrb[0].mxu0
        %v1659 = vadd.f32 %v1594, %v1658
        %v1660 = vpop.f32.mrb[0].mxu0
        %1661 = vdwg.mxu0
        %1662 = vmatprep.subr.bf16.mxu0 0
        %1663 = vmatpush1.bf16.msra.mxu0 %v1322
        %1664 = vmatprep.subr.bf16.mxu0 0
        %1665 = vmatpush1.bf16.msra.mxu0 %v1323
        %1666 = vmatprep.subr.bf16.mxu0 0
        %1667 = vmatpush1.bf16.msra.mxu0 %v1324
        %1668 = vmatprep.subr.bf16.mxu0 0
        %1669 = vmatpush1.bf16.msra.mxu0 %v1325
        %1670 = vmatprep.subr.bf16.mxu0 0
        %1671 = vmatpush1.bf16.msra.mxu0 %v1326
        %1672 = vmatprep.subr.bf16.mxu0 0
        %1673 = vmatpush1.bf16.msra.mxu0 %v1327
        %1674 = vmatprep.subr.bf16.mxu0 0
        %1675 = vmatpush1.bf16.msra.mxu0 %v1328
        %1676 = vmatprep.subr.bf16.mxu0 0
        %1677 = vmatpush1.bf16.msra.mxu0 %v1329
        %1678 = vmatprep.subr.bf16.mxu0 0
        %1679 = vmatpush1.bf16.msra.mxu0 0
        %1680 = vmatprep.subr.bf16.mxu0 0
        %1681 = vmatpush1.bf16.msra.mxu0 0
        %1682 = vmatprep.subr.bf16.mxu0 0
        %1683 = vmatpush1.bf16.msra.mxu0 0
        %1684 = vmatprep.subr.bf16.mxu0 0
        %1685 = vmatpush1.bf16.msra.mxu0 0
        %1686 = vmatprep.subr.bf16.mxu0 0
        %1687 = vmatpush1.bf16.msra.mxu0 0
        %1688 = vmatprep.subr.bf16.mxu0 0
        %1689 = vmatpush1.bf16.msra.mxu0 0
        %1690 = vmatprep.subr.bf16.mxu0 0
        %1691 = vmatpush1.bf16.msra.mxu0 0
        %1692 = vmatprep.subr.bf16.mxu0 0
        %1693 = vmatpush1.bf16.msra.mxu0 0
        %1694 = vmatprep.mubr.bf16.mxu0 0
        %1695 = vmatmul.mubr.bf16.gmra.mrb[0].mxu0 %v822
        %v1696 = vpop.f32.mrb[0].mxu0
        %v1697 = vadd.f32 %v1632, %v1696
        %v1698 = vpop.f32.mrb[0].mxu0
        %v1699 = vpop.f32.mrb[0].mxu0
        %v1700 = vadd.f32 %v1635, %v1699
        %v1701 = vpop.f32.mrb[0].mxu0
        %1702 = vmatprep.mubr.bf16.mxu0 0
        %1703 = vmatmul.mubr.bf16.gmra.mrb[0].mxu0 %v823
        %v1704 = vpop.f32.mrb[0].mxu0
        %v1705 = vadd.f32 %v1640, %v1704
        %v1706 = vpop.f32.mrb[0].mxu0
        %v1707 = vpop.f32.mrb[0].mxu0
        %v1708 = vadd.f32 %v1643, %v1707
        %v1709 = vpop.f32.mrb[0].mxu0
        %1710 = vmatprep.mubr.bf16.mxu0 0
        %1711 = vmatmul.mubr.bf16.gmra.mrb[0].mxu0 %v824
        %v1712 = vpop.f32.mrb[0].mxu0
        %v1713 = vadd.f32 %v1648, %v1712
        %v1714 = vpop.f32.mrb[0].mxu0
        %v1715 = vpop.f32.mrb[0].mxu0
        %v1716 = vadd.f32 %v1651, %v1715
        %v1717 = vpop.f32.mrb[0].mxu0
        %1718 = vmatprep.mubr.bf16.mxu0 0
        %1719 = vmatmul.mubr.bf16.gmra.mrb[0].mxu0 %v825
        %v1720 = vpop.f32.mrb[0].mxu0
        %v1721 = vadd.f32 %v1656, %v1720
        %v1722 = vpop.f32.mrb[0].mxu0
        %v1723 = vpop.f32.mrb[0].mxu0
        %v1724 = vadd.f32 %v1659, %v1723
        %v1725 = vpop.f32.mrb[0].mxu0
        %1726 = vdwg.mxu0
        %s1727 = scalar_lea.vmem [#allocation4], %s660
        %1728 = vst [vmem:[%s1727] sm:$0xff] %v1697
        %1729 = vst [vmem:[%s1727 + $0x8] sm:$0xff] %v1700
        %1730 = vst [vmem:[%s1727 + $0x10] sm:$0xff] %v1705
        %1731 = vst [vmem:[%s1727 + $0x18] sm:$0xff] %v1708
        %1732 = vst [vmem:[%s1727 + $0x20] sm:$0xff] %v1713
        %1733 = vst [vmem:[%s1727 + $0x28] sm:$0xff] %v1716
        %1734 = vst [vmem:[%s1727 + $0x30] sm:$0xff] %v1721
        %1735 = vst [vmem:[%s1727 + $0x38] sm:$0xff] %v1724
        %v1736 = vld [vmem:[#allocation9] sm:$0x1]
        %v1737 = vadd.f32 %v1697, %v1700
        %v1738 = vadd.f32 %v1737, %v1705
        %v1739 = vadd.f32 %v1738, %v1708
        %v1740 = vadd.f32 %v1739, %v1713
        %v1741 = vadd.f32 %v1740, %v1716
        %v1742 = vadd.f32 %v1741, %v1721
        %v1743 = vadd.f32 %v1742, %v1724
        %v1744 = vrot.slane %v1743, 4
        %v1745 = vadd.f32 %v1743, %v1744
        %v1746 = vrot.slane %v1745, 2
        %v1747 = vadd.f32 %v1745, %v1746
        %v1748 = vrot.slane %v1747, 1
        %v1749 = vadd.f32 %v1747, %v1748
        %v1750 = vadd.f32 %v1736, %v1749
        %1751 = vst [vmem:[#allocation9] sm:$0x1] %v1750
        %v1752 = vld [vmem:[#allocation10] sm:$0x1]
        %v1753 = vmul.f32 %v1697, %v1697
        %v1754 = vmul.f32 %v1700, %v1700
        %v1755 = vmul.f32 %v1705, %v1705
        %v1756 = vmul.f32 %v1708, %v1708
        %v1757 = vmul.f32 %v1713, %v1713
        %v1758 = vmul.f32 %v1716, %v1716
        %v1759 = vmul.f32 %v1721, %v1721
        %v1760 = vmul.f32 %v1724, %v1724
        %v1761 = vadd.f32 %v1753, %v1754
        %v1762 = vadd.f32 %v1761, %v1755
        %v1763 = vadd.f32 %v1762, %v1756
        %v1764 = vadd.f32 %v1763, %v1757
        %v1765 = vadd.f32 %v1764, %v1758
        %v1766 = vadd.f32 %v1765, %v1759
        %v1767 = vadd.f32 %v1766, %v1760
        %v1768 = vrot.slane %v1767, 4
        %v1769 = vadd.f32 %v1767, %v1768
        %v1770 = vrot.slane %v1769, 2
        %v1771 = vadd.f32 %v1769, %v1770
        %v1772 = vrot.slane %v1771, 1
        %v1773 = vadd.f32 %v1771, %v1772
        %v1774 = vadd.f32 %v1752, %v1773
        %1775 = vst [vmem:[#allocation10] sm:$0x1] %v1774
      $region76: #{bottleneck_forward.1} parent=59 // pred_fallthru
        _
      %p1776 = scmp.eq.s32.totalorder %s25, 2
      %p1777 = pnand %p1776, %p398
      %p1778 = pneg %p1777
      // Predicated region
      $region77: #{bottleneck_forward.1} parent=59 // pred_check
        _
      $region78: #{bottleneck_forward.1} parent=59 // pred_check_branch
        %1780 = sbr.rel (%p1777) target = $region80
      $region79: #{bottleneck_forward.1} parent=59 // pred_region
        %v1781 = vld [vmem:[#allocation9] sm:$0x1]
        %v1782 = vmul.f32 %v1781, 0.0078125
        %v1783 = vld [vmem:[#allocation10] sm:$0x1]
        %v1784 = vmul.f32 %v1783, 0.0078125
        %v1785 = vmul.f32 %v1782, %v1782
        %v1786 = vsub.f32 %v1784, %v1785
        %v1787 = vmax.f32 %v1786, 0.0
        %v1788 = vld [vmem:[%s5] sm:$0x1]
        %v1789 = vadd.f32 %v1787, 1e-05
        %v1790 = vrsqrt.pop %v1789
        %v1791 = vmul.f32 %v1788, %v1790
        %v1792 = vld [vmem:[%s6] sm:$0x1]
        %v1793 = vmul.f32 %v1782, %v1791
        %v1794 = vsub.f32 %v1792, %v1793
        %1795 = vst [vmem:[#allocation15] sm:$0x1] %v1791
        %1796 = vst [vmem:[#allocation16] sm:$0x1] %v1794
      $region80: #{bottleneck_forward.1} parent=59 // pred_fallthru
        _
      // Predicated region
      $region81: #{bottleneck_forward.1} parent=59 // pred_check
        %p1797 = pneg %p1776
      $region82: #{bottleneck_forward.1} parent=59 // pred_check_branch
        %1799 = sbr.rel (%p1797) target = $region84
      $region83: #{bottleneck_forward.1} parent=59 // pred_region
        %s1800 = smul.u32 %s26, 64
        %s1801 = scalar_lea.vmem [#allocation4], %s1800
        %v1802 = vld [vmem:[%s1801] sm:$0xff]
        %v1803 = vld [vmem:[%s1801 + $0x8] sm:$0xff]
        %v1804 = vld [vmem:[%s1801 + $0x10] sm:$0xff]
        %v1805 = vld [vmem:[%s1801 + $0x18] sm:$0xff]
        %v1806 = vld [vmem:[%s1801 + $0x20] sm:$0xff]
        %v1807 = vld [vmem:[%s1801 + $0x28] sm:$0xff]
        %v1808 = vld [vmem:[%s1801 + $0x30] sm:$0xff]
        %v1809 = vld [vmem:[%s1801 + $0x38] sm:$0xff]
        %v1810 = vld [vmem:[#allocation15] sm:$0x1]
        %v1812 = vlaneseq
        %v1813 = vshrl.u32 %v1812, 7
        %v1814 = vsub.s32 0, %v1813
        %v1815 = vrot.slane %v1810, %v1814
        %v1817 = vmul.f32 %v1802, %v1815
        %v1818 = vmul.f32 %v1803, %v1815
        %v1819 = vmul.f32 %v1804, %v1815
        %v1820 = vmul.f32 %v1805, %v1815
        %v1821 = vmul.f32 %v1806, %v1815
        %v1822 = vmul.f32 %v1807, %v1815
        %v1823 = vmul.f32 %v1808, %v1815
        %v1824 = vmul.f32 %v1809, %v1815
        %v1825 = vld [vmem:[#allocation16] sm:$0x1]
        %v1827 = vlaneseq
        %v1828 = vshrl.u32 %v1827, 7
        %v1829 = vsub.s32 0, %v1828
        %v1830 = vrot.slane %v1825, %v1829
        %v1832 = vadd.f32 %v1817, %v1830
        %v1833 = vadd.f32 %v1818, %v1830
        %v1834 = vadd.f32 %v1819, %v1830
        %v1835 = vadd.f32 %v1820, %v1830
        %v1836 = vadd.f32 %v1821, %v1830
        %v1837 = vadd.f32 %v1822, %v1830
        %v1838 = vadd.f32 %v1823, %v1830
        %v1839 = vadd.f32 %v1824, %v1830
        %v1840 = vmax.f32 %v1832, 0.0
        %v1841 = vmax.f32 %v1833, 0.0
        %v1842 = vmax.f32 %v1834, 0.0
        %v1843 = vmax.f32 %v1835, 0.0
        %v1844 = vmax.f32 %v1836, 0.0
        %v1845 = vmax.f32 %v1837, 0.0
        %v1846 = vmax.f32 %v1838, 0.0
        %v1847 = vmax.f32 %v1839, 0.0
        %s1848 = scalar_lea.vmem [#allocation2], %s1800
        %v1849 = vld [vmem:[%s1848] sm:$0xff]
        %v1850 = vld [vmem:[%s1848 + $0x8] sm:$0xff]
        %v1851 = vld [vmem:[%s1848 + $0x10] sm:$0xff]
        %v1852 = vld [vmem:[%s1848 + $0x18] sm:$0xff]
        %v1853 = vld [vmem:[%s1848 + $0x20] sm:$0xff]
        %v1854 = vld [vmem:[%s1848 + $0x28] sm:$0xff]
        %v1855 = vld [vmem:[%s1848 + $0x30] sm:$0xff]
        %v1856 = vld [vmem:[%s1848 + $0x38] sm:$0xff]
        %v1857 = vpack.c.bf16 %v1841, %v1840
        %v1858 = vpack.c.bf16 %v1850, %v1849
        %v1859 = vpack.c.bf16 %v1843, %v1842
        %v1860 = vpack.c.bf16 %v1852, %v1851
        %v1861 = vpack.c.bf16 %v1845, %v1844
        %v1862 = vpack.c.bf16 %v1854, %v1853
        %v1863 = vpack.c.bf16 %v1847, %v1846
        %v1864 = vpack.c.bf16 %v1856, %v1855
        %v1865 = vld [vmem:[%s7] sm:$0xff]
        %v1866 = vld [vmem:[%s7 + $0x8] sm:$0xff]
        %v1867 = vld [vmem:[%s7 + $0x10] sm:$0xff]
        %v1868 = vld [vmem:[%s7 + $0x18] sm:$0xff]
        %v1869 = vld [vmem:[%s7 + $0x20] sm:$0xff]
        %v1870 = vld [vmem:[%s7 + $0x28] sm:$0xff]
        %v1871 = vld [vmem:[%s7 + $0x30] sm:$0xff]
        %v1872 = vld [vmem:[%s7 + $0x38] sm:$0xff]
        %v1873 = vld [vmem:[%s7 + $0x40] sm:$0xff]
        %v1874 = vld [vmem:[%s7 + $0x48] sm:$0xff]
        %v1875 = vld [vmem:[%s7 + $0x50] sm:$0xff]
        %v1876 = vld [vmem:[%s7 + $0x58] sm:$0xff]
        %v1877 = vld [vmem:[%s7 + $0x60] sm:$0xff]
        %v1878 = vld [vmem:[%s7 + $0x68] sm:$0xff]
        %v1879 = vld [vmem:[%s7 + $0x70] sm:$0xff]
        %v1880 = vld [vmem:[%s7 + $0x78] sm:$0xff]
        %v1881 = vld [vmem:[%s7 + $0x80] sm:$0xff]
        %v1882 = vld [vmem:[%s7 + $0x88] sm:$0xff]
        %v1883 = vld [vmem:[%s7 + $0x90] sm:$0xff]
        %v1884 = vld [vmem:[%s7 + $0x98] sm:$0xff]
        %v1885 = vld [vmem:[%s7 + $0xa0] sm:$0xff]
        %v1886 = vld [vmem:[%s7 + $0xa8] sm:$0xff]
        %v1887 = vld [vmem:[%s7 + $0xb0] sm:$0xff]
        %v1888 = vld [vmem:[%s7 + $0xb8] sm:$0xff]
        %v1889 = vld [vmem:[%s7 + $0xc0] sm:$0xff]
        %v1890 = vld [vmem:[%s7 + $0xc8] sm:$0xff]
        %v1891 = vld [vmem:[%s7 + $0xd0] sm:$0xff]
        %v1892 = vld [vmem:[%s7 + $0xd8] sm:$0xff]
        %v1893 = vld [vmem:[%s7 + $0xe0] sm:$0xff]
        %v1894 = vld [vmem:[%s7 + $0xe8] sm:$0xff]
        %v1895 = vld [vmem:[%s7 + $0xf0] sm:$0xff]
        %v1896 = vld [vmem:[%s7 + $0xf8] sm:$0xff]
        %v1929 = vunpack.c.l.b16 %v1865
        %v1930 = vunpack.c.h.b16 %v1865
        %v1931 = vunpack.c.l.b16 %v1866
        %v1932 = vunpack.c.h.b16 %v1866
        %v1933 = vunpack.c.l.b16 %v1867
        %v1934 = vunpack.c.h.b16 %v1867
        %v1935 = vunpack.c.l.b16 %v1868
        %v1936 = vunpack.c.h.b16 %v1868
        %v1937 = vunpack.c.l.b16 %v1869
        %v1938 = vunpack.c.h.b16 %v1869
        %v1939 = vunpack.c.l.b16 %v1870
        %v1940 = vunpack.c.h.b16 %v1870
        %v1941 = vunpack.c.l.b16 %v1871
        %v1942 = vunpack.c.h.b16 %v1871
        %v1943 = vunpack.c.l.b16 %v1872
        %v1944 = vunpack.c.h.b16 %v1872
        %v1945 = vunpack.c.l.b16 %v1873
        %v1946 = vunpack.c.h.b16 %v1873
        %v1947 = vunpack.c.l.b16 %v1874
        %v1948 = vunpack.c.h.b16 %v1874
        %v1949 = vunpack.c.l.b16 %v1875
        %v1950 = vunpack.c.h.b16 %v1875
        %v1951 = vunpack.c.l.b16 %v1876
        %v1952 = vunpack.c.h.b16 %v1876
        %v1953 = vunpack.c.l.b16 %v1877
        %v1954 = vunpack.c.h.b16 %v1877
        %v1955 = vunpack.c.l.b16 %v1878
        %v1956 = vunpack.c.h.b16 %v1878
        %v1957 = vunpack.c.l.b16 %v1879
        %v1958 = vunpack.c.h.b16 %v1879
        %v1959 = vunpack.c.l.b16 %v1880
        %v1960 = vunpack.c.h.b16 %v1880
        %v1961 = vunpack.c.l.b16 %v1881
        %v1962 = vunpack.c.h.b16 %v1881
        %v1963 = vunpack.c.l.b16 %v1882
        %v1964 = vunpack.c.h.b16 %v1882
        %v1965 = vunpack.c.l.b16 %v1883
        %v1966 = vunpack.c.h.b16 %v1883
        %v1967 = vunpack.c.l.b16 %v1884
        %v1968 = vunpack.c.h.b16 %v1884
        %v1969 = vunpack.c.l.b16 %v1885
        %v1970 = vunpack.c.h.b16 %v1885
        %v1971 = vunpack.c.l.b16 %v1886
        %v1972 = vunpack.c.h.b16 %v1886
        %v1973 = vunpack.c.l.b16 %v1887
        %v1974 = vunpack.c.h.b16 %v1887
        %v1975 = vunpack.c.l.b16 %v1888
        %v1976 = vunpack.c.h.b16 %v1888
        %v1977 = vunpack.c.l.b16 %v1889
        %v1978 = vunpack.c.h.b16 %v1889
        %v1979 = vunpack.c.l.b16 %v1890
        %v1980 = vunpack.c.h.b16 %v1890
        %v1981 = vunpack.c.l.b16 %v1891
        %v1982 = vunpack.c.h.b16 %v1891
        %v1983 = vunpack.c.l.b16 %v1892
        %v1984 = vunpack.c.h.b16 %v1892
        %v1985 = vunpack.c.l.b16 %v1893
        %v1986 = vunpack.c.h.b16 %v1893
        %v1987 = vunpack.c.l.b16 %v1894
        %v1988 = vunpack.c.h.b16 %v1894
        %v1989 = vunpack.c.l.b16 %v1895
        %v1990 = vunpack.c.h.b16 %v1895
        %v1991 = vunpack.c.l.b16 %v1896
        %v1992 = vunpack.c.h.b16 %v1896
        %v1993 = vpack.c.b16 %v1931, %v1929
        %v1994 = vpack.c.b16 %v1932, %v1930
        %v1995 = vpack.c.b16 %v1935, %v1933
        %v1996 = vpack.c.b16 %v1936, %v1934
        %v1997 = vpack.c.b16 %v1939, %v1937
        %v1998 = vpack.c.b16 %v1940, %v1938
        %v1999 = vpack.c.b16 %v1943, %v1941
        %v2000 = vpack.c.b16 %v1944, %v1942
        %v2001 = vpack.c.b16 %v1947, %v1945
        %v2002 = vpack.c.b16 %v1948, %v1946
        %v2003 = vpack.c.b16 %v1951, %v1949
        %v2004 = vpack.c.b16 %v1952, %v1950
        %v2005 = vpack.c.b16 %v1955, %v1953
        %v2006 = vpack.c.b16 %v1956, %v1954
        %v2007 = vpack.c.b16 %v1959, %v1957
        %v2008 = vpack.c.b16 %v1960, %v1958
        %v2009 = vpack.c.b16 %v1963, %v1961
        %v2010 = vpack.c.b16 %v1964, %v1962
        %v2011 = vpack.c.b16 %v1967, %v1965
        %v2012 = vpack.c.b16 %v1968, %v1966
        %v2013 = vpack.c.b16 %v1971, %v1969
        %v2014 = vpack.c.b16 %v1972, %v1970
        %v2015 = vpack.c.b16 %v1975, %v1973
        %v2016 = vpack.c.b16 %v1976, %v1974
        %v2017 = vpack.c.b16 %v1979, %v1977
        %v2018 = vpack.c.b16 %v1980, %v1978
        %v2019 = vpack.c.b16 %v1983, %v1981
        %v2020 = vpack.c.b16 %v1984, %v1982
        %v2021 = vpack.c.b16 %v1987, %v1985
        %v2022 = vpack.c.b16 %v1988, %v1986
        %v2023 = vpack.c.b16 %v1991, %v1989
        %v2024 = vpack.c.b16 %v1992, %v1990
        %2057 = vmatprep.subr.bf16.mxu0 %v1994
        %2058 = vmatpush1.bf16.msra.mxu0 %v1993
        %2059 = vmatprep.subr.bf16.mxu0 %v1996
        %2060 = vmatpush1.bf16.msra.mxu0 %v1995
        %2061 = vmatprep.subr.bf16.mxu0 %v1998
        %2062 = vmatpush1.bf16.msra.mxu0 %v1997
        %2063 = vmatprep.subr.bf16.mxu0 %v2000
        %2064 = vmatpush1.bf16.msra.mxu0 %v1999
        %2065 = vmatprep.subr.bf16.mxu0 %v2002
        %2066 = vmatpush1.bf16.msra.mxu0 %v2001
        %2067 = vmatprep.subr.bf16.mxu0 %v2004
        %2068 = vmatpush1.bf16.msra.mxu0 %v2003
        %2069 = vmatprep.subr.bf16.mxu0 %v2006
        %2070 = vmatpush1.bf16.msra.mxu0 %v2005
        %2071 = vmatprep.subr.bf16.mxu0 %v2008
        %2072 = vmatpush1.bf16.msra.mxu0 %v2007
        %2073 = vmatprep.subr.bf16.mxu0 %v2010
        %2074 = vmatpush1.bf16.msra.mxu0 %v2009
        %2075 = vmatprep.subr.bf16.mxu0 %v2012
        %2076 = vmatpush1.bf16.msra.mxu0 %v2011
        %2077 = vmatprep.subr.bf16.mxu0 %v2014
        %2078 = vmatpush1.bf16.msra.mxu0 %v2013
        %2079 = vmatprep.subr.bf16.mxu0 %v2016
        %2080 = vmatpush1.bf16.msra.mxu0 %v2015
        %2081 = vmatprep.subr.bf16.mxu0 %v2018
        %2082 = vmatpush1.bf16.msra.mxu0 %v2017
        %2083 = vmatprep.subr.bf16.mxu0 %v2020
        %2084 = vmatpush1.bf16.msra.mxu0 %v2019
        %2085 = vmatprep.subr.bf16.mxu0 %v2022
        %2086 = vmatpush1.bf16.msra.mxu0 %v2021
        %2087 = vmatprep.subr.bf16.mxu0 %v2024
        %2088 = vmatpush1.bf16.msra.mxu0 %v2023
        %2089 = vmatprep.mubr.bf16.mxu0 %v1858
        %2090 = vmatmul.mubr.bf16.gmra.mrb[0].mxu0 %v1857
        %v2091 = vpop.f32.mrb[0].mxu0
        %v2092 = vadd.f32 0.0, %v2091
        %v2093 = vpop.f32.mrb[0].mxu0
        %v2094 = vadd.f32 0.0, %v2093
        %v2095 = vpop.f32.mrb[0].mxu0
        %v2096 = vadd.f32 0.0, %v2095
        %v2097 = vpop.f32.mrb[0].mxu0
        %v2098 = vadd.f32 0.0, %v2097
        %2099 = vmatprep.mubr.bf16.mxu0 %v1860
        %2100 = vmatmul.mubr.bf16.gmra.mrb[0].mxu0 %v1859
        %v2101 = vpop.f32.mrb[0].mxu0
        %v2102 = vadd.f32 0.0, %v2101
        %v2103 = vpop.f32.mrb[0].mxu0
        %v2104 = vadd.f32 0.0, %v2103
        %v2105 = vpop.f32.mrb[0].mxu0
        %v2106 = vadd.f32 0.0, %v2105
        %v2107 = vpop.f32.mrb[0].mxu0
        %v2108 = vadd.f32 0.0, %v2107
        %2109 = vmatprep.mubr.bf16.mxu0 %v1862
        %2110 = vmatmul.mubr.bf16.gmra.mrb[0].mxu0 %v1861
        %v2111 = vpop.f32.mrb[0].mxu0
        %v2112 = vadd.f32 0.0, %v2111
        %v2113 = vpop.f32.mrb[0].mxu0
        %v2114 = vadd.f32 0.0, %v2113
        %v2115 = vpop.f32.mrb[0].mxu0
        %v2116 = vadd.f32 0.0, %v2115
        %v2117 = vpop.f32.mrb[0].mxu0
        %v2118 = vadd.f32 0.0, %v2117
        %2119 = vmatprep.mubr.bf16.mxu0 %v1864
        %2120 = vmatmul.mubr.bf16.gmra.mrb[0].mxu0 %v1863
        %v2121 = vpop.f32.mrb[0].mxu0
        %v2122 = vadd.f32 0.0, %v2121
        %v2123 = vpop.f32.mrb[0].mxu0
        %v2124 = vadd.f32 0.0, %v2123
        %v2125 = vpop.f32.mrb[0].mxu0
        %v2126 = vadd.f32 0.0, %v2125
        %v2127 = vpop.f32.mrb[0].mxu0
        %v2128 = vadd.f32 0.0, %v2127
        %2129 = vdwg.mxu0
        %s2130 = smul.u32 %s26, 16
        %s2131 = smul.addr %s2130, 8
        %s2132 = scalar_lea.vmem [#allocation5], %s2131
        %2133 = vst [vmem:[%s2132] sm:$0xff] %v2092
        %2134 = vst [vmem:[%s2132 + $0x8] sm:$0xff] %v2094
        %2135 = vst [vmem:[%s2132 + $0x10] sm:$0xff] %v2096
        %2136 = vst [vmem:[%s2132 + $0x18] sm:$0xff] %v2098
        %2137 = vst [vmem:[%s2132 + $0x20] sm:$0xff] %v2102
        %2138 = vst [vmem:[%s2132 + $0x28] sm:$0xff] %v2104
        %2139 = vst [vmem:[%s2132 + $0x30] sm:$0xff] %v2106
        %2140 = vst [vmem:[%s2132 + $0x38] sm:$0xff] %v2108
        %2141 = vst [vmem:[%s2132 + $0x40] sm:$0xff] %v2112
        %2142 = vst [vmem:[%s2132 + $0x48] sm:$0xff] %v2114
        %2143 = vst [vmem:[%s2132 + $0x50] sm:$0xff] %v2116
        %2144 = vst [vmem:[%s2132 + $0x58] sm:$0xff] %v2118
        %2145 = vst [vmem:[%s2132 + $0x60] sm:$0xff] %v2122
        %2146 = vst [vmem:[%s2132 + $0x68] sm:$0xff] %v2124
        %2147 = vst [vmem:[%s2132 + $0x70] sm:$0xff] %v2126
        %2148 = vst [vmem:[%s2132 + $0x78] sm:$0xff] %v2128
        %v2149 = vld [vmem:[#allocation11] sm:$0x3]
        %v2150 = vadd.f32 %v2092, %v2096
        %v2151 = vadd.f32 %v2150, %v2102
        %v2152 = vadd.f32 %v2151, %v2106
        %v2153 = vadd.f32 %v2152, %v2112
        %v2154 = vadd.f32 %v2153, %v2116
        %v2155 = vadd.f32 %v2154, %v2122
        %v2156 = vadd.f32 %v2155, %v2126
        %v2157 = vrot.slane %v2156, 4
        %v2158 = vadd.f32 %v2156, %v2157
        %v2159 = vrot.slane %v2158, 2
        %v2160 = vadd.f32 %v2158, %v2159
        %v2161 = vrot.slane %v2160, 1
        %v2162 = vadd.f32 %v2160, %v2161
        %v2163 = vadd.f32 %v2094, %v2098
        %v2164 = vadd.f32 %v2163, %v2104
        %v2165 = vadd.f32 %v2164, %v2108
        %v2166 = vadd.f32 %v2165, %v2114
        %v2167 = vadd.f32 %v2166, %v2118
        %v2168 = vadd.f32 %v2167, %v2124
        %v2169 = vadd.f32 %v2168, %v2128
        %v2170 = vrot.slane %v2169, 4
        %v2171 = vadd.f32 %v2169, %v2170
        %v2172 = vrot.slane %v2171, 2
        %v2173 = vadd.f32 %v2171, %v2172
        %v2174 = vrot.slane %v2173, 1
        %v2175 = vadd.f32 %v2173, %v2174
        %v2178 = vcombine.low %v2162, %v2175
        %v2180 = vunpack.c.l.s4 1966171168
        %v2181 = vunpack.c.0.s8 %v2180
        %v2182 = vlaneseq
        %v2183 = vshrl.u32 %v2182, 7
        %v2184 = vsub.s32 %v2181, %v2183
        %v2185 = vrot.slane %v2178, %v2184
        %v2187 = vunpack.c.l.s4 1966171168
        %v2188 = vunpack.c.0.s8 %v2187
        %v2189 = vlaneseq
        %v2190 = vshrl.u32 %v2189, 7
        %v2191 = vsub.s32 %v2188, %v2190
        %v2192 = vrot.slane %v2185, %v2191
        %v2194 = vadd.f32 %v2149, %v2192
        %v2195 = vlaneseq
        %vm2196 = vcmp.ge.s32.totalorder %v2195, 0
        %vm2197 = vcmp.lt.s32.totalorder %v2195, 256
        %vm2198 = vmand %vm2196, %vm2197
        %2199 = vst.msk [vmem:[#allocation11] sm:$0x3] %vm2198, %v2194
        %v2200 = vld [vmem:[#allocation12] sm:$0x3]
        %v2201 = vmul.f32 %v2092, %v2092
        %v2202 = vmul.f32 %v2094, %v2094
        %v2203 = vmul.f32 %v2096, %v2096
        %v2204 = vmul.f32 %v2098, %v2098
        %v2205 = vmul.f32 %v2102, %v2102
        %v2206 = vmul.f32 %v2104, %v2104
        %v2207 = vmul.f32 %v2106, %v2106
        %v2208 = vmul.f32 %v2108, %v2108
        %v2209 = vmul.f32 %v2112, %v2112
        %v2210 = vmul.f32 %v2114, %v2114
        %v2211 = vmul.f32 %v2116, %v2116
        %v2212 = vmul.f32 %v2118, %v2118
        %v2213 = vmul.f32 %v2122, %v2122
        %v2214 = vmul.f32 %v2124, %v2124
        %v2215 = vmul.f32 %v2126, %v2126
        %v2216 = vmul.f32 %v2128, %v2128
        %v2217 = vadd.f32 %v2201, %v2203
        %v2218 = vadd.f32 %v2217, %v2205
        %v2219 = vadd.f32 %v2218, %v2207
        %v2220 = vadd.f32 %v2219, %v2209
        %v2221 = vadd.f32 %v2220, %v2211
        %v2222 = vadd.f32 %v2221, %v2213
        %v2223 = vadd.f32 %v2222, %v2215
        %v2224 = vrot.slane %v2223, 4
        %v2225 = vadd.f32 %v2223, %v2224
        %v2226 = vrot.slane %v2225, 2
        %v2227 = vadd.f32 %v2225, %v2226
        %v2228 = vrot.slane %v2227, 1
        %v2229 = vadd.f32 %v2227, %v2228
        %v2230 = vadd.f32 %v2202, %v2204
        %v2231 = vadd.f32 %v2230, %v2206
        %v2232 = vadd.f32 %v2231, %v2208
        %v2233 = vadd.f32 %v2232, %v2210
        %v2234 = vadd.f32 %v2233, %v2212
        %v2235 = vadd.f32 %v2234, %v2214
        %v2236 = vadd.f32 %v2235, %v2216
        %v2237 = vrot.slane %v2236, 4
        %v2238 = vadd.f32 %v2236, %v2237
        %v2239 = vrot.slane %v2238, 2
        %v2240 = vadd.f32 %v2238, %v2239
        %v2241 = vrot.slane %v2240, 1
        %v2242 = vadd.f32 %v2240, %v2241
        %v2245 = vcombine.low %v2229, %v2242
        %v2247 = vunpack.c.l.s4 1966171168
        %v2248 = vunpack.c.0.s8 %v2247
        %v2249 = vlaneseq
        %v2250 = vshrl.u32 %v2249, 7
        %v2251 = vsub.s32 %v2248, %v2250
        %v2252 = vrot.slane %v2245, %v2251
        %v2254 = vunpack.c.l.s4 1966171168
        %v2255 = vunpack.c.0.s8 %v2254
        %v2256 = vlaneseq
        %v2257 = vshrl.u32 %v2256, 7
        %v2258 = vsub.s32 %v2255, %v2257
        %v2259 = vrot.slane %v2252, %v2258
        %v2261 = vadd.f32 %v2200, %v2259
        %2262 = vst.msk [vmem:[#allocation12] sm:$0x3] %vm2198, %v2261
      $region84: #{bottleneck_forward.1} parent=59 // pred_fallthru
        _
      %p2263 = scmp.eq.s32.totalorder %s25, 3
      %p2264 = pnand %p2263, %p398
      %p2265 = pneg %p2264
      // Predicated region
      $region85: #{bottleneck_forward.1} parent=59 // pred_check
        _
      $region86: #{bottleneck_forward.1} parent=59 // pred_check_branch
        %2267 = sbr.rel (%p2264) target = $region88
      $region87: #{bottleneck_forward.1} parent=59 // pred_region
        %v2268 = vld [vmem:[#allocation11] sm:$0x3]
        %v2269 = vmul.f32 %v2268, 0.0078125
        %v2270 = vld [vmem:[#allocation12] sm:$0x3]
        %v2271 = vmul.f32 %v2270, 0.0078125
        %v2272 = vmul.f32 %v2269, %v2269
        %v2273 = vsub.f32 %v2271, %v2272
        %v2274 = vmax.f32 %v2273, 0.0
        %v2275 = vld [vmem:[%s8] sm:$0x3]
        %v2276 = vadd.f32 %v2274, 1e-05
        %v2277 = vrsqrt.pop %v2276
        %v2278 = vmul.f32 %v2275, %v2277
        %v2279 = vld [vmem:[%s9] sm:$0x3]
        %v2280 = vmul.f32 %v2269, %v2278
        %v2281 = vsub.f32 %v2279, %v2280
        %v2282 = vlaneseq
        %vm2283 = vcmp.ge.s32.totalorder %v2282, 0
        %vm2284 = vcmp.lt.s32.totalorder %v2282, 256
        %vm2285 = vmand %vm2283, %vm2284
        %2286 = vst.msk [vmem:[#allocation17] sm:$0x3] %vm2285, %v2278
        %2287 = vst.msk [vmem:[#allocation18] sm:$0x3] %vm2285, %v2281
      $region88: #{bottleneck_forward.1} parent=59 // pred_fallthru
        _
      // Predicated region
      $region89: #{bottleneck_forward.1} parent=59 // pred_check
        %p2288 = pneg %p2263
      $region90: #{bottleneck_forward.1} parent=59 // pred_check_branch
        %2290 = sbr.rel (%p2288) target = $region92
      $region91: #{bottleneck_forward.1} parent=59 // pred_region
        %s2291 = smul.u32 %s26, 16
        %s2292 = smul.addr %s2291, 8
        %s2293 = scalar_lea.vmem [#allocation5], %s2292
        %v2294 = vld [vmem:[%s2293] sm:$0xff]
        %v2295 = vld [vmem:[%s2293 + $0x8] sm:$0xff]
        %v2296 = vld [vmem:[%s2293 + $0x10] sm:$0xff]
        %v2297 = vld [vmem:[%s2293 + $0x18] sm:$0xff]
        %v2298 = vld [vmem:[%s2293 + $0x20] sm:$0xff]
        %v2299 = vld [vmem:[%s2293 + $0x28] sm:$0xff]
        %v2300 = vld [vmem:[%s2293 + $0x30] sm:$0xff]
        %v2301 = vld [vmem:[%s2293 + $0x38] sm:$0xff]
        %v2302 = vld [vmem:[%s2293 + $0x40] sm:$0xff]
        %v2303 = vld [vmem:[%s2293 + $0x48] sm:$0xff]
        %v2304 = vld [vmem:[%s2293 + $0x50] sm:$0xff]
        %v2305 = vld [vmem:[%s2293 + $0x58] sm:$0xff]
        %v2306 = vld [vmem:[%s2293 + $0x60] sm:$0xff]
        %v2307 = vld [vmem:[%s2293 + $0x68] sm:$0xff]
        %v2308 = vld [vmem:[%s2293 + $0x70] sm:$0xff]
        %v2309 = vld [vmem:[%s2293 + $0x78] sm:$0xff]
        %v2310 = vld [vmem:[#allocation17] sm:$0x3]
        %v2312 = vlaneseq
        %v2313 = vshrl.u32 %v2312, 7
        %v2314 = vsub.s32 0, %v2313
        %v2315 = vrot.slane %v2310, %v2314
        %v2316 = vlaneseq
        %v2317 = vshrl.u32 %v2316, 7
        %v2318 = vsub.s32 1, %v2317
        %v2319 = vrot.slane %v2310, %v2318
        %v2322 = vmul.f32 %v2294, %v2315
        %v2323 = vmul.f32 %v2295, %v2319
        %v2324 = vmul.f32 %v2296, %v2315
        %v2325 = vmul.f32 %v2297, %v2319
        %v2326 = vmul.f32 %v2298, %v2315
        %v2327 = vmul.f32 %v2299, %v2319
        %v2328 = vmul.f32 %v2300, %v2315
        %v2329 = vmul.f32 %v2301, %v2319
        %v2330 = vmul.f32 %v2302, %v2315
        %v2331 = vmul.f32 %v2303, %v2319
        %v2332 = vmul.f32 %v2304, %v2315
        %v2333 = vmul.f32 %v2305, %v2319
        %v2334 = vmul.f32 %v2306, %v2315
        %v2335 = vmul.f32 %v2307, %v2319
        %v2336 = vmul.f32 %v2308, %v2315
        %v2337 = vmul.f32 %v2309, %v2319
        %v2338 = vld [vmem:[#allocation18] sm:$0x3]
        %v2340 = vlaneseq
        %v2341 = vshrl.u32 %v2340, 7
        %v2342 = vsub.s32 0, %v2341
        %v2343 = vrot.slane %v2338, %v2342
        %v2344 = vlaneseq
        %v2345 = vshrl.u32 %v2344, 7
        %v2346 = vsub.s32 1, %v2345
        %v2347 = vrot.slane %v2338, %v2346
        %v2350 = vadd.f32 %v2322, %v2343
        %v2351 = vadd.f32 %v2323, %v2347
        %v2352 = vadd.f32 %v2324, %v2343
        %v2353 = vadd.f32 %v2325, %v2347
        %v2354 = vadd.f32 %v2326, %v2343
        %v2355 = vadd.f32 %v2327, %v2347
        %v2356 = vadd.f32 %v2328, %v2343
        %v2357 = vadd.f32 %v2329, %v2347
        %v2358 = vadd.f32 %v2330, %v2343
        %v2359 = vadd.f32 %v2331, %v2347
        %v2360 = vadd.f32 %v2332, %v2343
        %v2361 = vadd.f32 %v2333, %v2347
        %v2362 = vadd.f32 %v2334, %v2343
        %v2363 = vadd.f32 %v2335, %v2347
        %v2364 = vadd.f32 %v2336, %v2343
        %v2365 = vadd.f32 %v2337, %v2347
        %v2366 = vadd.f32 %v2350, %v2351
        %v2367 = vadd.f32 %v2352, %v2353
        %v2368 = vadd.f32 %v2354, %v2355
        %v2369 = vadd.f32 %v2356, %v2357
        %v2370 = vadd.f32 %v2358, %v2359
        %v2371 = vadd.f32 %v2360, %v2361
        %v2372 = vadd.f32 %v2362, %v2363
        %v2373 = vadd.f32 %v2364, %v2365
        %v2374 = vmax.f32 %v2366, 0.0
        %v2375 = vmax.f32 %v2367, 0.0
        %v2376 = vmax.f32 %v2368, 0.0
        %v2377 = vmax.f32 %v2369, 0.0
        %v2378 = vmax.f32 %v2370, 0.0
        %v2379 = vmax.f32 %v2371, 0.0
        %v2380 = vmax.f32 %v2372, 0.0
        %v2381 = vmax.f32 %v2373, 0.0
        %2382 = vst [vmem:[%s393] sm:$0xff] %v2374
        %2383 = vst [vmem:[%s393 + $0x8] sm:$0xff] %v2375
        %2384 = vst [vmem:[%s393 + $0x10] sm:$0xff] %v2376
        %2385 = vst [vmem:[%s393 + $0x18] sm:$0xff] %v2377
        %2386 = vst [vmem:[%s393 + $0x20] sm:$0xff] %v2378
        %2387 = vst [vmem:[%s393 + $0x28] sm:$0xff] %v2379
        %2388 = vst [vmem:[%s393 + $0x30] sm:$0xff] %v2380
        %2389 = vst [vmem:[%s393 + $0x38] sm:$0xff] %v2381
      $region92: #{bottleneck_forward.1} parent=59 // pred_fallthru
        _
      %p2390 = scmp.eq.s32.totalorder %s25, 3
      %s2391 = scalar_select %p2390, %s26, 0
      %p2392 = scmp.lt.s32.totalorder %s2391, 1
      %s2393 = scalar_select %p2392, %s2391, 1
      %s2394 = smul.addr %s2393, 8
      %s2395 = smul.addr %s2394, 8
      %s2396 = scalar_lea.vmem %s10, %s2395
      // Predicated region
      $region93: #{bottleneck_forward.1} parent=59 // pred_check
        %p2397 = pneg %p274
      $region94: #{bottleneck_forward.1} parent=59 // pred_check_branch
        %2399 = sbr.rel (%p2397) target = $region96
      $region95: #{bottleneck_forward.1} parent=59 // pred_region
        %p2400 = scmp.eq.s32.totalorder %s25, 3
        %s2401 = scalar_select %p2400, %s26, 0
      $region96: #{bottleneck_forward.1} parent=59 // pred_fallthru
        _
    $region60: #{bottleneck_forward.1} parent=5 // pred_fallthru
      _
    %p2402 = scmp.le.s32.totalorder 2, %s16
    // Predicated region
    $region97: #{bottleneck_forward.1} parent=5 // pred_check
      %p2403 = pneg %p2402
    $region98: #{bottleneck_forward.1} parent=5 // pred_check_branch
      %2405 = sbr.rel (%p2403) target = $region100
    $region99: #{bottleneck_forward.1} parent=5 // pred_region
      %s2406 = ssub.s32 %s16, 2
      // Predicated region
      $region101: #{bottleneck_forward.1} parent=99 // pred_check
        %p2407 = pneg %p280
      $region102: #{bottleneck_forward.1} parent=99 // pred_check_branch
        %2409 = sbr.rel (%p2407) target = $region104
      $region103: #{bottleneck_forward.1} parent=99 // pred_region
        %p2410 = scmp.eq.s32.totalorder %s27, 3
        %s2411 = scalar_select %p2410, %s28, 0
        %p2412 = scmp.lt.s32.totalorder %s2411, 1
        %s2413 = scalar_select %p2412, %s2411, 1
        %s2414 = smul.addr %s2413, 8
        %s2415 = smul.addr %s2414, 8
        %s2416 = scalar_lea.vmem %s10, %s2415
      $region104: #{bottleneck_forward.1} parent=99 // pred_fallthru
        _
    $region100: #{bottleneck_forward.1} parent=5 // pred_fallthru
      _
  $region6: #{bottleneck_forward.1} parent=0 // loop_footer
    %s20 = sadd.s32 1, %s16
  $region7: #{bottleneck_forward.1} parent=0 // loop_footer_branch
    %15 = sbr.rel target = $region3
  $region8: #{bottleneck_forward.1} parent=0 // loop_exit
    _

</llo_original>
